<compile_context>
chip_gen: v7x
topology: tpu7x:2x2x1
jax: 0.10.0
libtpu: 0.0.40
codegen_flags: <defaults>
</compile_context>

<pallas_src>
import jax
import jax.numpy as jnp
from jax import lax
from jax.experimental import pallas as pl
from jax.experimental.pallas import tpu as pltpu

TAU = 0.001          # SoftSort temperature (module default)
TEMPERATURE = 10.0   # closed_form aggregator temperature (module default)

_NN = (((1,), (0,)), ((), ()))   # A @ B
_NT = (((1,), (1,)), ((), ()))   # A @ B^T
_TN = (((0,), (0,)), ((), ()))   # A^T @ B


def esp_graph_kernel(x_ref, y_ref, out_ref):
    # Per-batch refs (heads packed on the lane axis, lane index m = h*N + j):
    #   x_ref/y_ref : (H*N, L)   [h*N+a, l] = X[b,h,a,l]   (raw reshape of the input)
    #   out_ref     : (N, H*N)   [a, h*N+c] = Gamma_hat[b,h,a,c]
    f32 = jnp.float32
    HN, L = x_ref.shape
    N = out_ref.shape[0]
    H = HN // N
    LN = L * N

    xpk = x_ref[...]
    ypk = y_ref[...]

    # --- constants, hoisted and built once per grid step (reused everywhere) ---
    r2 = lax.broadcasted_iota(jnp.int32, (HN, HN), 0)
    c2 = lax.broadcasted_iota(jnp.int32, (HN, HN), 1)
    G = ((r2 & -N) == (c2 & -N)).astype(f32)            # (HN,HN): 1 iff same head group
    k2 = lax.broadcasted_iota(jnp.int32, (N, HN), 0)     # sublane index (source pos / rank)
    j2 = lax.broadcasted_iota(jnp.int32, (N, HN), 1) & (N - 1)  # within-group lane index
    sel = (k2 == j2).astype(f32)                         # (N,HN) 0/1 within-group selector
    rL = lax.broadcasted_iota(jnp.int32, (L, L), 0)
    cL = lax.broadcasted_iota(jnp.int32, (L, L), 1)
    eyeL = (rL == cL).astype(f32)

    # slice-major scores (lane-dense): slx[l, h*N+j] = X[b,h,j,l]
    # (in-kernel transpose of the (HN,L) tile via a tiny identity matmul)
    slx = lax.dot_general(eyeL, xpk, _NT, preferred_element_type=f32)   # (L, HN)
    sly = lax.dot_general(eyeL, ypk, _NT, preferred_element_type=f32)

    def softsort(s2d):
        # SoftSort_p2 probabilities; rows flattened to (l*N + i), lanes = (h, j).
        sjb = s2d[:, None, :]                                            # (L,1,HN)
        # group-broadcast of the k-th element of each head group (0/1 selector matmul,
        # one nonzero term per output):  skb[l,k,h*N+j] = s2d[l,h*N+k]
        picked = (sjb * sel[None, :, :]).reshape(LN, HN)
        skb = lax.dot_general(picked, G, _NN,
                              preferred_element_type=f32).reshape(L, N, HN)
        # compare against the SAME reconstruction -> rank is always a valid permutation
        s_self = jnp.sum(skb * sel[None, :, :], axis=1)[:, None, :]      # (L,1,HN)
        gt = (skb > s_self) | ((skb == s_self) & (k2 < j2)[None, :, :])  # stable desc. rank
        rank = jnp.sum(gt.astype(jnp.int32), axis=1)                     # (L,HN) int32
        # sorted value at rank i, group-broadcast to every lane of its head group
        masked = jnp.where(rank[:, None, :] == k2[None, :, :], sjb, 0.0)  # (L,N,HN)
        sorted_b = lax.dot_general(masked.reshape(LN, HN), G, _NN,
                                   preferred_element_type=f32).reshape(L, N, HN)
        d = sjb - sorted_b
        e = jnp.exp(d * d * (-1.0 / TAU)).reshape(LN, HN)    # row max per group == 1
        denom = lax.dot_general(e, G, _NN, preferred_element_type=f32)
        return e / denom                                     # exact divide (tau=1e-3 path)

    pu = softsort(slx)   # (L*N, HN): rows (l,i), lanes (h, a)
    pv = softsort(sly)

    # --- cdist(X, Y, p=2) per head via the Gram trick; off-head blocks masked out ---
    gram = lax.dot_general(xpk, ypk, _NT, preferred_element_type=f32)    # (HN,HN)
    xsq = jnp.sum(xpk * xpk, axis=1, keepdims=True)                      # (HN,1)
    ysq = jnp.sum(sly * sly, axis=0, keepdims=True)                      # (1,HN)
    cost = jnp.sqrt(jnp.maximum(xsq + ysq - 2.0 * gram, 0.0)) * G        # (HN,HN)

    # --- swds[l,h] = sum_{a,c} cost_h[a,c] * Gamma_{l,h}[a,c]  (no Gamma materialized) ---
    mcost = lax.dot_general(pu, cost, _NN, preferred_element_type=f32)   # (L*N, HN)
    swds_part = jnp.sum((mcost * pv).reshape(L, N, HN), axis=1)          # (L, HN)
    swds_lane = lax.dot_general(swds_part, G, _NN,
                                preferred_element_type=f32)              # (L, HN) per-head, lane-broadcast

    # --- closed-form aggregation weights, entirely in lane space ---
    mn = jnp.min(swds_lane, axis=0, keepdims=True)                       # (1, HN)
    ew = jnp.exp((swds_lane - mn) * (-TEMPERATURE))                      # (L, HN)
    w_lane = ew * pl.reciprocal(jnp.sum(ew, axis=0, keepdims=True), approx=True)
    w_rows = jnp.broadcast_to(w_lane[:, None, :], (L, N, HN)).reshape(LN, HN)

    # --- Gamma_hat for all heads with one K = L*N contraction; pick per-head
    #     diagonal blocks into a lane-dense (N, H*N) slab ---
    out_full = lax.dot_general(pu * w_rows, pv, _TN,
                               preferred_element_type=f32)               # (HN, HN)
    out_slab = jnp.sum((out_full * G).reshape(H, N, HN), axis=0)         # (N, H*N)
    out_ref[...] = out_slab.astype(out_ref.dtype)


def esp_graph(X, Y):
    """X, Y: (B, H, N, L) float32 -> Gamma_hat: (B, H, N, N).

    Wrapper does only free reshapes; callers should wrap in jax.jit to fuse them
    with the Pallas custom call.
    """
    B, H, N, L = X.shape
    assert N & (N - 1) == 0, "kernel assumes N is a power of two"  # TODO(synk): general N
    HN = H * N

    xr = X.reshape(B, HN, L)   # contiguous merge of (H, N) -> no data movement
    yr = Y.reshape(B, HN, L)

    out = pl.pallas_call(
        esp_graph_kernel,
        out_shape=jax.ShapeDtypeStruct((B, N, HN), X.dtype),
        grid=(B,),
        in_specs=[
            pl.BlockSpec((None, HN, L), lambda b: (b, 0, 0)),
            pl.BlockSpec((None, HN, L), lambda b: (b, 0, 0)),
        ],
        out_specs=pl.BlockSpec((None, N, HN), lambda b: (b, 0, 0)),
        compiler_params=pltpu.CompilerParams(
            dimension_semantics=("parallel",)),
    )(xr, yr)

    # (B, N, H*N) lane-dense slab -> (B, H, N, N)
    return jnp.transpose(out.reshape(B, N, H, N), (0, 2, 1, 3))


def esp_graph_ref(X, Y, tau=TAU, temperature=TEMPERATURE):
    """Pure-JAX reference mirroring the PyTorch forward (for verification)."""
    hp = lax.Precision.HIGHEST

    def softsort(scores):
        s = jnp.swapaxes(scores, 3, 2)                          # (B,H,L,N)
        sorted_s = -jnp.sort(-s, axis=-1)                       # descending
        diff = s[..., None, :] - sorted_s[..., :, None]         # (B,H,L,N_i,N_j)
        return jax.nn.softmax(-(diff ** 2) / tau, axis=-1)

    Pu = softsort(X)
    Pv = softsort(Y)
    # Gamma[..., a, c] = sum_i Pu[..., i, a] * Pv[..., i, c]
    Gamma = jnp.einsum('...ia,...ic->...ac', Pu, Pv, precision=hp)        # (B,H,L,N,N)
    cost = jnp.sqrt(jnp.sum((X[:, :, :, None, :] - Y[:, :, None, :, :]) ** 2,
                            axis=-1))                                     # (B,H,N,N)
    swds = jnp.sum(cost[:, :, None] * Gamma, axis=(-1, -2))               # (B,H,L)
    min_swds = jnp.min(swds, axis=-1, keepdims=True)
    e = jnp.exp(-temperature * (swds - min_swds))
    w = e / jnp.sum(e, axis=-1, keepdims=True)
    return jnp.sum(Gamma * w[..., None, None], axis=2)                    # (B,H,N,N)


if __name__ == "__main__":
    key = jax.random.PRNGKey(0)
    B, H, N, L = 2, 8, 16, 8        # batch, heads (module default 8), seq, slices
    kx, ky = jax.random.split(key)
    X = jax.random.normal(kx, (B, H, N, L), dtype=jnp.float32)
    Y = jax.random.normal(ky, (B, H, N, L), dtype=jnp.float32)

    out = jax.block_until_ready(esp_graph(X, Y))

    ref = esp_graph_ref(X, Y)
    assert out.shape == (B, H, N, N)
    err = float(jnp.max(jnp.abs(out - ref)))
    # 5e-3: headroom for the Gram-trick cdist, the MXU f32 emulation passes (amplified
    # by temperature=10 in the weight softmax) and the approximate (EUP) reciprocal
    # in the weight softmax; typical observed error is far smaller (~1e-4).
    assert err < 5e-3, f"max abs error {err}"

    print("KERNEL_OK")
</pallas_src>

<mosaic_0001>
module attributes {stable_mosaic.version = 11 : i64} {
  func.func @esp_graph_kernel(%arg0: i32, %arg1: memref<1x128x8xf32, #tpu.memory_space<vmem>>, %arg2: memref<1x128x8xf32, #tpu.memory_space<vmem>>, %arg3: memref<1x16x128xf32, #tpu.memory_space<vmem>>) attributes {dimension_semantics = [#tpu.dimension_semantics<parallel>], iteration_bounds = array<i64: 2>, scalar_prefetch = 0 : i64, scratch_operands = 0 : i64, tpu.core_type = #tpu.core_type<tc>, window_params = [{transform_indices = @transform_0, window_bounds = array<i64: 1, 128, 8>}, {transform_indices = @transform_1, window_bounds = array<i64: 1, 128, 8>}, {transform_indices = @transform_2, window_bounds = array<i64: 1, 16, 128>}]} {
    %c0 = arith.constant 0 : index
    %c0_0 = arith.constant 0 : index
    %c0_1 = arith.constant 0 : index
    %0 = vector.load %arg1[%c0, %c0_0, %c0_1] : memref<1x128x8xf32, #tpu.memory_space<vmem>>, vector<1x128x8xf32>
    %1 = vector.shape_cast %0 : vector<1x128x8xf32> to vector<128x8xf32>
    %c0_2 = arith.constant 0 : index
    %c0_3 = arith.constant 0 : index
    %c0_4 = arith.constant 0 : index
    %2 = vector.load %arg2[%c0_2, %c0_3, %c0_4] : memref<1x128x8xf32, #tpu.memory_space<vmem>>, vector<1x128x8xf32>
    %3 = vector.shape_cast %2 : vector<1x128x8xf32> to vector<128x8xf32>
    %4 = tpu.iota {dimensions = array<i32: 0>} : vector<128x128xi32>
    %5 = tpu.iota {dimensions = array<i32: 1>} : vector<128x128xi32>
    %c-16_i32 = arith.constant -16 : i32
    %6 = vector.broadcast %c-16_i32 : i32 to vector<128x128xi32>
    %7 = arith.andi %4, %6 : vector<128x128xi32>
    %c-16_i32_5 = arith.constant -16 : i32
    %8 = vector.broadcast %c-16_i32_5 : i32 to vector<128x128xi32>
    %9 = arith.andi %5, %8 : vector<128x128xi32>
    %10 = arith.cmpi eq, %7, %9 : vector<128x128xi32>
    %11 = arith.extui %10 : vector<128x128xi1> to vector<128x128xi32>
    %12 = arith.sitofp %11 : vector<128x128xi32> to vector<128x128xf32>
    %13 = tpu.iota {dimensions = array<i32: 0>} : vector<16x128xi32>
    %14 = tpu.iota {dimensions = array<i32: 1>} : vector<16x128xi32>
    %c15_i32 = arith.constant 15 : i32
    %15 = vector.broadcast %c15_i32 : i32 to vector<16x128xi32>
    %16 = arith.andi %14, %15 : vector<16x128xi32>
    %17 = arith.cmpi eq, %13, %16 : vector<16x128xi32>
    %18 = arith.extui %17 : vector<16x128xi1> to vector<16x128xi32>
    %19 = arith.sitofp %18 : vector<16x128xi32> to vector<16x128xf32>
    %20 = tpu.iota {dimensions = array<i32: 0>} : vector<8x8xi32>
    %21 = tpu.iota {dimensions = array<i32: 1>} : vector<8x8xi32>
    %22 = arith.cmpi eq, %20, %21 : vector<8x8xi32>
    %23 = arith.extui %22 : vector<8x8xi1> to vector<8x8xi32>
    %24 = arith.sitofp %23 : vector<8x8xi32> to vector<8x8xf32>
    %cst = arith.constant dense<0.000000e+00> : vector<8x128xf32>
    %25 = tpu.matmul %24, %1, %cst {dimension_numbers = #tpu.dot_dimension_numbers<[1], [1], [0], [0], [0, 0, 1, 0], [], []>} : vector<8x8xf32>, vector<128x8xf32>, vector<8x128xf32> -> vector<8x128xf32>
    %cst_6 = arith.constant dense<0.000000e+00> : vector<8x128xf32>
    %26 = tpu.matmul %24, %3, %cst_6 {dimension_numbers = #tpu.dot_dimension_numbers<[1], [1], [0], [0], [0, 0, 1, 0], [], []>} : vector<8x8xf32>, vector<128x8xf32>, vector<8x128xf32> -> vector<8x128xf32>
    %27 = vector.shape_cast %25 : vector<8x128xf32> to vector<8x1x128xf32>
    %28 = vector.shape_cast %19 : vector<16x128xf32> to vector<1x16x128xf32>
    %29 = vector.broadcast %27 : vector<8x1x128xf32> to vector<8x16x128xf32>
    %30 = vector.broadcast %28 : vector<1x16x128xf32> to vector<8x16x128xf32>
    %31 = arith.mulf %29, %30 : vector<8x16x128xf32>
    %32 = vector.shape_cast %31 : vector<8x16x128xf32> to vector<128x128xf32>
    %cst_7 = arith.constant dense<0.000000e+00> : vector<128x128xf32>
    %33 = tpu.matmul %32, %12, %cst_7 {dimension_numbers = #tpu.dot_dimension_numbers<[1], [0], [0], [1], [0, 0, 1, 1], [], []>} : vector<128x128xf32>, vector<128x128xf32>, vector<128x128xf32> -> vector<128x128xf32>
    %34 = vector.shape_cast %33 : vector<128x128xf32> to vector<8x16x128xf32>
    %35 = vector.shape_cast %19 : vector<16x128xf32> to vector<1x16x128xf32>
    %36 = vector.broadcast %35 : vector<1x16x128xf32> to vector<8x16x128xf32>
    %37 = arith.mulf %34, %36 : vector<8x16x128xf32>
    %cst_8 = arith.constant dense<0.000000e+00> : vector<8x128xf32>
    %38 = vector.multi_reduction <add>, %37, %cst_8 [1] : vector<8x16x128xf32> to vector<8x128xf32>
    %39 = vector.shape_cast %38 : vector<8x128xf32> to vector<8x1x128xf32>
    %40 = vector.broadcast %39 : vector<8x1x128xf32> to vector<8x16x128xf32>
    %41 = arith.cmpf ogt, %34, %40 : vector<8x16x128xf32>
    %42 = vector.broadcast %39 : vector<8x1x128xf32> to vector<8x16x128xf32>
    %43 = arith.cmpf oeq, %34, %42 : vector<8x16x128xf32>
    %44 = arith.cmpi slt, %13, %16 : vector<16x128xi32>
    %45 = vector.shape_cast %44 : vector<16x128xi1> to vector<1x16x128xi1>
    %46 = vector.broadcast %45 : vector<1x16x128xi1> to vector<8x16x128xi1>
    %47 = arith.andi %43, %46 : vector<8x16x128xi1>
    %48 = arith.ori %41, %47 : vector<8x16x128xi1>
    %49 = arith.extui %48 : vector<8x16x128xi1> to vector<8x16x128xi32>
    %cst_9 = arith.constant dense<0> : vector<8x128xi32>
    %50 = vector.multi_reduction <add>, %49, %cst_9 [1] : vector<8x16x128xi32> to vector<8x128xi32>
    %51 = vector.shape_cast %50 : vector<8x128xi32> to vector<8x1x128xi32>
    %52 = vector.shape_cast %13 : vector<16x128xi32> to vector<1x16x128xi32>
    %53 = vector.broadcast %51 : vector<8x1x128xi32> to vector<8x16x128xi32>
    %54 = vector.broadcast %52 : vector<1x16x128xi32> to vector<8x16x128xi32>
    %55 = arith.cmpi eq, %53, %54 : vector<8x16x128xi32>
    %cst_10 = arith.constant 0.000000e+00 : f32
    %56 = vector.shape_cast %27 : vector<8x1x128xf32> to vector<8x1x128xf32>
    %57 = vector.broadcast %56 : vector<8x1x128xf32> to vector<8x16x128xf32>
    %58 = vector.broadcast %cst_10 : f32 to vector<8x16x128xf32>
    %59 = arith.select %55, %57, %58 : vector<8x16x128xi1>, vector<8x16x128xf32>
    %60 = vector.shape_cast %59 : vector<8x16x128xf32> to vector<128x128xf32>
    %cst_11 = arith.constant dense<0.000000e+00> : vector<128x128xf32>
    %61 = tpu.matmul %60, %12, %cst_11 {dimension_numbers = #tpu.dot_dimension_numbers<[1], [0], [0], [1], [0, 0, 1, 1], [], []>} : vector<128x128xf32>, vector<128x128xf32>, vector<128x128xf32> -> vector<128x128xf32>
    %62 = vector.shape_cast %61 : vector<128x128xf32> to vector<8x16x128xf32>
    %63 = vector.broadcast %27 : vector<8x1x128xf32> to vector<8x16x128xf32>
    %64 = arith.subf %63, %62 : vector<8x16x128xf32>
    %65 = arith.mulf %64, %64 : vector<8x16x128xf32>
    %cst_12 = arith.constant -1.000000e+03 : f32
    %66 = vector.broadcast %cst_12 : f32 to vector<8x16x128xf32>
    %67 = arith.mulf %65, %66 : vector<8x16x128xf32>
    %68 = math.exp %67 : vector<8x16x128xf32>
    %69 = vector.shape_cast %68 : vector<8x16x128xf32> to vector<128x128xf32>
    %cst_13 = arith.constant dense<0.000000e+00> : vector<128x128xf32>
    %70 = tpu.matmul %69, %12, %cst_13 {dimension_numbers = #tpu.dot_dimension_numbers<[1], [0], [0], [1], [0, 0, 1, 1], [], []>} : vector<128x128xf32>, vector<128x128xf32>, vector<128x128xf32> -> vector<128x128xf32>
    %71 = arith.divf %69, %70 : vector<128x128xf32>
    %72 = vector.shape_cast %26 : vector<8x128xf32> to vector<8x1x128xf32>
    %73 = vector.shape_cast %19 : vector<16x128xf32> to vector<1x16x128xf32>
    %74 = vector.broadcast %72 : vector<8x1x128xf32> to vector<8x16x128xf32>
    %75 = vector.broadcast %73 : vector<1x16x128xf32> to vector<8x16x128xf32>
    %76 = arith.mulf %74, %75 : vector<8x16x128xf32>
    %77 = vector.shape_cast %76 : vector<8x16x128xf32> to vector<128x128xf32>
    %cst_14 = arith.constant dense<0.000000e+00> : vector<128x128xf32>
    %78 = tpu.matmul %77, %12, %cst_14 {dimension_numbers = #tpu.dot_dimension_numbers<[1], [0], [0], [1], [0, 0, 1, 1], [], []>} : vector<128x128xf32>, vector<128x128xf32>, vector<128x128xf32> -> vector<128x128xf32>
    %79 = vector.shape_cast %78 : vector<128x128xf32> to vector<8x16x128xf32>
    %80 = vector.shape_cast %19 : vector<16x128xf32> to vector<1x16x128xf32>
    %81 = vector.broadcast %80 : vector<1x16x128xf32> to vector<8x16x128xf32>
    %82 = arith.mulf %79, %81 : vector<8x16x128xf32>
    %cst_15 = arith.constant dense<0.000000e+00> : vector<8x128xf32>
    %83 = vector.multi_reduction <add>, %82, %cst_15 [1] : vector<8x16x128xf32> to vector<8x128xf32>
    %84 = vector.shape_cast %83 : vector<8x128xf32> to vector<8x1x128xf32>
    %85 = vector.broadcast %84 : vector<8x1x128xf32> to vector<8x16x128xf32>
    %86 = arith.cmpf ogt, %79, %85 : vector<8x16x128xf32>
    %87 = vector.broadcast %84 : vector<8x1x128xf32> to vector<8x16x128xf32>
    %88 = arith.cmpf oeq, %79, %87 : vector<8x16x128xf32>
    %89 = arith.cmpi slt, %13, %16 : vector<16x128xi32>
    %90 = vector.shape_cast %89 : vector<16x128xi1> to vector<1x16x128xi1>
    %91 = vector.broadcast %90 : vector<1x16x128xi1> to vector<8x16x128xi1>
    %92 = arith.andi %88, %91 : vector<8x16x128xi1>
    %93 = arith.ori %86, %92 : vector<8x16x128xi1>
    %94 = arith.extui %93 : vector<8x16x128xi1> to vector<8x16x128xi32>
    %cst_16 = arith.constant dense<0> : vector<8x128xi32>
    %95 = vector.multi_reduction <add>, %94, %cst_16 [1] : vector<8x16x128xi32> to vector<8x128xi32>
    %96 = vector.shape_cast %95 : vector<8x128xi32> to vector<8x1x128xi32>
    %97 = vector.shape_cast %13 : vector<16x128xi32> to vector<1x16x128xi32>
    %98 = vector.broadcast %96 : vector<8x1x128xi32> to vector<8x16x128xi32>
    %99 = vector.broadcast %97 : vector<1x16x128xi32> to vector<8x16x128xi32>
    %100 = arith.cmpi eq, %98, %99 : vector<8x16x128xi32>
    %cst_17 = arith.constant 0.000000e+00 : f32
    %101 = vector.shape_cast %72 : vector<8x1x128xf32> to vector<8x1x128xf32>
    %102 = vector.broadcast %101 : vector<8x1x128xf32> to vector<8x16x128xf32>
    %103 = vector.broadcast %cst_17 : f32 to vector<8x16x128xf32>
    %104 = arith.select %100, %102, %103 : vector<8x16x128xi1>, vector<8x16x128xf32>
    %105 = vector.shape_cast %104 : vector<8x16x128xf32> to vector<128x128xf32>
    %cst_18 = arith.constant dense<0.000000e+00> : vector<128x128xf32>
    %106 = tpu.matmul %105, %12, %cst_18 {dimension_numbers = #tpu.dot_dimension_numbers<[1], [0], [0], [1], [0, 0, 1, 1], [], []>} : vector<128x128xf32>, vector<128x128xf32>, vector<128x128xf32> -> vector<128x128xf32>
    %107 = vector.shape_cast %106 : vector<128x128xf32> to vector<8x16x128xf32>
    %108 = vector.broadcast %72 : vector<8x1x128xf32> to vector<8x16x128xf32>
    %109 = arith.subf %108, %107 : vector<8x16x128xf32>
    %110 = arith.mulf %109, %109 : vector<8x16x128xf32>
    %cst_19 = arith.constant -1.000000e+03 : f32
    %111 = vector.broadcast %cst_19 : f32 to vector<8x16x128xf32>
    %112 = arith.mulf %110, %111 : vector<8x16x128xf32>
    %113 = math.exp %112 : vector<8x16x128xf32>
    %114 = vector.shape_cast %113 : vector<8x16x128xf32> to vector<128x128xf32>
    %cst_20 = arith.constant dense<0.000000e+00> : vector<128x128xf32>
    %115 = tpu.matmul %114, %12, %cst_20 {dimension_numbers = #tpu.dot_dimension_numbers<[1], [0], [0], [1], [0, 0, 1, 1], [], []>} : vector<128x128xf32>, vector<128x128xf32>, vector<128x128xf32> -> vector<128x128xf32>
    %116 = arith.divf %114, %115 : vector<128x128xf32>
    %cst_21 = arith.constant dense<0.000000e+00> : vector<128x128xf32>
    %117 = tpu.matmul %1, %3, %cst_21 {dimension_numbers = #tpu.dot_dimension_numbers<[1], [1], [0], [0], [0, 0, 1, 0], [], []>} : vector<128x8xf32>, vector<128x8xf32>, vector<128x128xf32> -> vector<128x128xf32>
    %118 = arith.mulf %1, %1 : vector<128x8xf32>
    %cst_22 = arith.constant dense<0.000000e+00> : vector<128xf32>
    %119 = vector.multi_reduction <add>, %118, %cst_22 [1] : vector<128x8xf32> to vector<128xf32>
    %120 = vector.shape_cast %119 : vector<128xf32> to vector<128x1xf32>
    %121 = arith.mulf %26, %26 : vector<8x128xf32>
    %cst_23 = arith.constant dense<0.000000e+00> : vector<128xf32>
    %122 = vector.multi_reduction <add>, %121, %cst_23 [0] : vector<8x128xf32> to vector<128xf32>
    %123 = vector.shape_cast %122 : vector<128xf32> to vector<1x128xf32>
    %124 = vector.broadcast %120 : vector<128x1xf32> to vector<128x128xf32>
    %125 = vector.broadcast %123 : vector<1x128xf32> to vector<128x128xf32>
    %126 = arith.addf %124, %125 : vector<128x128xf32>
    %cst_24 = arith.constant 2.000000e+00 : f32
    %127 = vector.broadcast %cst_24 : f32 to vector<128x128xf32>
    %128 = arith.mulf %127, %117 : vector<128x128xf32>
    %129 = arith.subf %126, %128 : vector<128x128xf32>
    %cst_25 = arith.constant 0.000000e+00 : f32
    %130 = vector.broadcast %cst_25 : f32 to vector<128x128xf32>
    %131 = arith.maximumf %129, %130 : vector<128x128xf32>
    %132 = math.sqrt %131 : vector<128x128xf32>
    %133 = arith.mulf %132, %12 : vector<128x128xf32>
    %cst_26 = arith.constant dense<0.000000e+00> : vector<128x128xf32>
    %134 = tpu.matmul %71, %133, %cst_26 {dimension_numbers = #tpu.dot_dimension_numbers<[1], [0], [0], [1], [0, 0, 1, 1], [], []>} : vector<128x128xf32>, vector<128x128xf32>, vector<128x128xf32> -> vector<128x128xf32>
    %135 = arith.mulf %134, %116 : vector<128x128xf32>
    %136 = vector.shape_cast %135 : vector<128x128xf32> to vector<8x16x128xf32>
    %cst_27 = arith.constant dense<0.000000e+00> : vector<8x128xf32>
    %137 = vector.multi_reduction <add>, %136, %cst_27 [1] : vector<8x16x128xf32> to vector<8x128xf32>
    %cst_28 = arith.constant dense<0.000000e+00> : vector<8x128xf32>
    %138 = tpu.matmul %137, %12, %cst_28 {dimension_numbers = #tpu.dot_dimension_numbers<[1], [0], [0], [1], [0, 0, 1, 1], [], []>} : vector<8x128xf32>, vector<128x128xf32>, vector<8x128xf32> -> vector<8x128xf32>
    %cst_29 = arith.constant dense<0x7F800000> : vector<128xf32>
    %139 = vector.multi_reduction <minimumf>, %138, %cst_29 [0] : vector<8x128xf32> to vector<128xf32>
    %140 = vector.shape_cast %139 : vector<128xf32> to vector<1x128xf32>
    %141 = vector.broadcast %140 : vector<1x128xf32> to vector<8x128xf32>
    %142 = arith.subf %138, %141 : vector<8x128xf32>
    %cst_30 = arith.constant -1.000000e+01 : f32
    %143 = vector.broadcast %cst_30 : f32 to vector<8x128xf32>
    %144 = arith.mulf %142, %143 : vector<8x128xf32>
    %145 = math.exp %144 : vector<8x128xf32>
    %cst_31 = arith.constant dense<0.000000e+00> : vector<128xf32>
    %146 = vector.multi_reduction <add>, %145, %cst_31 [0] : vector<8x128xf32> to vector<128xf32>
    %147 = vector.shape_cast %146 : vector<128xf32> to vector<1x128xf32>
    %148 = tpu.reciprocal %147 {approx = true} : vector<1x128xf32> -> vector<1x128xf32>
    %149 = vector.broadcast %148 : vector<1x128xf32> to vector<8x128xf32>
    %150 = arith.mulf %145, %149 : vector<8x128xf32>
    %151 = vector.shape_cast %150 : vector<8x128xf32> to vector<8x1x128xf32>
    %152 = vector.shape_cast %151 : vector<8x1x128xf32> to vector<8x1x128xf32>
    %153 = vector.broadcast %152 : vector<8x1x128xf32> to vector<8x16x128xf32>
    %154 = vector.shape_cast %153 : vector<8x16x128xf32> to vector<128x128xf32>
    %155 = arith.mulf %71, %154 : vector<128x128xf32>
    %cst_32 = arith.constant dense<0.000000e+00> : vector<128x128xf32>
    %156 = tpu.matmul %155, %116, %cst_32 {dimension_numbers = #tpu.dot_dimension_numbers<[0], [0], [1], [1], [0, 1, 1, 1], [], []>} : vector<128x128xf32>, vector<128x128xf32>, vector<128x128xf32> -> vector<128x128xf32>
    %157 = arith.mulf %156, %12 : vector<128x128xf32>
    %158 = vector.shape_cast %157 : vector<128x128xf32> to vector<8x16x128xf32>
    %cst_33 = arith.constant dense<0.000000e+00> : vector<16x128xf32>
    %159 = vector.multi_reduction <add>, %158, %cst_33 [0] : vector<8x16x128xf32> to vector<16x128xf32>
    %c0_34 = arith.constant 0 : index
    %c0_35 = arith.constant 0 : index
    %c0_36 = arith.constant 0 : index
    %160 = vector.load %arg3[%c0_34, %c0_35, %c0_36] : memref<1x16x128xf32, #tpu.memory_space<vmem>>, vector<1x16x128xf32>
    %161 = vector.shape_cast %160 : vector<1x16x128xf32> to vector<16x128xf32>
    %162 = vector.shape_cast %159 : vector<16x128xf32> to vector<1x16x128xf32>
    tpu.vector_store %arg3[%c0_34, %c0_35, %c0_36], %162 {strides = array<i32>} : memref<1x16x128xf32, #tpu.memory_space<vmem>>, vector<1x16x128xf32>,
    return
  }
  func.func @transform_0(%arg0: i32) -> (i32, i32, i32) {
    %c0_i32 = arith.constant 0 : i32
    %c0_i32_0 = arith.constant 0 : i32
    %c0_i32_1 = arith.constant 0 : i32
    return %arg0, %c0_i32, %c0_i32_0 : i32, i32, i32
  }
  func.func @transform_1(%arg0: i32) -> (i32, i32, i32) {
    %c0_i32 = arith.constant 0 : i32
    %c0_i32_0 = arith.constant 0 : i32
    %c0_i32_1 = arith.constant 0 : i32
    return %arg0, %c0_i32, %c0_i32_0 : i32, i32, i32
  }
  func.func @transform_2(%arg0: i32) -> (i32, i32, i32) {
    %c0_i32 = arith.constant 0 : i32
    %c0_i32_0 = arith.constant 0 : i32
    %c0_i32_1 = arith.constant 0 : i32
    return %arg0, %c0_i32, %c0_i32_0 : i32, i32, i32
  }
}

</mosaic_0001>

<llo_original>
// kernel: tpu_custom_call.1
$region0: #{tpu_custom_call.1}
  #allocation0 [shape = 'u32[]', space=smem, size = 0x4, offset = 0x4, fixed_abs, tag = 'smem constant byte address 0x4 - core index']
  #allocation1 [shape = 'u32[144,128]{1,0:T(1,128)}', space=vmem, size = 0x12000, scoped, tag = 'internal scratch']
  %s0 = inlined_call_operand.vmem [shape: f32[2,128,8], index: 0, kind: input, shape index: {}]
  %s1 = inlined_call_operand.vmem [shape: f32[2,128,8], index: 1, kind: input, shape index: {}]
  %s2 = inlined_call_operand.hbm [shape: f32[2,16,128], index: 2, kind: output, shape index: {}]
  %s3 = sld [smem:[#allocation0]]
  $region41: #{tpu_custom_call.1} parent=0
    _
  %s5 = ssub.s32 1, %s3
  %s6 = scalar_select 0, %s5, %s3
  $region1: #{tpu_custom_call.1} parent=0
    #allocation2 [shape = 'u8[16384]{0}', space=vmem, size = 0x4000, scoped, tag = 'output window, operand 0']
    #allocation3 [shape = 's32[2]{0}', space=sflag, size = 0x8, scoped, tag = 'scoped memory for tpu_custom_call.1']
    %7 = vsyncpa [#allocation3], 0
    %s8 = scalar_lea.sflag [#allocation3], 1
    %9 = vsyncpa %s8, 0
    loop: start=0, step=1, limit=4
    $region2: #{tpu_custom_call.1} parent=1 // loop_pre_header
      _
    $region3: #{tpu_custom_call.1} parent=1 // loop_header
      %s11 = sphi 0, %s15
      %p12 = scmp.ge.s32.totalorder %s11, 4
      %s21 = sphi 0, %s23
      %s24 = sphi 0, %s21
      %s25 = sphi 0, %s24
      %s41 = sphi 0, %s25
      %s47 = sphi 0, %s49
      %s50 = sphi 0, %s47
      %s51 = sphi 0, %s50
      %s67 = sphi 0, %s51
      %s73 = sphi 0, %s75
      %s76 = sphi 0, %s73
      %s77 = sphi 0, %s76
      %s93 = sphi 0, %s77
    $region4: #{tpu_custom_call.1} parent=1 // loop_header_branch
      %14 = sbr.rel (%p12) target = $region8
    $region5: #{tpu_custom_call.1} parent=1 // loop_body
      %s16 = ssub.s32 %s11, 1
      %s17 = ssub.s32 %s11, 2
      %s18 = sadd.s32 %s11, 1
      %s19 = ssub.s32 %s11, %s18
      %p20 = scmp.eq.s32.totalorder %s19, 0
      %s22 = sadd.s32 %s21, 1
      %s23 = scalar_select %p20, %s21, %s22
      %p26 = pneg %p20
      %p27 = scmp.eq.s32.totalorder %s11, 1
      %p28 = por %p26, %p27
      %p29 = scmp.ne.s32.totalorder %s21, %s24
      %p30 = scmp.eq.s32.totalorder %s11, 0
      %p31 = por %p29, %p30
      %p32 = scmp.ne.s32.totalorder %s21, %s24
      %p33 = scmp.eq.s32.totalorder %s16, 1
      %p34 = por %p32, %p33
      %p35 = scmp.ne.s32.totalorder %s24, %s25
      %p36 = scmp.eq.s32.totalorder %s16, 0
      %p37 = por %p35, %p36
      %p38 = scmp.ne.s32.totalorder %s24, %s25
      %p39 = scmp.eq.s32.totalorder %s17, 1
      %p40 = por %p38, %p39
      %p42 = scmp.ne.s32.totalorder %s25, %s41
      %p43 = scmp.eq.s32.totalorder %s17, 0
      %p44 = por %p42, %p43
      %s45 = ssub.s32 %s11, %s18
      %p46 = scmp.eq.s32.totalorder %s45, 0
      %s48 = sadd.s32 %s47, 1
      %s49 = scalar_select %p46, %s47, %s48
      %p52 = pneg %p46
      %p53 = scmp.eq.s32.totalorder %s11, 1
      %p54 = por %p52, %p53
      %p55 = scmp.ne.s32.totalorder %s47, %s50
      %p56 = scmp.eq.s32.totalorder %s11, 0
      %p57 = por %p55, %p56
      %p58 = scmp.ne.s32.totalorder %s47, %s50
      %p59 = scmp.eq.s32.totalorder %s16, 1
      %p60 = por %p58, %p59
      %p61 = scmp.ne.s32.totalorder %s50, %s51
      %p62 = scmp.eq.s32.totalorder %s16, 0
      %p63 = por %p61, %p62
      %p64 = scmp.ne.s32.totalorder %s50, %s51
      %p65 = scmp.eq.s32.totalorder %s17, 1
      %p66 = por %p64, %p65
      %p68 = scmp.ne.s32.totalorder %s51, %s67
      %p69 = scmp.eq.s32.totalorder %s17, 0
      %p70 = por %p68, %p69
      %s71 = ssub.s32 %s11, %s18
      %p72 = scmp.eq.s32.totalorder %s71, 0
      %s74 = sadd.s32 %s73, 1
      %s75 = scalar_select %p72, %s73, %s74
      %p78 = pneg %p72
      %p79 = scmp.eq.s32.totalorder %s11, 1
      %p80 = por %p78, %p79
      %p81 = scmp.ne.s32.totalorder %s73, %s76
      %p82 = scmp.eq.s32.totalorder %s11, 0
      %p83 = por %p81, %p82
      %p84 = scmp.ne.s32.totalorder %s73, %s76
      %p85 = scmp.eq.s32.totalorder %s16, 1
      %p86 = por %p84, %p85
      %p87 = scmp.ne.s32.totalorder %s76, %s77
      %p88 = scmp.eq.s32.totalorder %s16, 0
      %p89 = por %p87, %p88
      %p90 = scmp.ne.s32.totalorder %s76, %s77
      %p91 = scmp.eq.s32.totalorder %s17, 1
      %p92 = por %p90, %p91
      %p94 = scmp.ne.s32.totalorder %s77, %s93
      %p95 = scmp.eq.s32.totalorder %s17, 0
      %p96 = por %p94, %p95
      %p97 = scmp.le.s32.totalorder 1, %s11
      %p98 = scmp.lt.s32.totalorder %s11, 3
      %p99 = pnand %p97, %p98
      %p100 = pneg %p99
      // Predicated region
      $region9: #{tpu_custom_call.1} parent=5 // pred_check
        _
      $region10: #{tpu_custom_call.1} parent=5 // pred_check_branch
        %102 = sbr.rel (%p99) target = $region12
      $region11: #{tpu_custom_call.1} parent=5 // pred_region
        %s103 = ssub.s32 %s11, 1
      $region12: #{tpu_custom_call.1} parent=5 // pred_fallthru
        _
      %p104 = scmp.lt.s32.totalorder %s11, 2
      // Predicated region
      $region13: #{tpu_custom_call.1} parent=5 // pred_check
        %p105 = pneg %p104
      $region14: #{tpu_custom_call.1} parent=5 // pred_check_branch
        %107 = sbr.rel (%p105) target = $region16
      $region15: #{tpu_custom_call.1} parent=5 // pred_region
        // Predicated region
        $region17: #{tpu_custom_call.1} parent=15 // pred_check
          %p108 = pneg %p31
        $region18: #{tpu_custom_call.1} parent=15 // pred_check_branch
          %110 = sbr.rel (%p108) target = $region20
        $region19: #{tpu_custom_call.1} parent=15 // pred_region
          %p111 = scmp.lt.s32.totalorder %s11, 1
          %s112 = scalar_select %p111, %s11, 1
          %s113 = smul.addr %s112, 16
          %s114 = smul.addr %s113, 8
          %s115 = scalar_lea.vmem %s0, %s114
        $region20: #{tpu_custom_call.1} parent=15 // pred_fallthru
          _
        // Predicated region
        $region21: #{tpu_custom_call.1} parent=15 // pred_check
          %p116 = pneg %p57
        $region22: #{tpu_custom_call.1} parent=15 // pred_check_branch
          %118 = sbr.rel (%p116) target = $region24
        $region23: #{tpu_custom_call.1} parent=15 // pred_region
          %p119 = scmp.lt.s32.totalorder %s11, 1
          %s120 = scalar_select %p119, %s11, 1
          %s121 = smul.addr %s120, 16
          %s122 = smul.addr %s121, 8
          %s123 = scalar_lea.vmem %s1, %s122
        $region24: #{tpu_custom_call.1} parent=15 // pred_fallthru
          _
      $region16: #{tpu_custom_call.1} parent=5 // pred_fallthru
        _
      %p124 = scmp.le.s32.totalorder 1, %s11
      %p125 = scmp.lt.s32.totalorder %s11, 3
      %p126 = pnand %p124, %p125
      %p127 = pneg %p126
      // Predicated region
      $region25: #{tpu_custom_call.1} parent=5 // pred_check
        _
      $region26: #{tpu_custom_call.1} parent=5 // pred_check_branch
        %129 = sbr.rel (%p126) target = $region28
      $region27: #{tpu_custom_call.1} parent=5 // pred_region
        %s130 = ssub.s32 %s11, 1
        %p131 = scmp.lt.s32.totalorder %s16, 1
        %s132 = scalar_select %p131, %s16, 1
        %s133 = smul.addr %s132, 16
        %s134 = smul.addr %s133, 8
        %s135 = scalar_lea.vmem %s0, %s134
        %p136 = pneg %p37
        %p137 = pneg %p34
        %p138 = scmp.lt.s32.totalorder %s16, 1
        %s139 = scalar_select %p138, %s16, 1
        %s140 = smul.addr %s139, 16
        %s141 = smul.addr %s140, 8
        %s142 = scalar_lea.vmem %s1, %s141
        %p143 = pneg %p63
        %p144 = pneg %p60
        %p145 = pneg %p89
        %p146 = pneg %p86
        %s147 = sand.u32 %s76, 1
        %s148 = scalar_lea.sflag [#allocation3], %s147
        %s149 = sand.u32 %s76, 1
        %s150 = smul.addr %s149, 16
        %s151 = scalar_lea.vmem [#allocation2], %s150
        %p152 = scmp.lt.s32.totalorder %s16, 1
        %s153 = scalar_select %p152, %s16, 1
        %s154 = smul.addr %s153, 16
        %s155 = smul.addr %s154, 8
        %s156 = scalar_lea.vmem %s0, %s155
        %p157 = scmp.lt.s32.totalorder %s16, 1
        %s158 = scalar_select %p157, %s16, 1
        %s159 = smul.addr %s158, 16
        %s160 = smul.addr %s159, 8
        %s161 = scalar_lea.vmem %s1, %s160
        %v162 = vld [vmem:[%s156] sm:$0xff]
        %v163 = vld [vmem:[%s156 + $0x8] sm:$0xff]
        %v164 = vld [vmem:[%s156 + $0x10] sm:$0xff]
        %v165 = vld [vmem:[%s156 + $0x18] sm:$0xff]
        %v166 = vld [vmem:[%s156 + $0x20] sm:$0xff]
        %v167 = vld [vmem:[%s156 + $0x28] sm:$0xff]
        %v168 = vld [vmem:[%s156 + $0x30] sm:$0xff]
        %v169 = vld [vmem:[%s156 + $0x38] sm:$0xff]
        %v170 = vld [vmem:[%s156 + $0x40] sm:$0xff]
        %v171 = vld [vmem:[%s156 + $0x48] sm:$0xff]
        %v172 = vld [vmem:[%s156 + $0x50] sm:$0xff]
        %v173 = vld [vmem:[%s156 + $0x58] sm:$0xff]
        %v174 = vld [vmem:[%s156 + $0x60] sm:$0xff]
        %v175 = vld [vmem:[%s156 + $0x68] sm:$0xff]
        %v176 = vld [vmem:[%s156 + $0x70] sm:$0xff]
        %v177 = vld [vmem:[%s156 + $0x78] sm:$0xff]
        %v178 = vld [vmem:[%s161] sm:$0xff]
        %v179 = vld [vmem:[%s161 + $0x8] sm:$0xff]
        %v180 = vld [vmem:[%s161 + $0x10] sm:$0xff]
        %v181 = vld [vmem:[%s161 + $0x18] sm:$0xff]
        %v182 = vld [vmem:[%s161 + $0x20] sm:$0xff]
        %v183 = vld [vmem:[%s161 + $0x28] sm:$0xff]
        %v184 = vld [vmem:[%s161 + $0x30] sm:$0xff]
        %v185 = vld [vmem:[%s161 + $0x38] sm:$0xff]
        %v186 = vld [vmem:[%s161 + $0x40] sm:$0xff]
        %v187 = vld [vmem:[%s161 + $0x48] sm:$0xff]
        %v188 = vld [vmem:[%s161 + $0x50] sm:$0xff]
        %v189 = vld [vmem:[%s161 + $0x58] sm:$0xff]
        %v190 = vld [vmem:[%s161 + $0x60] sm:$0xff]
        %v191 = vld [vmem:[%s161 + $0x68] sm:$0xff]
        %v192 = vld [vmem:[%s161 + $0x70] sm:$0xff]
        %v193 = vld [vmem:[%s161 + $0x78] sm:$0xff]
        %v194 = vlaneseq
        %v195 = vshrl.u32 %v194, 7
        %v196 = vadd.s32 %v195, 8
        %v197 = vadd.s32 %v195, 16
        %v198 = vadd.s32 %v195, 24
        %v199 = vadd.s32 %v195, 32
        %v200 = vadd.s32 %v195, 40
        %v201 = vadd.s32 %v195, 48
        %v202 = vadd.s32 %v195, 56
        %v203 = vadd.s32 %v195, 64
        %v204 = vadd.s32 %v195, 72
        %v205 = vadd.s32 %v195, 80
        %v206 = vadd.s32 %v195, 88
        %v207 = vadd.s32 %v195, 96
        %v208 = vadd.s32 %v195, 104
        %v209 = vadd.s32 %v195, 112
        %v210 = vadd.s32 %v195, 120
        %v211 = vlaneseq
        %v212 = vand.u32 %v211, 127
        %v213 = vand.u32 %v195, 4294967280
        %v214 = vand.u32 %v196, 4294967280
        %v215 = vand.u32 %v197, 4294967280
        %v216 = vand.u32 %v198, 4294967280
        %v217 = vand.u32 %v199, 4294967280
        %v218 = vand.u32 %v200, 4294967280
        %v219 = vand.u32 %v201, 4294967280
        %v220 = vand.u32 %v202, 4294967280
        %v221 = vand.u32 %v203, 4294967280
        %v222 = vand.u32 %v204, 4294967280
        %v223 = vand.u32 %v205, 4294967280
        %v224 = vand.u32 %v206, 4294967280
        %v225 = vand.u32 %v207, 4294967280
        %v226 = vand.u32 %v208, 4294967280
        %v227 = vand.u32 %v209, 4294967280
        %v228 = vand.u32 %v210, 4294967280
        %v229 = vand.u32 %v212, 4294967280
        %vm230 = vcmp.eq.s32.totalorder %v213, %v229
        %vm231 = vcmp.eq.s32.totalorder %v214, %v229
        %vm232 = vcmp.eq.s32.totalorder %v215, %v229
        %vm233 = vcmp.eq.s32.totalorder %v216, %v229
        %vm234 = vcmp.eq.s32.totalorder %v217, %v229
        %vm235 = vcmp.eq.s32.totalorder %v218, %v229
        %vm236 = vcmp.eq.s32.totalorder %v219, %v229
        %vm237 = vcmp.eq.s32.totalorder %v220, %v229
        %vm238 = vcmp.eq.s32.totalorder %v221, %v229
        %vm239 = vcmp.eq.s32.totalorder %v222, %v229
        %vm240 = vcmp.eq.s32.totalorder %v223, %v229
        %vm241 = vcmp.eq.s32.totalorder %v224, %v229
        %vm242 = vcmp.eq.s32.totalorder %v225, %v229
        %vm243 = vcmp.eq.s32.totalorder %v226, %v229
        %vm244 = vcmp.eq.s32.totalorder %v227, %v229
        %vm245 = vcmp.eq.s32.totalorder %v228, %v229
        %v246 = vsel %vm230, 1, 0
        %v247 = vsel %vm231, 1, 0
        %v248 = vsel %vm232, 1, 0
        %v249 = vsel %vm233, 1, 0
        %v250 = vsel %vm234, 1, 0
        %v251 = vsel %vm235, 1, 0
        %v252 = vsel %vm236, 1, 0
        %v253 = vsel %vm237, 1, 0
        %v254 = vsel %vm238, 1, 0
        %v255 = vsel %vm239, 1, 0
        %v256 = vsel %vm240, 1, 0
        %v257 = vsel %vm241, 1, 0
        %v258 = vsel %vm242, 1, 0
        %v259 = vsel %vm243, 1, 0
        %v260 = vsel %vm244, 1, 0
        %v261 = vsel %vm245, 1, 0
        %v262 = vcvt.s32.f32 %v246
        %v263 = vcvt.s32.f32 %v247
        %v264 = vcvt.s32.f32 %v248
        %v265 = vcvt.s32.f32 %v249
        %v266 = vcvt.s32.f32 %v250
        %v267 = vcvt.s32.f32 %v251
        %v268 = vcvt.s32.f32 %v252
        %v269 = vcvt.s32.f32 %v253
        %v270 = vcvt.s32.f32 %v254
        %v271 = vcvt.s32.f32 %v255
        %v272 = vcvt.s32.f32 %v256
        %v273 = vcvt.s32.f32 %v257
        %v274 = vcvt.s32.f32 %v258
        %v275 = vcvt.s32.f32 %v259
        %v276 = vcvt.s32.f32 %v260
        %v277 = vcvt.s32.f32 %v261
        %v278 = vand.u32 %v212, 15
        %vm279 = vcmp.eq.s32.totalorder %v195, %v278
        %vm280 = vcmp.eq.s32.totalorder %v196, %v278
        %v281 = vsel %vm279, 1, 0
        %v282 = vsel %vm280, 1, 0
        %v283 = vcvt.s32.f32 %v281
        %v284 = vcvt.s32.f32 %v282
        %vm285 = vcmp.eq.s32.totalorder %v195, %v212
        %v286 = vsel %vm285, 1, 0
        %v287 = vcvt.s32.f32 %v286
        %vm288 = vcmask 64512
        %v290 = vsel %vm288, %v287, 0
        %v293 = vsel %vm288, %v162, 0
        %v296 = vsel %vm288, %v163, 0
        %v299 = vsel %vm288, %v164, 0
        %v302 = vsel %vm288, %v165, 0
        %v305 = vsel %vm288, %v166, 0
        %v308 = vsel %vm288, %v167, 0
        %v311 = vsel %vm288, %v168, 0
        %v314 = vsel %vm288, %v169, 0
        %v317 = vsel %vm288, %v170, 0
        %v320 = vsel %vm288, %v171, 0
        %v323 = vsel %vm288, %v172, 0
        %v326 = vsel %vm288, %v173, 0
        %v329 = vsel %vm288, %v174, 0
        %v332 = vsel %vm288, %v175, 0
        %v335 = vsel %vm288, %v176, 0
        %v338 = vsel %vm288, %v177, 0
        %340 = vmatprep.subr.mxu0 0.0
        %341 = vmatpush1.xpose.msra.mxu0 %v293
        %342 = vmatprep.subr.mxu0 0.0
        %343 = vmatpush1.xpose.msra.mxu0 %v296
        %344 = vmatprep.subr.mxu0 0.0
        %345 = vmatpush1.xpose.msra.mxu0 %v299
        %346 = vmatprep.subr.mxu0 0.0
        %347 = vmatpush1.xpose.msra.mxu0 %v302
        %348 = vmatprep.subr.mxu0 0.0
        %349 = vmatpush1.xpose.msra.mxu0 %v305
        %350 = vmatprep.subr.mxu0 0.0
        %351 = vmatpush1.xpose.msra.mxu0 %v308
        %352 = vmatprep.subr.mxu0 0.0
        %353 = vmatpush1.xpose.msra.mxu0 %v311
        %354 = vmatprep.subr.mxu0 0.0
        %355 = vmatpush1.xpose.msra.mxu0 %v314
        %356 = vmatprep.subr.mxu0 0.0
        %357 = vmatpush1.xpose.msra.mxu0 %v317
        %358 = vmatprep.subr.mxu0 0.0
        %359 = vmatpush1.xpose.msra.mxu0 %v320
        %360 = vmatprep.subr.mxu0 0.0
        %361 = vmatpush1.xpose.msra.mxu0 %v323
        %362 = vmatprep.subr.mxu0 0.0
        %363 = vmatpush1.xpose.msra.mxu0 %v326
        %364 = vmatprep.subr.mxu0 0.0
        %365 = vmatpush1.xpose.msra.mxu0 %v329
        %366 = vmatprep.subr.mxu0 0.0
        %367 = vmatpush1.xpose.msra.mxu0 %v332
        %368 = vmatprep.subr.mxu0 0.0
        %369 = vmatpush1.xpose.msra.mxu0 %v335
        %370 = vmatprep.subr.mxu0 0.0
        %371 = vmatpush1.xpose.msra.mxu0 %v338
        %372 = vmatprep.subr.mxu0 0.0
        %373 = vmatpush1.xpose.msra.mxu0 0.0
        %374 = vmatprep.subr.mxu0 0.0
        %375 = vmatpush1.xpose.msra.mxu0 0.0
        %376 = vmatprep.subr.mxu0 0.0
        %377 = vmatpush1.xpose.msra.mxu0 0.0
        %378 = vmatprep.subr.mxu0 0.0
        %379 = vmatpush1.xpose.msra.mxu0 0.0
        %380 = vmatprep.subr.mxu0 0.0
        %381 = vmatpush1.xpose.msra.mxu0 0.0
        %382 = vmatprep.subr.mxu0 0.0
        %383 = vmatpush1.xpose.msra.mxu0 0.0
        %384 = vmatprep.subr.mxu0 0.0
        %385 = vmatpush1.xpose.msra.mxu0 0.0
        %386 = vmatprep.subr.mxu0 0.0
        %387 = vmatpush1.xpose.msra.mxu0 0.0
        %388 = vmatprep.subr.mxu0 0.0
        %389 = vmatpush1.xpose.msra.mxu0 0.0
        %390 = vmatprep.subr.mxu0 0.0
        %391 = vmatpush1.xpose.msra.mxu0 0.0
        %392 = vmatprep.subr.mxu0 0.0
        %393 = vmatpush1.xpose.msra.mxu0 0.0
        %394 = vmatprep.subr.mxu0 0.0
        %395 = vmatpush1.xpose.msra.mxu0 0.0
        %396 = vmatprep.subr.mxu0 0.0
        %397 = vmatpush1.xpose.msra.mxu0 0.0
        %398 = vmatprep.subr.mxu0 0.0
        %399 = vmatpush1.xpose.msra.mxu0 0.0
        %400 = vmatprep.subr.mxu0 0.0
        %401 = vmatpush1.xpose.msra.mxu0 0.0
        %402 = vmatprep.subr.mxu0 0.0
        %403 = vmatpush1.xpose.msra.mxu0 0.0
        %404 = vmatprep.mubr.f32.mxu0 0.0
        %405 = vmatmul.mubr.f32.gmra.mrb[0].mxu0 %v290
        %v406 = vpop.f32.mrb[0].mxu0
        %v407 = vadd.f32 0.0, %v406
        %v408 = vpop.f32.mrb[0].mxu0
        %409 = vdwg.mxu0
        %v411 = vsel %vm288, %v178, 0
        %v414 = vsel %vm288, %v179, 0
        %v417 = vsel %vm288, %v180, 0
        %v420 = vsel %vm288, %v181, 0
        %v423 = vsel %vm288, %v182, 0
        %v426 = vsel %vm288, %v183, 0
        %v429 = vsel %vm288, %v184, 0
        %v432 = vsel %vm288, %v185, 0
        %v435 = vsel %vm288, %v186, 0
        %v438 = vsel %vm288, %v187, 0
        %v441 = vsel %vm288, %v188, 0
        %v444 = vsel %vm288, %v189, 0
        %v447 = vsel %vm288, %v190, 0
        %v450 = vsel %vm288, %v191, 0
        %v453 = vsel %vm288, %v192, 0
        %v456 = vsel %vm288, %v193, 0
        %458 = vmatprep.subr.mxu0 0.0
        %459 = vmatpush1.xpose.msra.mxu0 %v411
        %460 = vmatprep.subr.mxu0 0.0
        %461 = vmatpush1.xpose.msra.mxu0 %v414
        %462 = vmatprep.subr.mxu0 0.0
        %463 = vmatpush1.xpose.msra.mxu0 %v417
        %464 = vmatprep.subr.mxu0 0.0
        %465 = vmatpush1.xpose.msra.mxu0 %v420
        %466 = vmatprep.subr.mxu0 0.0
        %467 = vmatpush1.xpose.msra.mxu0 %v423
        %468 = vmatprep.subr.mxu0 0.0
        %469 = vmatpush1.xpose.msra.mxu0 %v426
        %470 = vmatprep.subr.mxu0 0.0
        %471 = vmatpush1.xpose.msra.mxu0 %v429
        %472 = vmatprep.subr.mxu0 0.0
        %473 = vmatpush1.xpose.msra.mxu0 %v432
        %474 = vmatprep.subr.mxu0 0.0
        %475 = vmatpush1.xpose.msra.mxu0 %v435
        %476 = vmatprep.subr.mxu0 0.0
        %477 = vmatpush1.xpose.msra.mxu0 %v438
        %478 = vmatprep.subr.mxu0 0.0
        %479 = vmatpush1.xpose.msra.mxu0 %v441
        %480 = vmatprep.subr.mxu0 0.0
        %481 = vmatpush1.xpose.msra.mxu0 %v444
        %482 = vmatprep.subr.mxu0 0.0
        %483 = vmatpush1.xpose.msra.mxu0 %v447
        %484 = vmatprep.subr.mxu0 0.0
        %485 = vmatpush1.xpose.msra.mxu0 %v450
        %486 = vmatprep.subr.mxu0 0.0
        %487 = vmatpush1.xpose.msra.mxu0 %v453
        %488 = vmatprep.subr.mxu0 0.0
        %489 = vmatpush1.xpose.msra.mxu0 %v456
        %490 = vmatprep.subr.mxu0 0.0
        %491 = vmatpush1.xpose.msra.mxu0 0.0
        %492 = vmatprep.subr.mxu0 0.0
        %493 = vmatpush1.xpose.msra.mxu0 0.0
        %494 = vmatprep.subr.mxu0 0.0
        %495 = vmatpush1.xpose.msra.mxu0 0.0
        %496 = vmatprep.subr.mxu0 0.0
        %497 = vmatpush1.xpose.msra.mxu0 0.0
        %498 = vmatprep.subr.mxu0 0.0
        %499 = vmatpush1.xpose.msra.mxu0 0.0
        %500 = vmatprep.subr.mxu0 0.0
        %501 = vmatpush1.xpose.msra.mxu0 0.0
        %502 = vmatprep.subr.mxu0 0.0
        %503 = vmatpush1.xpose.msra.mxu0 0.0
        %504 = vmatprep.subr.mxu0 0.0
        %505 = vmatpush1.xpose.msra.mxu0 0.0
        %506 = vmatprep.subr.mxu0 0.0
        %507 = vmatpush1.xpose.msra.mxu0 0.0
        %508 = vmatprep.subr.mxu0 0.0
        %509 = vmatpush1.xpose.msra.mxu0 0.0
        %510 = vmatprep.subr.mxu0 0.0
        %511 = vmatpush1.xpose.msra.mxu0 0.0
        %512 = vmatprep.subr.mxu0 0.0
        %513 = vmatpush1.xpose.msra.mxu0 0.0
        %514 = vmatprep.subr.mxu0 0.0
        %515 = vmatpush1.xpose.msra.mxu0 0.0
        %516 = vmatprep.subr.mxu0 0.0
        %517 = vmatpush1.xpose.msra.mxu0 0.0
        %518 = vmatprep.subr.mxu0 0.0
        %519 = vmatpush1.xpose.msra.mxu0 0.0
        %520 = vmatprep.subr.mxu0 0.0
        %521 = vmatpush1.xpose.msra.mxu0 0.0
        %522 = vmatprep.mubr.f32.mxu0 0.0
        %523 = vmatmul.mubr.f32.gmra.mrb[0].mxu0 %v290
        %v524 = vpop.f32.mrb[0].mxu0
        %v525 = vadd.f32 0.0, %v524
        %v526 = vpop.f32.mrb[0].mxu0
        %527 = vdwg.mxu0
        %v529 = vcombine.high %v407, %v407
        %v531 = vunpack.c.l.s4 1966171168
        %v532 = vunpack.c.0.s8 %v531
        %v533 = vlaneseq
        %v534 = vshrl.u32 %v533, 7
        %v535 = vsub.s32 %v532, %v534
        %v536 = vrot.slane %v407, %v535
        %v538 = vunpack.c.l.s4 1966171168
        %v539 = vunpack.c.0.s8 %v538
        %v540 = vlaneseq
        %v541 = vshrl.u32 %v540, 7
        %v542 = vsub.s32 %v539, %v541
        %v543 = vrot.slane %v529, %v542
        %v544 = vcombine.high %v536, %v536
        %v545 = vcombine.high %v543, %v543
        %v547 = vunpack.c.l.s4 1966171168
        %v548 = vunpack.c.0.s8 %v547
        %v549 = vlaneseq
        %v550 = vshrl.u32 %v549, 7
        %v551 = vsub.s32 %v548, %v550
        %v552 = vrot.slane %v536, %v551
        %v554 = vunpack.c.l.s4 1966171168
        %v555 = vunpack.c.0.s8 %v554
        %v556 = vlaneseq
        %v557 = vshrl.u32 %v556, 7
        %v558 = vsub.s32 %v555, %v557
        %v559 = vrot.slane %v543, %v558
        %v561 = vunpack.c.l.s4 1966171168
        %v562 = vunpack.c.0.s8 %v561
        %v563 = vlaneseq
        %v564 = vshrl.u32 %v563, 7
        %v565 = vsub.s32 %v562, %v564
        %v566 = vrot.slane %v544, %v565
        %v568 = vunpack.c.l.s4 1966171168
        %v569 = vunpack.c.0.s8 %v568
        %v570 = vlaneseq
        %v571 = vshrl.u32 %v570, 7
        %v572 = vsub.s32 %v569, %v571
        %v573 = vrot.slane %v545, %v572
        %v574 = vcombine.high %v552, %v552
        %v575 = vcombine.high %v559, %v559
        %v576 = vcombine.high %v566, %v566
        %v577 = vcombine.high %v573, %v573
        %v578 = vlaneseq
        %v579 = vshrl.u32 %v578, 7
        %v580 = vsub.s32 0, %v579
        %v581 = vrot.slane %v552, %v580
        %v582 = vlaneseq
        %v583 = vshrl.u32 %v582, 7
        %v584 = vsub.s32 0, %v583
        %v585 = vrot.slane %v566, %v584
        %v586 = vlaneseq
        %v587 = vshrl.u32 %v586, 7
        %v588 = vsub.s32 0, %v587
        %v589 = vrot.slane %v574, %v588
        %v590 = vlaneseq
        %v591 = vshrl.u32 %v590, 7
        %v592 = vsub.s32 0, %v591
        %v593 = vrot.slane %v576, %v592
        %v594 = vlaneseq
        %v595 = vshrl.u32 %v594, 7
        %v596 = vsub.s32 0, %v595
        %v597 = vrot.slane %v559, %v596
        %v598 = vlaneseq
        %v599 = vshrl.u32 %v598, 7
        %v600 = vsub.s32 0, %v599
        %v601 = vrot.slane %v573, %v600
        %v602 = vlaneseq
        %v603 = vshrl.u32 %v602, 7
        %v604 = vsub.s32 0, %v603
        %v605 = vrot.slane %v575, %v604
        %v606 = vlaneseq
        %v607 = vshrl.u32 %v606, 7
        %v608 = vsub.s32 0, %v607
        %v609 = vrot.slane %v577, %v608
        %v618 = vmul.f32 %v581, %v283
        %v619 = vmul.f32 %v581, %v284
        %v620 = vmul.f32 %v585, %v283
        %v621 = vmul.f32 %v585, %v284
        %v622 = vmul.f32 %v589, %v283
        %v623 = vmul.f32 %v589, %v284
        %v624 = vmul.f32 %v593, %v283
        %v625 = vmul.f32 %v593, %v284
        %v626 = vmul.f32 %v597, %v283
        %v627 = vmul.f32 %v597, %v284
        %v628 = vmul.f32 %v601, %v283
        %v629 = vmul.f32 %v601, %v284
        %v630 = vmul.f32 %v605, %v283
        %v631 = vmul.f32 %v605, %v284
        %v632 = vmul.f32 %v609, %v283
        %v633 = vmul.f32 %v609, %v284
        %634 = vmatprep.subr.mxu0 0.0
        %635 = vmatpush1.msra.mxu0 %v262
        %636 = vmatprep.subr.mxu0 0.0
        %637 = vmatpush1.msra.mxu0 %v263
        %638 = vmatprep.subr.mxu0 0.0
        %639 = vmatpush1.msra.mxu0 %v264
        %640 = vmatprep.subr.mxu0 0.0
        %641 = vmatpush1.msra.mxu0 %v265
        %642 = vmatprep.subr.mxu0 0.0
        %643 = vmatpush1.msra.mxu0 %v266
        %644 = vmatprep.subr.mxu0 0.0
        %645 = vmatpush1.msra.mxu0 %v267
        %646 = vmatprep.subr.mxu0 0.0
        %647 = vmatpush1.msra.mxu0 %v268
        %648 = vmatprep.subr.mxu0 0.0
        %649 = vmatpush1.msra.mxu0 %v269
        %650 = vmatprep.subr.mxu0 0.0
        %651 = vmatpush1.msra.mxu0 %v270
        %652 = vmatprep.subr.mxu0 0.0
        %653 = vmatpush1.msra.mxu0 %v271
        %654 = vmatprep.subr.mxu0 0.0
        %655 = vmatpush1.msra.mxu0 %v272
        %656 = vmatprep.subr.mxu0 0.0
        %657 = vmatpush1.msra.mxu0 %v273
        %658 = vmatprep.subr.mxu0 0.0
        %659 = vmatpush1.msra.mxu0 %v274
        %660 = vmatprep.subr.mxu0 0.0
        %661 = vmatpush1.msra.mxu0 %v275
        %662 = vmatprep.subr.mxu0 0.0
        %663 = vmatpush1.msra.mxu0 %v276
        %664 = vmatprep.subr.mxu0 0.0
        %665 = vmatpush1.msra.mxu0 %v277
        %666 = vmatprep.subr.mxu0 0.0
        %667 = vmatpush1.msra.mxu0 0.0
        %668 = vmatprep.subr.mxu0 0.0
        %669 = vmatpush1.msra.mxu0 0.0
        %670 = vmatprep.subr.mxu0 0.0
        %671 = vmatpush1.msra.mxu0 0.0
        %672 = vmatprep.subr.mxu0 0.0
        %673 = vmatpush1.msra.mxu0 0.0
        %674 = vmatprep.subr.mxu0 0.0
        %675 = vmatpush1.msra.mxu0 0.0
        %676 = vmatprep.subr.mxu0 0.0
        %677 = vmatpush1.msra.mxu0 0.0
        %678 = vmatprep.subr.mxu0 0.0
        %679 = vmatpush1.msra.mxu0 0.0
        %680 = vmatprep.subr.mxu0 0.0
        %681 = vmatpush1.msra.mxu0 0.0
        %682 = vmatprep.subr.mxu0 0.0
        %683 = vmatpush1.msra.mxu0 0.0
        %684 = vmatprep.subr.mxu0 0.0
        %685 = vmatpush1.msra.mxu0 0.0
        %686 = vmatprep.subr.mxu0 0.0
        %687 = vmatpush1.msra.mxu0 0.0
        %688 = vmatprep.subr.mxu0 0.0
        %689 = vmatpush1.msra.mxu0 0.0
        %690 = vmatprep.subr.mxu0 0.0
        %691 = vmatpush1.msra.mxu0 0.0
        %692 = vmatprep.subr.mxu0 0.0
        %693 = vmatpush1.msra.mxu0 0.0
        %694 = vmatprep.subr.mxu0 0.0
        %695 = vmatpush1.msra.mxu0 0.0
        %696 = vmatprep.subr.mxu0 0.0
        %697 = vmatpush1.msra.mxu0 0.0
        %698 = vmatprep.mubr.f32.mxu0 0.0
        %699 = vmatmul.mubr.f32.gmra.mrb[0].mxu0 %v618
        %v700 = vpop.f32.mrb[0].mxu0
        %v701 = vadd.f32 0.0, %v700
        %v702 = vpop.f32.mrb[0].mxu0
        %703 = vmatprep.mubr.f32.mxu0 0.0
        %704 = vmatmul.mubr.f32.gmra.mrb[0].mxu0 %v619
        %v705 = vpop.f32.mrb[0].mxu0
        %v706 = vadd.f32 0.0, %v705
        %v707 = vpop.f32.mrb[0].mxu0
        %708 = vmatprep.mubr.f32.mxu0 0.0
        %709 = vmatmul.mubr.f32.gmra.mrb[0].mxu0 %v620
        %v710 = vpop.f32.mrb[0].mxu0
        %v711 = vadd.f32 0.0, %v710
        %v712 = vpop.f32.mrb[0].mxu0
        %713 = vmatprep.mubr.f32.mxu0 0.0
        %714 = vmatmul.mubr.f32.gmra.mrb[0].mxu0 %v621
        %v715 = vpop.f32.mrb[0].mxu0
        %v716 = vadd.f32 0.0, %v715
        %v717 = vpop.f32.mrb[0].mxu0
        %718 = vmatprep.mubr.f32.mxu0 0.0
        %719 = vmatmul.mubr.f32.gmra.mrb[0].mxu0 %v622
        %v720 = vpop.f32.mrb[0].mxu0
        %v721 = vadd.f32 0.0, %v720
        %v722 = vpop.f32.mrb[0].mxu0
        %723 = vmatprep.mubr.f32.mxu0 0.0
        %724 = vmatmul.mubr.f32.gmra.mrb[0].mxu0 %v623
        %v725 = vpop.f32.mrb[0].mxu0
        %v726 = vadd.f32 0.0, %v725
        %v727 = vpop.f32.mrb[0].mxu0
        %728 = vmatprep.mubr.f32.mxu0 0.0
        %729 = vmatmul.mubr.f32.gmra.mrb[0].mxu0 %v624
        %v730 = vpop.f32.mrb[0].mxu0
        %v731 = vadd.f32 0.0, %v730
        %v732 = vpop.f32.mrb[0].mxu0
        %733 = vmatprep.mubr.f32.mxu0 0.0
        %734 = vmatmul.mubr.f32.gmra.mrb[0].mxu0 %v625
        %v735 = vpop.f32.mrb[0].mxu0
        %v736 = vadd.f32 0.0, %v735
        %v737 = vpop.f32.mrb[0].mxu0
        %738 = vmatprep.mubr.f32.mxu0 0.0
        %739 = vmatmul.mubr.f32.gmra.mrb[0].mxu0 %v626
        %v740 = vpop.f32.mrb[0].mxu0
        %v741 = vadd.f32 0.0, %v740
        %v742 = vpop.f32.mrb[0].mxu0
        %743 = vmatprep.mubr.f32.mxu0 0.0
        %744 = vmatmul.mubr.f32.gmra.mrb[0].mxu0 %v627
        %v745 = vpop.f32.mrb[0].mxu0
        %v746 = vadd.f32 0.0, %v745
        %v747 = vpop.f32.mrb[0].mxu0
        %748 = vmatprep.mubr.f32.mxu0 0.0
        %749 = vmatmul.mubr.f32.gmra.mrb[0].mxu0 %v628
        %v750 = vpop.f32.mrb[0].mxu0
        %v751 = vadd.f32 0.0, %v750
        %v752 = vpop.f32.mrb[0].mxu0
        %753 = vmatprep.mubr.f32.mxu0 0.0
        %754 = vmatmul.mubr.f32.gmra.mrb[0].mxu0 %v629
        %v755 = vpop.f32.mrb[0].mxu0
        %v756 = vadd.f32 0.0, %v755
        %v757 = vpop.f32.mrb[0].mxu0
        %758 = vmatprep.mubr.f32.mxu0 0.0
        %759 = vmatmul.mubr.f32.gmra.mrb[0].mxu0 %v630
        %v760 = vpop.f32.mrb[0].mxu0
        %v761 = vadd.f32 0.0, %v760
        %v762 = vpop.f32.mrb[0].mxu0
        %763 = vmatprep.mubr.f32.mxu0 0.0
        %764 = vmatmul.mubr.f32.gmra.mrb[0].mxu0 %v631
        %v765 = vpop.f32.mrb[0].mxu0
        %v766 = vadd.f32 0.0, %v765
        %v767 = vpop.f32.mrb[0].mxu0
        %768 = vmatprep.mubr.f32.mxu0 0.0
        %769 = vmatmul.mubr.f32.gmra.mrb[0].mxu0 %v632
        %v770 = vpop.f32.mrb[0].mxu0
        %v771 = vadd.f32 0.0, %v770
        %v772 = vpop.f32.mrb[0].mxu0
        %773 = vmatprep.mubr.f32.mxu0 0.0
        %774 = vmatmul.mubr.f32.gmra.mrb[0].mxu0 %v633
        %v775 = vpop.f32.mrb[0].mxu0
        %v776 = vadd.f32 0.0, %v775
        %v777 = vpop.f32.mrb[0].mxu0
        %778 = vdwg.mxu0
        %v779 = vmul.f32 %v701, %v283
        %v780 = vmul.f32 %v706, %v284
        %v781 = vmul.f32 %v711, %v283
        %v782 = vmul.f32 %v716, %v284
        %v783 = vmul.f32 %v721, %v283
        %v784 = vmul.f32 %v726, %v284
        %v785 = vmul.f32 %v731, %v283
        %v786 = vmul.f32 %v736, %v284
        %v787 = vmul.f32 %v741, %v283
        %v788 = vmul.f32 %v746, %v284
        %v789 = vmul.f32 %v751, %v283
        %v790 = vmul.f32 %v756, %v284
        %v791 = vmul.f32 %v761, %v283
        %v792 = vmul.f32 %v766, %v284
        %v793 = vmul.f32 %v771, %v283
        %v794 = vmul.f32 %v776, %v284
        %v795 = vadd.f32 %v779, %v780
        %v796 = vrot.slane %v795, 4
        %v797 = vadd.f32 %v795, %v796
        %v798 = vrot.slane %v797, 2
        %v799 = vadd.f32 %v797, %v798
        %v800 = vrot.slane %v799, 1
        %v801 = vadd.f32 %v799, %v800
        %v802 = vadd.f32 %v781, %v782
        %v803 = vrot.slane %v802, 4
        %v804 = vadd.f32 %v802, %v803
        %v805 = vrot.slane %v804, 2
        %v806 = vadd.f32 %v804, %v805
        %v807 = vrot.slane %v806, 1
        %v808 = vadd.f32 %v806, %v807
        %v809 = vadd.f32 %v783, %v784
        %v810 = vrot.slane %v809, 4
        %v811 = vadd.f32 %v809, %v810
        %v812 = vrot.slane %v811, 2
        %v813 = vadd.f32 %v811, %v812
        %v814 = vrot.slane %v813, 1
        %v815 = vadd.f32 %v813, %v814
        %v816 = vadd.f32 %v785, %v786
        %v817 = vrot.slane %v816, 4
        %v818 = vadd.f32 %v816, %v817
        %v819 = vrot.slane %v818, 2
        %v820 = vadd.f32 %v818, %v819
        %v821 = vrot.slane %v820, 1
        %v822 = vadd.f32 %v820, %v821
        %v823 = vadd.f32 %v787, %v788
        %v824 = vrot.slane %v823, 4
        %v825 = vadd.f32 %v823, %v824
        %v826 = vrot.slane %v825, 2
        %v827 = vadd.f32 %v825, %v826
        %v828 = vrot.slane %v827, 1
        %v829 = vadd.f32 %v827, %v828
        %v830 = vadd.f32 %v789, %v790
        %v831 = vrot.slane %v830, 4
        %v832 = vadd.f32 %v830, %v831
        %v833 = vrot.slane %v832, 2
        %v834 = vadd.f32 %v832, %v833
        %v835 = vrot.slane %v834, 1
        %v836 = vadd.f32 %v834, %v835
        %v837 = vadd.f32 %v791, %v792
        %v838 = vrot.slane %v837, 4
        %v839 = vadd.f32 %v837, %v838
        %v840 = vrot.slane %v839, 2
        %v841 = vadd.f32 %v839, %v840
        %v842 = vrot.slane %v841, 1
        %v843 = vadd.f32 %v841, %v842
        %v844 = vadd.f32 %v793, %v794
        %v845 = vrot.slane %v844, 4
        %v846 = vadd.f32 %v844, %v845
        %v847 = vrot.slane %v846, 2
        %v848 = vadd.f32 %v846, %v847
        %v849 = vrot.slane %v848, 1
        %v850 = vadd.f32 %v848, %v849
        %vm851 = vcmp.gt.f32.partialorder %v701, %v801
        %vm852 = vcmp.gt.f32.partialorder %v706, %v801
        %vm853 = vcmp.gt.f32.partialorder %v711, %v808
        %vm854 = vcmp.gt.f32.partialorder %v716, %v808
        %vm855 = vcmp.gt.f32.partialorder %v721, %v815
        %vm856 = vcmp.gt.f32.partialorder %v726, %v815
        %vm857 = vcmp.gt.f32.partialorder %v731, %v822
        %vm858 = vcmp.gt.f32.partialorder %v736, %v822
        %vm859 = vcmp.gt.f32.partialorder %v741, %v829
        %vm860 = vcmp.gt.f32.partialorder %v746, %v829
        %vm861 = vcmp.gt.f32.partialorder %v751, %v836
        %vm862 = vcmp.gt.f32.partialorder %v756, %v836
        %vm863 = vcmp.gt.f32.partialorder %v761, %v843
        %vm864 = vcmp.gt.f32.partialorder %v766, %v843
        %vm865 = vcmp.gt.f32.partialorder %v771, %v850
        %vm866 = vcmp.gt.f32.partialorder %v776, %v850
        %vm867 = vcmp.eq.f32.partialorder %v701, %v801
        %vm868 = vcmp.eq.f32.partialorder %v706, %v801
        %vm869 = vcmp.eq.f32.partialorder %v711, %v808
        %vm870 = vcmp.eq.f32.partialorder %v716, %v808
        %vm871 = vcmp.eq.f32.partialorder %v721, %v815
        %vm872 = vcmp.eq.f32.partialorder %v726, %v815
        %vm873 = vcmp.eq.f32.partialorder %v731, %v822
        %vm874 = vcmp.eq.f32.partialorder %v736, %v822
        %vm875 = vcmp.eq.f32.partialorder %v741, %v829
        %vm876 = vcmp.eq.f32.partialorder %v746, %v829
        %vm877 = vcmp.eq.f32.partialorder %v751, %v836
        %vm878 = vcmp.eq.f32.partialorder %v756, %v836
        %vm879 = vcmp.eq.f32.partialorder %v761, %v843
        %vm880 = vcmp.eq.f32.partialorder %v766, %v843
        %vm881 = vcmp.eq.f32.partialorder %v771, %v850
        %vm882 = vcmp.eq.f32.partialorder %v776, %v850
        %vm883 = vcmp.lt.s32.totalorder %v195, %v278
        %vm884 = vcmp.lt.s32.totalorder %v196, %v278
        %v885 = vsel %vm883, 1, 0
        %v886 = vsel %vm884, 1, 0
        %vm887 = vcmp.eq.s32.totalorder %v885, 1
        %vm888 = vcmp.eq.s32.totalorder %v886, 1
        %vm889 = vmand %vm867, %vm887
        %vm890 = vmand %vm868, %vm888
        %vm891 = vmand %vm869, %vm887
        %vm892 = vmand %vm870, %vm888
        %vm893 = vmand %vm871, %vm887
        %vm894 = vmand %vm872, %vm888
        %vm895 = vmand %vm873, %vm887
        %vm896 = vmand %vm874, %vm888
        %vm897 = vmand %vm875, %vm887
        %vm898 = vmand %vm876, %vm888
        %vm899 = vmand %vm877, %vm887
        %vm900 = vmand %vm878, %vm888
        %vm901 = vmand %vm879, %vm887
        %vm902 = vmand %vm880, %vm888
        %vm903 = vmand %vm881, %vm887
        %vm904 = vmand %vm882, %vm888
        %vm905 = vmor %vm851, %vm889
        %vm906 = vmor %vm852, %vm890
        %vm907 = vmor %vm853, %vm891
        %vm908 = vmor %vm854, %vm892
        %vm909 = vmor %vm855, %vm893
        %vm910 = vmor %vm856, %vm894
        %vm911 = vmor %vm857, %vm895
        %vm912 = vmor %vm858, %vm896
        %vm913 = vmor %vm859, %vm897
        %vm914 = vmor %vm860, %vm898
        %vm915 = vmor %vm861, %vm899
        %vm916 = vmor %vm862, %vm900
        %vm917 = vmor %vm863, %vm901
        %vm918 = vmor %vm864, %vm902
        %vm919 = vmor %vm865, %vm903
        %vm920 = vmor %vm866, %vm904
        %v921 = vsel %vm905, 1, 0
        %v922 = vsel %vm906, 1, 0
        %v923 = vsel %vm907, 1, 0
        %v924 = vsel %vm908, 1, 0
        %v925 = vsel %vm909, 1, 0
        %v926 = vsel %vm910, 1, 0
        %v927 = vsel %vm911, 1, 0
        %v928 = vsel %vm912, 1, 0
        %v929 = vsel %vm913, 1, 0
        %v930 = vsel %vm914, 1, 0
        %v931 = vsel %vm915, 1, 0
        %v932 = vsel %vm916, 1, 0
        %v933 = vsel %vm917, 1, 0
        %v934 = vsel %vm918, 1, 0
        %v935 = vsel %vm919, 1, 0
        %v936 = vsel %vm920, 1, 0
        %v937 = vadd.s32 %v921, %v922
        %v938 = vrot.slane %v937, 4
        %v939 = vadd.s32 %v937, %v938
        %v940 = vrot.slane %v939, 2
        %v941 = vadd.s32 %v939, %v940
        %v942 = vrot.slane %v941, 1
        %v943 = vadd.s32 %v941, %v942
        %v944 = vadd.s32 %v923, %v924
        %v945 = vrot.slane %v944, 4
        %v946 = vadd.s32 %v944, %v945
        %v947 = vrot.slane %v946, 2
        %v948 = vadd.s32 %v946, %v947
        %v949 = vrot.slane %v948, 1
        %v950 = vadd.s32 %v948, %v949
        %v951 = vadd.s32 %v925, %v926
        %v952 = vrot.slane %v951, 4
        %v953 = vadd.s32 %v951, %v952
        %v954 = vrot.slane %v953, 2
        %v955 = vadd.s32 %v953, %v954
        %v956 = vrot.slane %v955, 1
        %v957 = vadd.s32 %v955, %v956
        %v958 = vadd.s32 %v927, %v928
        %v959 = vrot.slane %v958, 4
        %v960 = vadd.s32 %v958, %v959
        %v961 = vrot.slane %v960, 2
        %v962 = vadd.s32 %v960, %v961
        %v963 = vrot.slane %v962, 1
        %v964 = vadd.s32 %v962, %v963
        %v965 = vadd.s32 %v929, %v930
        %v966 = vrot.slane %v965, 4
        %v967 = vadd.s32 %v965, %v966
        %v968 = vrot.slane %v967, 2
        %v969 = vadd.s32 %v967, %v968
        %v970 = vrot.slane %v969, 1
        %v971 = vadd.s32 %v969, %v970
        %v972 = vadd.s32 %v931, %v932
        %v973 = vrot.slane %v972, 4
        %v974 = vadd.s32 %v972, %v973
        %v975 = vrot.slane %v974, 2
        %v976 = vadd.s32 %v974, %v975
        %v977 = vrot.slane %v976, 1
        %v978 = vadd.s32 %v976, %v977
        %v979 = vadd.s32 %v933, %v934
        %v980 = vrot.slane %v979, 4
        %v981 = vadd.s32 %v979, %v980
        %v982 = vrot.slane %v981, 2
        %v983 = vadd.s32 %v981, %v982
        %v984 = vrot.slane %v983, 1
        %v985 = vadd.s32 %v983, %v984
        %v986 = vadd.s32 %v935, %v936
        %v987 = vrot.slane %v986, 4
        %v988 = vadd.s32 %v986, %v987
        %v989 = vrot.slane %v988, 2
        %v990 = vadd.s32 %v988, %v989
        %v991 = vrot.slane %v990, 1
        %v992 = vadd.s32 %v990, %v991
        %vm993 = vcmp.eq.s32.totalorder %v943, %v195
        %vm994 = vcmp.eq.s32.totalorder %v943, %v196
        %vm995 = vcmp.eq.s32.totalorder %v950, %v195
        %vm996 = vcmp.eq.s32.totalorder %v950, %v196
        %vm997 = vcmp.eq.s32.totalorder %v957, %v195
        %vm998 = vcmp.eq.s32.totalorder %v957, %v196
        %vm999 = vcmp.eq.s32.totalorder %v964, %v195
        %vm1000 = vcmp.eq.s32.totalorder %v964, %v196
        %vm1001 = vcmp.eq.s32.totalorder %v971, %v195
        %vm1002 = vcmp.eq.s32.totalorder %v971, %v196
        %vm1003 = vcmp.eq.s32.totalorder %v978, %v195
        %vm1004 = vcmp.eq.s32.totalorder %v978, %v196
        %vm1005 = vcmp.eq.s32.totalorder %v985, %v195
        %vm1006 = vcmp.eq.s32.totalorder %v985, %v196
        %vm1007 = vcmp.eq.s32.totalorder %v992, %v195
        %vm1008 = vcmp.eq.s32.totalorder %v992, %v196
        %v1009 = vsel %vm993, %v581, 0.0
        %v1010 = vsel %vm994, %v581, 0.0
        %v1011 = vsel %vm995, %v585, 0.0
        %v1012 = vsel %vm996, %v585, 0.0
        %v1013 = vsel %vm997, %v589, 0.0
        %v1014 = vsel %vm998, %v589, 0.0
        %v1015 = vsel %vm999, %v593, 0.0
        %v1016 = vsel %vm1000, %v593, 0.0
        %v1017 = vsel %vm1001, %v597, 0.0
        %v1018 = vsel %vm1002, %v597, 0.0
        %v1019 = vsel %vm1003, %v601, 0.0
        %v1020 = vsel %vm1004, %v601, 0.0
        %v1021 = vsel %vm1005, %v605, 0.0
        %v1022 = vsel %vm1006, %v605, 0.0
        %v1023 = vsel %vm1007, %v609, 0.0
        %v1024 = vsel %vm1008, %v609, 0.0
        %1025 = vmatprep.subr.mxu0 0.0
        %1026 = vmatpush1.msra.mxu0 %v262
        %1027 = vmatprep.subr.mxu0 0.0
        %1028 = vmatpush1.msra.mxu0 %v263
        %1029 = vmatprep.subr.mxu0 0.0
        %1030 = vmatpush1.msra.mxu0 %v264
        %1031 = vmatprep.subr.mxu0 0.0
        %1032 = vmatpush1.msra.mxu0 %v265
        %1033 = vmatprep.subr.mxu0 0.0
        %1034 = vmatpush1.msra.mxu0 %v266
        %1035 = vmatprep.subr.mxu0 0.0
        %1036 = vmatpush1.msra.mxu0 %v267
        %1037 = vmatprep.subr.mxu0 0.0
        %1038 = vmatpush1.msra.mxu0 %v268
        %1039 = vmatprep.subr.mxu0 0.0
        %1040 = vmatpush1.msra.mxu0 %v269
        %1041 = vmatprep.subr.mxu0 0.0
        %1042 = vmatpush1.msra.mxu0 %v270
        %1043 = vmatprep.subr.mxu0 0.0
        %1044 = vmatpush1.msra.mxu0 %v271
        %1045 = vmatprep.subr.mxu0 0.0
        %1046 = vmatpush1.msra.mxu0 %v272
        %1047 = vmatprep.subr.mxu0 0.0
        %1048 = vmatpush1.msra.mxu0 %v273
        %1049 = vmatprep.subr.mxu0 0.0
        %1050 = vmatpush1.msra.mxu0 %v274
        %1051 = vmatprep.subr.mxu0 0.0
        %1052 = vmatpush1.msra.mxu0 %v275
        %1053 = vmatprep.subr.mxu0 0.0
        %1054 = vmatpush1.msra.mxu0 %v276
        %1055 = vmatprep.subr.mxu0 0.0
        %1056 = vmatpush1.msra.mxu0 %v277
        %1057 = vmatprep.subr.mxu0 0.0
        %1058 = vmatpush1.msra.mxu0 0.0
        %1059 = vmatprep.subr.mxu0 0.0
        %1060 = vmatpush1.msra.mxu0 0.0
        %1061 = vmatprep.subr.mxu0 0.0
        %1062 = vmatpush1.msra.mxu0 0.0
        %1063 = vmatprep.subr.mxu0 0.0
        %1064 = vmatpush1.msra.mxu0 0.0
        %1065 = vmatprep.subr.mxu0 0.0
        %1066 = vmatpush1.msra.mxu0 0.0
        %1067 = vmatprep.subr.mxu0 0.0
        %1068 = vmatpush1.msra.mxu0 0.0
        %1069 = vmatprep.subr.mxu0 0.0
        %1070 = vmatpush1.msra.mxu0 0.0
        %1071 = vmatprep.subr.mxu0 0.0
        %1072 = vmatpush1.msra.mxu0 0.0
        %1073 = vmatprep.subr.mxu0 0.0
        %1074 = vmatpush1.msra.mxu0 0.0
        %1075 = vmatprep.subr.mxu0 0.0
        %1076 = vmatpush1.msra.mxu0 0.0
        %1077 = vmatprep.subr.mxu0 0.0
        %1078 = vmatpush1.msra.mxu0 0.0
        %1079 = vmatprep.subr.mxu0 0.0
        %1080 = vmatpush1.msra.mxu0 0.0
        %1081 = vmatprep.subr.mxu0 0.0
        %1082 = vmatpush1.msra.mxu0 0.0
        %1083 = vmatprep.subr.mxu0 0.0
        %1084 = vmatpush1.msra.mxu0 0.0
        %1085 = vmatprep.subr.mxu0 0.0
        %1086 = vmatpush1.msra.mxu0 0.0
        %1087 = vmatprep.subr.mxu0 0.0
        %1088 = vmatpush1.msra.mxu0 0.0
        %1089 = vmatprep.mubr.f32.mxu0 0.0
        %1090 = vmatmul.mubr.f32.gmra.mrb[0].mxu0 %v1009
        %v1091 = vpop.f32.mrb[0].mxu0
        %v1092 = vadd.f32 0.0, %v1091
        %v1093 = vpop.f32.mrb[0].mxu0
        %1094 = vmatprep.mubr.f32.mxu0 0.0
        %1095 = vmatmul.mubr.f32.gmra.mrb[0].mxu0 %v1010
        %v1096 = vpop.f32.mrb[0].mxu0
        %v1097 = vadd.f32 0.0, %v1096
        %v1098 = vpop.f32.mrb[0].mxu0
        %1099 = vmatprep.mubr.f32.mxu0 0.0
        %1100 = vmatmul.mubr.f32.gmra.mrb[0].mxu0 %v1011
        %v1101 = vpop.f32.mrb[0].mxu0
        %v1102 = vadd.f32 0.0, %v1101
        %v1103 = vpop.f32.mrb[0].mxu0
        %1104 = vmatprep.mubr.f32.mxu0 0.0
        %1105 = vmatmul.mubr.f32.gmra.mrb[0].mxu0 %v1012
        %v1106 = vpop.f32.mrb[0].mxu0
        %v1107 = vadd.f32 0.0, %v1106
        %v1108 = vpop.f32.mrb[0].mxu0
        %1109 = vmatprep.mubr.f32.mxu0 0.0
        %1110 = vmatmul.mubr.f32.gmra.mrb[0].mxu0 %v1013
        %v1111 = vpop.f32.mrb[0].mxu0
        %v1112 = vadd.f32 0.0, %v1111
        %v1113 = vpop.f32.mrb[0].mxu0
        %1114 = vmatprep.mubr.f32.mxu0 0.0
        %1115 = vmatmul.mubr.f32.gmra.mrb[0].mxu0 %v1014
        %v1116 = vpop.f32.mrb[0].mxu0
        %v1117 = vadd.f32 0.0, %v1116
        %v1118 = vpop.f32.mrb[0].mxu0
        %1119 = vmatprep.mubr.f32.mxu0 0.0
        %1120 = vmatmul.mubr.f32.gmra.mrb[0].mxu0 %v1015
        %v1121 = vpop.f32.mrb[0].mxu0
        %v1122 = vadd.f32 0.0, %v1121
        %v1123 = vpop.f32.mrb[0].mxu0
        %1124 = vmatprep.mubr.f32.mxu0 0.0
        %1125 = vmatmul.mubr.f32.gmra.mrb[0].mxu0 %v1016
        %v1126 = vpop.f32.mrb[0].mxu0
        %v1127 = vadd.f32 0.0, %v1126
        %v1128 = vpop.f32.mrb[0].mxu0
        %1129 = vmatprep.mubr.f32.mxu0 0.0
        %1130 = vmatmul.mubr.f32.gmra.mrb[0].mxu0 %v1017
        %v1131 = vpop.f32.mrb[0].mxu0
        %v1132 = vadd.f32 0.0, %v1131
        %v1133 = vpop.f32.mrb[0].mxu0
        %1134 = vmatprep.mubr.f32.mxu0 0.0
        %1135 = vmatmul.mubr.f32.gmra.mrb[0].mxu0 %v1018
        %v1136 = vpop.f32.mrb[0].mxu0
        %v1137 = vadd.f32 0.0, %v1136
        %v1138 = vpop.f32.mrb[0].mxu0
        %1139 = vmatprep.mubr.f32.mxu0 0.0
        %1140 = vmatmul.mubr.f32.gmra.mrb[0].mxu0 %v1019
        %v1141 = vpop.f32.mrb[0].mxu0
        %v1142 = vadd.f32 0.0, %v1141
        %v1143 = vpop.f32.mrb[0].mxu0
        %1144 = vmatprep.mubr.f32.mxu0 0.0
        %1145 = vmatmul.mubr.f32.gmra.mrb[0].mxu0 %v1020
        %v1146 = vpop.f32.mrb[0].mxu0
        %v1147 = vadd.f32 0.0, %v1146
        %v1148 = vpop.f32.mrb[0].mxu0
        %1149 = vmatprep.mubr.f32.mxu0 0.0
        %1150 = vmatmul.mubr.f32.gmra.mrb[0].mxu0 %v1021
        %v1151 = vpop.f32.mrb[0].mxu0
        %v1152 = vadd.f32 0.0, %v1151
        %v1153 = vpop.f32.mrb[0].mxu0
        %1154 = vmatprep.mubr.f32.mxu0 0.0
        %1155 = vmatmul.mubr.f32.gmra.mrb[0].mxu0 %v1022
        %v1156 = vpop.f32.mrb[0].mxu0
        %v1157 = vadd.f32 0.0, %v1156
        %v1158 = vpop.f32.mrb[0].mxu0
        %1159 = vmatprep.mubr.f32.mxu0 0.0
        %1160 = vmatmul.mubr.f32.gmra.mrb[0].mxu0 %v1023
        %v1161 = vpop.f32.mrb[0].mxu0
        %v1162 = vadd.f32 0.0, %v1161
        %v1163 = vpop.f32.mrb[0].mxu0
        %1164 = vmatprep.mubr.f32.mxu0 0.0
        %1165 = vmatmul.mubr.f32.gmra.mrb[0].mxu0 %v1024
        %v1166 = vpop.f32.mrb[0].mxu0
        %v1167 = vadd.f32 0.0, %v1166
        %v1168 = vpop.f32.mrb[0].mxu0
        %1169 = vdwg.mxu0
        %v1170 = vsub.f32 %v581, %v1092
        %v1171 = vsub.f32 %v581, %v1097
        %v1172 = vsub.f32 %v585, %v1102
        %v1173 = vsub.f32 %v585, %v1107
        %v1174 = vsub.f32 %v589, %v1112
        %v1175 = vsub.f32 %v589, %v1117
        %v1176 = vsub.f32 %v593, %v1122
        %v1177 = vsub.f32 %v593, %v1127
        %v1178 = vsub.f32 %v597, %v1132
        %v1179 = vsub.f32 %v597, %v1137
        %v1180 = vsub.f32 %v601, %v1142
        %v1181 = vsub.f32 %v601, %v1147
        %v1182 = vsub.f32 %v605, %v1152
        %v1183 = vsub.f32 %v605, %v1157
        %v1184 = vsub.f32 %v609, %v1162
        %v1185 = vsub.f32 %v609, %v1167
        %v1186 = vmul.f32 %v1170, %v1170
        %v1187 = vmul.f32 %v1171, %v1171
        %v1188 = vmul.f32 %v1172, %v1172
        %v1189 = vmul.f32 %v1173, %v1173
        %v1190 = vmul.f32 %v1174, %v1174
        %v1191 = vmul.f32 %v1175, %v1175
        %v1192 = vmul.f32 %v1176, %v1176
        %v1193 = vmul.f32 %v1177, %v1177
        %v1194 = vmul.f32 %v1178, %v1178
        %v1195 = vmul.f32 %v1179, %v1179
        %v1196 = vmul.f32 %v1180, %v1180
        %v1197 = vmul.f32 %v1181, %v1181
        %v1198 = vmul.f32 %v1182, %v1182
        %v1199 = vmul.f32 %v1183, %v1183
        %v1200 = vmul.f32 %v1184, %v1184
        %v1201 = vmul.f32 %v1185, %v1185
        %v1202 = vmul.f32 %v1186, -1000.0
        %v1203 = vmul.f32 %v1187, -1000.0
        %v1204 = vmul.f32 %v1188, -1000.0
        %v1205 = vmul.f32 %v1189, -1000.0
        %v1206 = vmul.f32 %v1190, -1000.0
        %v1207 = vmul.f32 %v1191, -1000.0
        %v1208 = vmul.f32 %v1192, -1000.0
        %v1209 = vmul.f32 %v1193, -1000.0
        %v1210 = vmul.f32 %v1194, -1000.0
        %v1211 = vmul.f32 %v1195, -1000.0
        %v1212 = vmul.f32 %v1196, -1000.0
        %v1213 = vmul.f32 %v1197, -1000.0
        %v1214 = vmul.f32 %v1198, -1000.0
        %v1215 = vmul.f32 %v1199, -1000.0
        %v1216 = vmul.f32 %v1200, -1000.0
        %v1217 = vmul.f32 %v1201, -1000.0
        %v1218 = vmul.f32 %v1202, 1.442695
        %v1219 = vpow.pop %v1218
        %v1220 = vmul.f32 %v1203, 1.442695
        %v1221 = vpow.pop %v1220
        %v1222 = vmul.f32 %v1204, 1.442695
        %v1223 = vpow.pop %v1222
        %v1224 = vmul.f32 %v1205, 1.442695
        %v1225 = vpow.pop %v1224
        %v1226 = vmul.f32 %v1206, 1.442695
        %v1227 = vpow.pop %v1226
        %v1228 = vmul.f32 %v1207, 1.442695
        %v1229 = vpow.pop %v1228
        %v1230 = vmul.f32 %v1208, 1.442695
        %v1231 = vpow.pop %v1230
        %v1232 = vmul.f32 %v1209, 1.442695
        %v1233 = vpow.pop %v1232
        %v1234 = vmul.f32 %v1210, 1.442695
        %v1235 = vpow.pop %v1234
        %v1236 = vmul.f32 %v1211, 1.442695
        %v1237 = vpow.pop %v1236
        %v1238 = vmul.f32 %v1212, 1.442695
        %v1239 = vpow.pop %v1238
        %v1240 = vmul.f32 %v1213, 1.442695
        %v1241 = vpow.pop %v1240
        %v1242 = vmul.f32 %v1214, 1.442695
        %v1243 = vpow.pop %v1242
        %v1244 = vmul.f32 %v1215, 1.442695
        %v1245 = vpow.pop %v1244
        %v1246 = vmul.f32 %v1216, 1.442695
        %v1247 = vpow.pop %v1246
        %v1248 = vmul.f32 %v1217, 1.442695
        %v1249 = vpow.pop %v1248
        %1250 = vmatprep.subr.mxu0 0.0
        %1251 = vmatpush1.msra.mxu0 %v262
        %1252 = vmatprep.subr.mxu0 0.0
        %1253 = vmatpush1.msra.mxu0 %v263
        %1254 = vmatprep.subr.mxu0 0.0
        %1255 = vmatpush1.msra.mxu0 %v264
        %1256 = vmatprep.subr.mxu0 0.0
        %1257 = vmatpush1.msra.mxu0 %v265
        %1258 = vmatprep.subr.mxu0 0.0
        %1259 = vmatpush1.msra.mxu0 %v266
        %1260 = vmatprep.subr.mxu0 0.0
        %1261 = vmatpush1.msra.mxu0 %v267
        %1262 = vmatprep.subr.mxu0 0.0
        %1263 = vmatpush1.msra.mxu0 %v268
        %1264 = vmatprep.subr.mxu0 0.0
        %1265 = vmatpush1.msra.mxu0 %v269
        %1266 = vmatprep.subr.mxu0 0.0
        %1267 = vmatpush1.msra.mxu0 %v270
        %1268 = vmatprep.subr.mxu0 0.0
        %1269 = vmatpush1.msra.mxu0 %v271
        %1270 = vmatprep.subr.mxu0 0.0
        %1271 = vmatpush1.msra.mxu0 %v272
        %1272 = vmatprep.subr.mxu0 0.0
        %1273 = vmatpush1.msra.mxu0 %v273
        %1274 = vmatprep.subr.mxu0 0.0
        %1275 = vmatpush1.msra.mxu0 %v274
        %1276 = vmatprep.subr.mxu0 0.0
        %1277 = vmatpush1.msra.mxu0 %v275
        %1278 = vmatprep.subr.mxu0 0.0
        %1279 = vmatpush1.msra.mxu0 %v276
        %1280 = vmatprep.subr.mxu0 0.0
        %1281 = vmatpush1.msra.mxu0 %v277
        %1282 = vmatprep.subr.mxu0 0.0
        %1283 = vmatpush1.msra.mxu0 0.0
        %1284 = vmatprep.subr.mxu0 0.0
        %1285 = vmatpush1.msra.mxu0 0.0
        %1286 = vmatprep.subr.mxu0 0.0
        %1287 = vmatpush1.msra.mxu0 0.0
        %1288 = vmatprep.subr.mxu0 0.0
        %1289 = vmatpush1.msra.mxu0 0.0
        %1290 = vmatprep.subr.mxu0 0.0
        %1291 = vmatpush1.msra.mxu0 0.0
        %1292 = vmatprep.subr.mxu0 0.0
        %1293 = vmatpush1.msra.mxu0 0.0
        %1294 = vmatprep.subr.mxu0 0.0
        %1295 = vmatpush1.msra.mxu0 0.0
        %1296 = vmatprep.subr.mxu0 0.0
        %1297 = vmatpush1.msra.mxu0 0.0
        %1298 = vmatprep.subr.mxu0 0.0
        %1299 = vmatpush1.msra.mxu0 0.0
        %1300 = vmatprep.subr.mxu0 0.0
        %1301 = vmatpush1.msra.mxu0 0.0
        %1302 = vmatprep.subr.mxu0 0.0
        %1303 = vmatpush1.msra.mxu0 0.0
        %1304 = vmatprep.subr.mxu0 0.0
        %1305 = vmatpush1.msra.mxu0 0.0
        %1306 = vmatprep.subr.mxu0 0.0
        %1307 = vmatpush1.msra.mxu0 0.0
        %1308 = vmatprep.subr.mxu0 0.0
        %1309 = vmatpush1.msra.mxu0 0.0
        %1310 = vmatprep.subr.mxu0 0.0
        %1311 = vmatpush1.msra.mxu0 0.0
        %1312 = vmatprep.subr.mxu0 0.0
        %1313 = vmatpush1.msra.mxu0 0.0
        %1314 = vmatprep.mubr.f32.mxu0 0.0
        %1315 = vmatmul.mubr.f32.gmra.mrb[0].mxu0 %v1219
        %v1316 = vpop.f32.mrb[0].mxu0
        %v1317 = vadd.f32 0.0, %v1316
        %v1318 = vpop.f32.mrb[0].mxu0
        %1319 = vmatprep.mubr.f32.mxu0 0.0
        %1320 = vmatmul.mubr.f32.gmra.mrb[0].mxu0 %v1221
        %v1321 = vpop.f32.mrb[0].mxu0
        %v1322 = vadd.f32 0.0, %v1321
        %v1323 = vpop.f32.mrb[0].mxu0
        %1324 = vmatprep.mubr.f32.mxu0 0.0
        %1325 = vmatmul.mubr.f32.gmra.mrb[0].mxu0 %v1223
        %v1326 = vpop.f32.mrb[0].mxu0
        %v1327 = vadd.f32 0.0, %v1326
        %v1328 = vpop.f32.mrb[0].mxu0
        %1329 = vmatprep.mubr.f32.mxu0 0.0
        %1330 = vmatmul.mubr.f32.gmra.mrb[0].mxu0 %v1225
        %v1331 = vpop.f32.mrb[0].mxu0
        %v1332 = vadd.f32 0.0, %v1331
        %v1333 = vpop.f32.mrb[0].mxu0
        %1334 = vmatprep.mubr.f32.mxu0 0.0
        %1335 = vmatmul.mubr.f32.gmra.mrb[0].mxu0 %v1227
        %v1336 = vpop.f32.mrb[0].mxu0
        %v1337 = vadd.f32 0.0, %v1336
        %v1338 = vpop.f32.mrb[0].mxu0
        %1339 = vmatprep.mubr.f32.mxu0 0.0
        %1340 = vmatmul.mubr.f32.gmra.mrb[0].mxu0 %v1229
        %v1341 = vpop.f32.mrb[0].mxu0
        %v1342 = vadd.f32 0.0, %v1341
        %v1343 = vpop.f32.mrb[0].mxu0
        %1344 = vmatprep.mubr.f32.mxu0 0.0
        %1345 = vmatmul.mubr.f32.gmra.mrb[0].mxu0 %v1231
        %v1346 = vpop.f32.mrb[0].mxu0
        %v1347 = vadd.f32 0.0, %v1346
        %v1348 = vpop.f32.mrb[0].mxu0
        %1349 = vmatprep.mubr.f32.mxu0 0.0
        %1350 = vmatmul.mubr.f32.gmra.mrb[0].mxu0 %v1233
        %v1351 = vpop.f32.mrb[0].mxu0
        %v1352 = vadd.f32 0.0, %v1351
        %v1353 = vpop.f32.mrb[0].mxu0
        %1354 = vmatprep.mubr.f32.mxu0 0.0
        %1355 = vmatmul.mubr.f32.gmra.mrb[0].mxu0 %v1235
        %v1356 = vpop.f32.mrb[0].mxu0
        %v1357 = vadd.f32 0.0, %v1356
        %v1358 = vpop.f32.mrb[0].mxu0
        %1359 = vmatprep.mubr.f32.mxu0 0.0
        %1360 = vmatmul.mubr.f32.gmra.mrb[0].mxu0 %v1237
        %v1361 = vpop.f32.mrb[0].mxu0
        %v1362 = vadd.f32 0.0, %v1361
        %v1363 = vpop.f32.mrb[0].mxu0
        %1364 = vmatprep.mubr.f32.mxu0 0.0
        %1365 = vmatmul.mubr.f32.gmra.mrb[0].mxu0 %v1239
        %v1366 = vpop.f32.mrb[0].mxu0
        %v1367 = vadd.f32 0.0, %v1366
        %v1368 = vpop.f32.mrb[0].mxu0
        %1369 = vmatprep.mubr.f32.mxu0 0.0
        %1370 = vmatmul.mubr.f32.gmra.mrb[0].mxu0 %v1241
        %v1371 = vpop.f32.mrb[0].mxu0
        %v1372 = vadd.f32 0.0, %v1371
        %v1373 = vpop.f32.mrb[0].mxu0
        %1374 = vmatprep.mubr.f32.mxu0 0.0
        %1375 = vmatmul.mubr.f32.gmra.mrb[0].mxu0 %v1243
        %v1376 = vpop.f32.mrb[0].mxu0
        %v1377 = vadd.f32 0.0, %v1376
        %v1378 = vpop.f32.mrb[0].mxu0
        %1379 = vmatprep.mubr.f32.mxu0 0.0
        %1380 = vmatmul.mubr.f32.gmra.mrb[0].mxu0 %v1245
        %v1381 = vpop.f32.mrb[0].mxu0
        %v1382 = vadd.f32 0.0, %v1381
        %v1383 = vpop.f32.mrb[0].mxu0
        %1384 = vmatprep.mubr.f32.mxu0 0.0
        %1385 = vmatmul.mubr.f32.gmra.mrb[0].mxu0 %v1247
        %v1386 = vpop.f32.mrb[0].mxu0
        %v1387 = vadd.f32 0.0, %v1386
        %v1388 = vpop.f32.mrb[0].mxu0
        %1389 = vmatprep.mubr.f32.mxu0 0.0
        %1390 = vmatmul.mubr.f32.gmra.mrb[0].mxu0 %v1249
        %v1391 = vpop.f32.mrb[0].mxu0
        %v1392 = vadd.f32 0.0, %v1391
        %v1393 = vpop.f32.mrb[0].mxu0
        %1394 = vdwg.mxu0
        %v1395 = vrcp.pop %v1317
        %v1396 = vmul.f32 %v1219, %v1395
        %v1397 = vrcp.pop %v1322
        %v1398 = vmul.f32 %v1221, %v1397
        %v1399 = vrcp.pop %v1327
        %v1400 = vmul.f32 %v1223, %v1399
        %v1401 = vrcp.pop %v1332
        %v1402 = vmul.f32 %v1225, %v1401
        %v1403 = vrcp.pop %v1337
        %v1404 = vmul.f32 %v1227, %v1403
        %v1405 = vrcp.pop %v1342
        %v1406 = vmul.f32 %v1229, %v1405
        %v1407 = vrcp.pop %v1347
        %v1408 = vmul.f32 %v1231, %v1407
        %v1409 = vrcp.pop %v1352
        %v1410 = vmul.f32 %v1233, %v1409
        %v1411 = vrcp.pop %v1357
        %v1412 = vmul.f32 %v1235, %v1411
        %v1413 = vrcp.pop %v1362
        %v1414 = vmul.f32 %v1237, %v1413
        %v1415 = vrcp.pop %v1367
        %v1416 = vmul.f32 %v1239, %v1415
        %v1417 = vrcp.pop %v1372
        %v1418 = vmul.f32 %v1241, %v1417
        %v1419 = vrcp.pop %v1377
        %v1420 = vmul.f32 %v1243, %v1419
        %v1421 = vrcp.pop %v1382
        %v1422 = vmul.f32 %v1245, %v1421
        %v1423 = vrcp.pop %v1387
        %v1424 = vmul.f32 %v1247, %v1423
        %v1425 = vrcp.pop %v1392
        %v1426 = vmul.f32 %v1249, %v1425
        %v1428 = vcombine.high %v525, %v525
        %v1430 = vunpack.c.l.s4 1966171168
        %v1431 = vunpack.c.0.s8 %v1430
        %v1432 = vlaneseq
        %v1433 = vshrl.u32 %v1432, 7
        %v1434 = vsub.s32 %v1431, %v1433
        %v1435 = vrot.slane %v525, %v1434
        %v1437 = vunpack.c.l.s4 1966171168
        %v1438 = vunpack.c.0.s8 %v1437
        %v1439 = vlaneseq
        %v1440 = vshrl.u32 %v1439, 7
        %v1441 = vsub.s32 %v1438, %v1440
        %v1442 = vrot.slane %v1428, %v1441
        %v1443 = vcombine.high %v1435, %v1435
        %v1444 = vcombine.high %v1442, %v1442
        %v1446 = vunpack.c.l.s4 1966171168
        %v1447 = vunpack.c.0.s8 %v1446
        %v1448 = vlaneseq
        %v1449 = vshrl.u32 %v1448, 7
        %v1450 = vsub.s32 %v1447, %v1449
        %v1451 = vrot.slane %v1435, %v1450
        %v1453 = vunpack.c.l.s4 1966171168
        %v1454 = vunpack.c.0.s8 %v1453
        %v1455 = vlaneseq
        %v1456 = vshrl.u32 %v1455, 7
        %v1457 = vsub.s32 %v1454, %v1456
        %v1458 = vrot.slane %v1442, %v1457
        %v1460 = vunpack.c.l.s4 1966171168
        %v1461 = vunpack.c.0.s8 %v1460
        %v1462 = vlaneseq
        %v1463 = vshrl.u32 %v1462, 7
        %v1464 = vsub.s32 %v1461, %v1463
        %v1465 = vrot.slane %v1443, %v1464
        %v1467 = vunpack.c.l.s4 1966171168
        %v1468 = vunpack.c.0.s8 %v1467
        %v1469 = vlaneseq
        %v1470 = vshrl.u32 %v1469, 7
        %v1471 = vsub.s32 %v1468, %v1470
        %v1472 = vrot.slane %v1444, %v1471
        %v1473 = vcombine.high %v1451, %v1451
        %v1474 = vcombine.high %v1458, %v1458
        %v1475 = vcombine.high %v1465, %v1465
        %v1476 = vcombine.high %v1472, %v1472
        %v1477 = vlaneseq
        %v1478 = vshrl.u32 %v1477, 7
        %v1479 = vsub.s32 0, %v1478
        %v1480 = vrot.slane %v1451, %v1479
        %v1481 = vlaneseq
        %v1482 = vshrl.u32 %v1481, 7
        %v1483 = vsub.s32 0, %v1482
        %v1484 = vrot.slane %v1465, %v1483
        %v1485 = vlaneseq
        %v1486 = vshrl.u32 %v1485, 7
        %v1487 = vsub.s32 0, %v1486
        %v1488 = vrot.slane %v1473, %v1487
        %v1489 = vlaneseq
        %v1490 = vshrl.u32 %v1489, 7
        %v1491 = vsub.s32 0, %v1490
        %v1492 = vrot.slane %v1475, %v1491
        %v1493 = vlaneseq
        %v1494 = vshrl.u32 %v1493, 7
        %v1495 = vsub.s32 0, %v1494
        %v1496 = vrot.slane %v1458, %v1495
        %v1497 = vlaneseq
        %v1498 = vshrl.u32 %v1497, 7
        %v1499 = vsub.s32 0, %v1498
        %v1500 = vrot.slane %v1472, %v1499
        %v1501 = vlaneseq
        %v1502 = vshrl.u32 %v1501, 7
        %v1503 = vsub.s32 0, %v1502
        %v1504 = vrot.slane %v1474, %v1503
        %v1505 = vlaneseq
        %v1506 = vshrl.u32 %v1505, 7
        %v1507 = vsub.s32 0, %v1506
        %v1508 = vrot.slane %v1476, %v1507
        %v1517 = vmul.f32 %v1480, %v283
        %v1518 = vmul.f32 %v1480, %v284
        %v1519 = vmul.f32 %v1484, %v283
        %v1520 = vmul.f32 %v1484, %v284
        %v1521 = vmul.f32 %v1488, %v283
        %v1522 = vmul.f32 %v1488, %v284
        %v1523 = vmul.f32 %v1492, %v283
        %v1524 = vmul.f32 %v1492, %v284
        %v1525 = vmul.f32 %v1496, %v283
        %v1526 = vmul.f32 %v1496, %v284
        %v1527 = vmul.f32 %v1500, %v283
        %v1528 = vmul.f32 %v1500, %v284
        %v1529 = vmul.f32 %v1504, %v283
        %v1530 = vmul.f32 %v1504, %v284
        %v1531 = vmul.f32 %v1508, %v283
        %v1532 = vmul.f32 %v1508, %v284
        %1533 = vmatprep.subr.mxu0 0.0
        %1534 = vmatpush1.msra.mxu0 %v262
        %1535 = vmatprep.subr.mxu0 0.0
        %1536 = vmatpush1.msra.mxu0 %v263
        %1537 = vmatprep.subr.mxu0 0.0
        %1538 = vmatpush1.msra.mxu0 %v264
        %1539 = vmatprep.subr.mxu0 0.0
        %1540 = vmatpush1.msra.mxu0 %v265
        %1541 = vmatprep.subr.mxu0 0.0
        %1542 = vmatpush1.msra.mxu0 %v266
        %1543 = vmatprep.subr.mxu0 0.0
        %1544 = vmatpush1.msra.mxu0 %v267
        %1545 = vmatprep.subr.mxu0 0.0
        %1546 = vmatpush1.msra.mxu0 %v268
        %1547 = vmatprep.subr.mxu0 0.0
        %1548 = vmatpush1.msra.mxu0 %v269
        %1549 = vmatprep.subr.mxu0 0.0
        %1550 = vmatpush1.msra.mxu0 %v270
        %1551 = vmatprep.subr.mxu0 0.0
        %1552 = vmatpush1.msra.mxu0 %v271
        %1553 = vmatprep.subr.mxu0 0.0
        %1554 = vmatpush1.msra.mxu0 %v272
        %1555 = vmatprep.subr.mxu0 0.0
        %1556 = vmatpush1.msra.mxu0 %v273
        %1557 = vmatprep.subr.mxu0 0.0
        %1558 = vmatpush1.msra.mxu0 %v274
        %1559 = vmatprep.subr.mxu0 0.0
        %1560 = vmatpush1.msra.mxu0 %v275
        %1561 = vmatprep.subr.mxu0 0.0
        %1562 = vmatpush1.msra.mxu0 %v276
        %1563 = vmatprep.subr.mxu0 0.0
        %1564 = vmatpush1.msra.mxu0 %v277
        %1565 = vmatprep.subr.mxu0 0.0
        %1566 = vmatpush1.msra.mxu0 0.0
        %1567 = vmatprep.subr.mxu0 0.0
        %1568 = vmatpush1.msra.mxu0 0.0
        %1569 = vmatprep.subr.mxu0 0.0
        %1570 = vmatpush1.msra.mxu0 0.0
        %1571 = vmatprep.subr.mxu0 0.0
        %1572 = vmatpush1.msra.mxu0 0.0
        %1573 = vmatprep.subr.mxu0 0.0
        %1574 = vmatpush1.msra.mxu0 0.0
        %1575 = vmatprep.subr.mxu0 0.0
        %1576 = vmatpush1.msra.mxu0 0.0
        %1577 = vmatprep.subr.mxu0 0.0
        %1578 = vmatpush1.msra.mxu0 0.0
        %1579 = vmatprep.subr.mxu0 0.0
        %1580 = vmatpush1.msra.mxu0 0.0
        %1581 = vmatprep.subr.mxu0 0.0
        %1582 = vmatpush1.msra.mxu0 0.0
        %1583 = vmatprep.subr.mxu0 0.0
        %1584 = vmatpush1.msra.mxu0 0.0
        %1585 = vmatprep.subr.mxu0 0.0
        %1586 = vmatpush1.msra.mxu0 0.0
        %1587 = vmatprep.subr.mxu0 0.0
        %1588 = vmatpush1.msra.mxu0 0.0
        %1589 = vmatprep.subr.mxu0 0.0
        %1590 = vmatpush1.msra.mxu0 0.0
        %1591 = vmatprep.subr.mxu0 0.0
        %1592 = vmatpush1.msra.mxu0 0.0
        %1593 = vmatprep.subr.mxu0 0.0
        %1594 = vmatpush1.msra.mxu0 0.0
        %1595 = vmatprep.subr.mxu0 0.0
        %1596 = vmatpush1.msra.mxu0 0.0
        %1597 = vmatprep.mubr.f32.mxu0 0.0
        %1598 = vmatmul.mubr.f32.gmra.mrb[0].mxu0 %v1517
        %v1599 = vpop.f32.mrb[0].mxu0
        %v1600 = vadd.f32 0.0, %v1599
        %v1601 = vpop.f32.mrb[0].mxu0
        %1602 = vmatprep.mubr.f32.mxu0 0.0
        %1603 = vmatmul.mubr.f32.gmra.mrb[0].mxu0 %v1518
        %v1604 = vpop.f32.mrb[0].mxu0
        %v1605 = vadd.f32 0.0, %v1604
        %v1606 = vpop.f32.mrb[0].mxu0
        %1607 = vmatprep.mubr.f32.mxu0 0.0
        %1608 = vmatmul.mubr.f32.gmra.mrb[0].mxu0 %v1519
        %v1609 = vpop.f32.mrb[0].mxu0
        %v1610 = vadd.f32 0.0, %v1609
        %v1611 = vpop.f32.mrb[0].mxu0
        %1612 = vmatprep.mubr.f32.mxu0 0.0
        %1613 = vmatmul.mubr.f32.gmra.mrb[0].mxu0 %v1520
        %v1614 = vpop.f32.mrb[0].mxu0
        %v1615 = vadd.f32 0.0, %v1614
        %v1616 = vpop.f32.mrb[0].mxu0
        %1617 = vmatprep.mubr.f32.mxu0 0.0
        %1618 = vmatmul.mubr.f32.gmra.mrb[0].mxu0 %v1521
        %v1619 = vpop.f32.mrb[0].mxu0
        %v1620 = vadd.f32 0.0, %v1619
        %v1621 = vpop.f32.mrb[0].mxu0
        %1622 = vmatprep.mubr.f32.mxu0 0.0
        %1623 = vmatmul.mubr.f32.gmra.mrb[0].mxu0 %v1522
        %v1624 = vpop.f32.mrb[0].mxu0
        %v1625 = vadd.f32 0.0, %v1624
        %v1626 = vpop.f32.mrb[0].mxu0
        %1627 = vmatprep.mubr.f32.mxu0 0.0
        %1628 = vmatmul.mubr.f32.gmra.mrb[0].mxu0 %v1523
        %v1629 = vpop.f32.mrb[0].mxu0
        %v1630 = vadd.f32 0.0, %v1629
        %v1631 = vpop.f32.mrb[0].mxu0
        %1632 = vmatprep.mubr.f32.mxu0 0.0
        %1633 = vmatmul.mubr.f32.gmra.mrb[0].mxu0 %v1524
        %v1634 = vpop.f32.mrb[0].mxu0
        %v1635 = vadd.f32 0.0, %v1634
        %v1636 = vpop.f32.mrb[0].mxu0
        %1637 = vmatprep.mubr.f32.mxu0 0.0
        %1638 = vmatmul.mubr.f32.gmra.mrb[0].mxu0 %v1525
        %v1639 = vpop.f32.mrb[0].mxu0
        %v1640 = vadd.f32 0.0, %v1639
        %v1641 = vpop.f32.mrb[0].mxu0
        %1642 = vmatprep.mubr.f32.mxu0 0.0
        %1643 = vmatmul.mubr.f32.gmra.mrb[0].mxu0 %v1526
        %v1644 = vpop.f32.mrb[0].mxu0
        %v1645 = vadd.f32 0.0, %v1644
        %v1646 = vpop.f32.mrb[0].mxu0
        %1647 = vmatprep.mubr.f32.mxu0 0.0
        %1648 = vmatmul.mubr.f32.gmra.mrb[0].mxu0 %v1527
        %v1649 = vpop.f32.mrb[0].mxu0
        %v1650 = vadd.f32 0.0, %v1649
        %v1651 = vpop.f32.mrb[0].mxu0
        %1652 = vmatprep.mubr.f32.mxu0 0.0
        %1653 = vmatmul.mubr.f32.gmra.mrb[0].mxu0 %v1528
        %v1654 = vpop.f32.mrb[0].mxu0
        %v1655 = vadd.f32 0.0, %v1654
        %v1656 = vpop.f32.mrb[0].mxu0
        %1657 = vmatprep.mubr.f32.mxu0 0.0
        %1658 = vmatmul.mubr.f32.gmra.mrb[0].mxu0 %v1529
        %v1659 = vpop.f32.mrb[0].mxu0
        %v1660 = vadd.f32 0.0, %v1659
        %v1661 = vpop.f32.mrb[0].mxu0
        %1662 = vmatprep.mubr.f32.mxu0 0.0
        %1663 = vmatmul.mubr.f32.gmra.mrb[0].mxu0 %v1530
        %v1664 = vpop.f32.mrb[0].mxu0
        %v1665 = vadd.f32 0.0, %v1664
        %v1666 = vpop.f32.mrb[0].mxu0
        %1667 = vmatprep.mubr.f32.mxu0 0.0
        %1668 = vmatmul.mubr.f32.gmra.mrb[0].mxu0 %v1531
        %v1669 = vpop.f32.mrb[0].mxu0
        %v1670 = vadd.f32 0.0, %v1669
        %v1671 = vpop.f32.mrb[0].mxu0
        %1672 = vmatprep.mubr.f32.mxu0 0.0
        %1673 = vmatmul.mubr.f32.gmra.mrb[0].mxu0 %v1532
        %v1674 = vpop.f32.mrb[0].mxu0
        %v1675 = vadd.f32 0.0, %v1674
        %v1676 = vpop.f32.mrb[0].mxu0
        %1677 = vdwg.mxu0
        %v1678 = vmul.f32 %v1600, %v283
        %v1679 = vmul.f32 %v1605, %v284
        %v1680 = vmul.f32 %v1610, %v283
        %v1681 = vmul.f32 %v1615, %v284
        %v1682 = vmul.f32 %v1620, %v283
        %v1683 = vmul.f32 %v1625, %v284
        %v1684 = vmul.f32 %v1630, %v283
        %v1685 = vmul.f32 %v1635, %v284
        %v1686 = vmul.f32 %v1640, %v283
        %v1687 = vmul.f32 %v1645, %v284
        %v1688 = vmul.f32 %v1650, %v283
        %v1689 = vmul.f32 %v1655, %v284
        %v1690 = vmul.f32 %v1660, %v283
        %v1691 = vmul.f32 %v1665, %v284
        %v1692 = vmul.f32 %v1670, %v283
        %v1693 = vmul.f32 %v1675, %v284
        %v1694 = vadd.f32 %v1678, %v1679
        %v1695 = vrot.slane %v1694, 4
        %v1696 = vadd.f32 %v1694, %v1695
        %v1697 = vrot.slane %v1696, 2
        %v1698 = vadd.f32 %v1696, %v1697
        %v1699 = vrot.slane %v1698, 1
        %v1700 = vadd.f32 %v1698, %v1699
        %v1701 = vadd.f32 %v1680, %v1681
        %v1702 = vrot.slane %v1701, 4
        %v1703 = vadd.f32 %v1701, %v1702
        %v1704 = vrot.slane %v1703, 2
        %v1705 = vadd.f32 %v1703, %v1704
        %v1706 = vrot.slane %v1705, 1
        %v1707 = vadd.f32 %v1705, %v1706
        %v1708 = vadd.f32 %v1682, %v1683
        %v1709 = vrot.slane %v1708, 4
        %v1710 = vadd.f32 %v1708, %v1709
        %v1711 = vrot.slane %v1710, 2
        %v1712 = vadd.f32 %v1710, %v1711
        %v1713 = vrot.slane %v1712, 1
        %v1714 = vadd.f32 %v1712, %v1713
        %v1715 = vadd.f32 %v1684, %v1685
        %v1716 = vrot.slane %v1715, 4
        %v1717 = vadd.f32 %v1715, %v1716
        %v1718 = vrot.slane %v1717, 2
        %v1719 = vadd.f32 %v1717, %v1718
        %v1720 = vrot.slane %v1719, 1
        %v1721 = vadd.f32 %v1719, %v1720
        %v1722 = vadd.f32 %v1686, %v1687
        %v1723 = vrot.slane %v1722, 4
        %v1724 = vadd.f32 %v1722, %v1723
        %v1725 = vrot.slane %v1724, 2
        %v1726 = vadd.f32 %v1724, %v1725
        %v1727 = vrot.slane %v1726, 1
        %v1728 = vadd.f32 %v1726, %v1727
        %v1729 = vadd.f32 %v1688, %v1689
        %v1730 = vrot.slane %v1729, 4
        %v1731 = vadd.f32 %v1729, %v1730
        %v1732 = vrot.slane %v1731, 2
        %v1733 = vadd.f32 %v1731, %v1732
        %v1734 = vrot.slane %v1733, 1
        %v1735 = vadd.f32 %v1733, %v1734
        %v1736 = vadd.f32 %v1690, %v1691
        %v1737 = vrot.slane %v1736, 4
        %v1738 = vadd.f32 %v1736, %v1737
        %v1739 = vrot.slane %v1738, 2
        %v1740 = vadd.f32 %v1738, %v1739
        %v1741 = vrot.slane %v1740, 1
        %v1742 = vadd.f32 %v1740, %v1741
        %v1743 = vadd.f32 %v1692, %v1693
        %v1744 = vrot.slane %v1743, 4
        %v1745 = vadd.f32 %v1743, %v1744
        %v1746 = vrot.slane %v1745, 2
        %v1747 = vadd.f32 %v1745, %v1746
        %v1748 = vrot.slane %v1747, 1
        %v1749 = vadd.f32 %v1747, %v1748
        %vm1750 = vcmp.gt.f32.partialorder %v1600, %v1700
        %vm1751 = vcmp.gt.f32.partialorder %v1605, %v1700
        %vm1752 = vcmp.gt.f32.partialorder %v1610, %v1707
        %vm1753 = vcmp.gt.f32.partialorder %v1615, %v1707
        %vm1754 = vcmp.gt.f32.partialorder %v1620, %v1714
        %vm1755 = vcmp.gt.f32.partialorder %v1625, %v1714
        %vm1756 = vcmp.gt.f32.partialorder %v1630, %v1721
        %vm1757 = vcmp.gt.f32.partialorder %v1635, %v1721
        %vm1758 = vcmp.gt.f32.partialorder %v1640, %v1728
        %vm1759 = vcmp.gt.f32.partialorder %v1645, %v1728
        %vm1760 = vcmp.gt.f32.partialorder %v1650, %v1735
        %vm1761 = vcmp.gt.f32.partialorder %v1655, %v1735
        %vm1762 = vcmp.gt.f32.partialorder %v1660, %v1742
        %vm1763 = vcmp.gt.f32.partialorder %v1665, %v1742
        %vm1764 = vcmp.gt.f32.partialorder %v1670, %v1749
        %vm1765 = vcmp.gt.f32.partialorder %v1675, %v1749
        %vm1766 = vcmp.eq.f32.partialorder %v1600, %v1700
        %vm1767 = vcmp.eq.f32.partialorder %v1605, %v1700
        %vm1768 = vcmp.eq.f32.partialorder %v1610, %v1707
        %vm1769 = vcmp.eq.f32.partialorder %v1615, %v1707
        %vm1770 = vcmp.eq.f32.partialorder %v1620, %v1714
        %vm1771 = vcmp.eq.f32.partialorder %v1625, %v1714
        %vm1772 = vcmp.eq.f32.partialorder %v1630, %v1721
        %vm1773 = vcmp.eq.f32.partialorder %v1635, %v1721
        %vm1774 = vcmp.eq.f32.partialorder %v1640, %v1728
        %vm1775 = vcmp.eq.f32.partialorder %v1645, %v1728
        %vm1776 = vcmp.eq.f32.partialorder %v1650, %v1735
        %vm1777 = vcmp.eq.f32.partialorder %v1655, %v1735
        %vm1778 = vcmp.eq.f32.partialorder %v1660, %v1742
        %vm1779 = vcmp.eq.f32.partialorder %v1665, %v1742
        %vm1780 = vcmp.eq.f32.partialorder %v1670, %v1749
        %vm1781 = vcmp.eq.f32.partialorder %v1675, %v1749
        %vm1782 = vmand %vm1766, %vm887
        %vm1783 = vmand %vm1767, %vm888
        %vm1784 = vmand %vm1768, %vm887
        %vm1785 = vmand %vm1769, %vm888
        %vm1786 = vmand %vm1770, %vm887
        %vm1787 = vmand %vm1771, %vm888
        %vm1788 = vmand %vm1772, %vm887
        %vm1789 = vmand %vm1773, %vm888
        %vm1790 = vmand %vm1774, %vm887
        %vm1791 = vmand %vm1775, %vm888
        %vm1792 = vmand %vm1776, %vm887
        %vm1793 = vmand %vm1777, %vm888
        %vm1794 = vmand %vm1778, %vm887
        %vm1795 = vmand %vm1779, %vm888
        %vm1796 = vmand %vm1780, %vm887
        %vm1797 = vmand %vm1781, %vm888
        %vm1798 = vmor %vm1750, %vm1782
        %vm1799 = vmor %vm1751, %vm1783
        %vm1800 = vmor %vm1752, %vm1784
        %vm1801 = vmor %vm1753, %vm1785
        %vm1802 = vmor %vm1754, %vm1786
        %vm1803 = vmor %vm1755, %vm1787
        %vm1804 = vmor %vm1756, %vm1788
        %vm1805 = vmor %vm1757, %vm1789
        %vm1806 = vmor %vm1758, %vm1790
        %vm1807 = vmor %vm1759, %vm1791
        %vm1808 = vmor %vm1760, %vm1792
        %vm1809 = vmor %vm1761, %vm1793
        %vm1810 = vmor %vm1762, %vm1794
        %vm1811 = vmor %vm1763, %vm1795
        %vm1812 = vmor %vm1764, %vm1796
        %vm1813 = vmor %vm1765, %vm1797
        %v1814 = vsel %vm1798, 1, 0
        %v1815 = vsel %vm1799, 1, 0
        %v1816 = vsel %vm1800, 1, 0
        %v1817 = vsel %vm1801, 1, 0
        %v1818 = vsel %vm1802, 1, 0
        %v1819 = vsel %vm1803, 1, 0
        %v1820 = vsel %vm1804, 1, 0
        %v1821 = vsel %vm1805, 1, 0
        %v1822 = vsel %vm1806, 1, 0
        %v1823 = vsel %vm1807, 1, 0
        %v1824 = vsel %vm1808, 1, 0
        %v1825 = vsel %vm1809, 1, 0
        %v1826 = vsel %vm1810, 1, 0
        %v1827 = vsel %vm1811, 1, 0
        %v1828 = vsel %vm1812, 1, 0
        %v1829 = vsel %vm1813, 1, 0
        %v1830 = vadd.s32 %v1814, %v1815
        %v1831 = vrot.slane %v1830, 4
        %v1832 = vadd.s32 %v1830, %v1831
        %v1833 = vrot.slane %v1832, 2
        %v1834 = vadd.s32 %v1832, %v1833
        %v1835 = vrot.slane %v1834, 1
        %v1836 = vadd.s32 %v1834, %v1835
        %v1837 = vadd.s32 %v1816, %v1817
        %v1838 = vrot.slane %v1837, 4
        %v1839 = vadd.s32 %v1837, %v1838
        %v1840 = vrot.slane %v1839, 2
        %v1841 = vadd.s32 %v1839, %v1840
        %v1842 = vrot.slane %v1841, 1
        %v1843 = vadd.s32 %v1841, %v1842
        %v1844 = vadd.s32 %v1818, %v1819
        %v1845 = vrot.slane %v1844, 4
        %v1846 = vadd.s32 %v1844, %v1845
        %v1847 = vrot.slane %v1846, 2
        %v1848 = vadd.s32 %v1846, %v1847
        %v1849 = vrot.slane %v1848, 1
        %v1850 = vadd.s32 %v1848, %v1849
        %v1851 = vadd.s32 %v1820, %v1821
        %v1852 = vrot.slane %v1851, 4
        %v1853 = vadd.s32 %v1851, %v1852
        %v1854 = vrot.slane %v1853, 2
        %v1855 = vadd.s32 %v1853, %v1854
        %v1856 = vrot.slane %v1855, 1
        %v1857 = vadd.s32 %v1855, %v1856
        %v1858 = vadd.s32 %v1822, %v1823
        %v1859 = vrot.slane %v1858, 4
        %v1860 = vadd.s32 %v1858, %v1859
        %v1861 = vrot.slane %v1860, 2
        %v1862 = vadd.s32 %v1860, %v1861
        %v1863 = vrot.slane %v1862, 1
        %v1864 = vadd.s32 %v1862, %v1863
        %v1865 = vadd.s32 %v1824, %v1825
        %v1866 = vrot.slane %v1865, 4
        %v1867 = vadd.s32 %v1865, %v1866
        %v1868 = vrot.slane %v1867, 2
        %v1869 = vadd.s32 %v1867, %v1868
        %v1870 = vrot.slane %v1869, 1
        %v1871 = vadd.s32 %v1869, %v1870
        %v1872 = vadd.s32 %v1826, %v1827
        %v1873 = vrot.slane %v1872, 4
        %v1874 = vadd.s32 %v1872, %v1873
        %v1875 = vrot.slane %v1874, 2
        %v1876 = vadd.s32 %v1874, %v1875
        %v1877 = vrot.slane %v1876, 1
        %v1878 = vadd.s32 %v1876, %v1877
        %v1879 = vadd.s32 %v1828, %v1829
        %v1880 = vrot.slane %v1879, 4
        %v1881 = vadd.s32 %v1879, %v1880
        %v1882 = vrot.slane %v1881, 2
        %v1883 = vadd.s32 %v1881, %v1882
        %v1884 = vrot.slane %v1883, 1
        %v1885 = vadd.s32 %v1883, %v1884
        %vm1886 = vcmp.eq.s32.totalorder %v1836, %v195
        %vm1887 = vcmp.eq.s32.totalorder %v1836, %v196
        %vm1888 = vcmp.eq.s32.totalorder %v1843, %v195
        %vm1889 = vcmp.eq.s32.totalorder %v1843, %v196
        %vm1890 = vcmp.eq.s32.totalorder %v1850, %v195
        %vm1891 = vcmp.eq.s32.totalorder %v1850, %v196
        %vm1892 = vcmp.eq.s32.totalorder %v1857, %v195
        %vm1893 = vcmp.eq.s32.totalorder %v1857, %v196
        %vm1894 = vcmp.eq.s32.totalorder %v1864, %v195
        %vm1895 = vcmp.eq.s32.totalorder %v1864, %v196
        %vm1896 = vcmp.eq.s32.totalorder %v1871, %v195
        %vm1897 = vcmp.eq.s32.totalorder %v1871, %v196
        %vm1898 = vcmp.eq.s32.totalorder %v1878, %v195
        %vm1899 = vcmp.eq.s32.totalorder %v1878, %v196
        %vm1900 = vcmp.eq.s32.totalorder %v1885, %v195
        %vm1901 = vcmp.eq.s32.totalorder %v1885, %v196
        %v1902 = vsel %vm1886, %v1480, 0.0
        %v1903 = vsel %vm1887, %v1480, 0.0
        %v1904 = vsel %vm1888, %v1484, 0.0
        %v1905 = vsel %vm1889, %v1484, 0.0
        %v1906 = vsel %vm1890, %v1488, 0.0
        %v1907 = vsel %vm1891, %v1488, 0.0
        %v1908 = vsel %vm1892, %v1492, 0.0
        %v1909 = vsel %vm1893, %v1492, 0.0
        %v1910 = vsel %vm1894, %v1496, 0.0
        %v1911 = vsel %vm1895, %v1496, 0.0
        %v1912 = vsel %vm1896, %v1500, 0.0
        %v1913 = vsel %vm1897, %v1500, 0.0
        %v1914 = vsel %vm1898, %v1504, 0.0
        %v1915 = vsel %vm1899, %v1504, 0.0
        %v1916 = vsel %vm1900, %v1508, 0.0
        %v1917 = vsel %vm1901, %v1508, 0.0
        %1918 = vmatprep.subr.mxu0 0.0
        %1919 = vmatpush1.msra.mxu0 %v262
        %1920 = vmatprep.subr.mxu0 0.0
        %1921 = vmatpush1.msra.mxu0 %v263
        %1922 = vmatprep.subr.mxu0 0.0
        %1923 = vmatpush1.msra.mxu0 %v264
        %1924 = vmatprep.subr.mxu0 0.0
        %1925 = vmatpush1.msra.mxu0 %v265
        %1926 = vmatprep.subr.mxu0 0.0
        %1927 = vmatpush1.msra.mxu0 %v266
        %1928 = vmatprep.subr.mxu0 0.0
        %1929 = vmatpush1.msra.mxu0 %v267
        %1930 = vmatprep.subr.mxu0 0.0
        %1931 = vmatpush1.msra.mxu0 %v268
        %1932 = vmatprep.subr.mxu0 0.0
        %1933 = vmatpush1.msra.mxu0 %v269
        %1934 = vmatprep.subr.mxu0 0.0
        %1935 = vmatpush1.msra.mxu0 %v270
        %1936 = vmatprep.subr.mxu0 0.0
        %1937 = vmatpush1.msra.mxu0 %v271
        %1938 = vmatprep.subr.mxu0 0.0
        %1939 = vmatpush1.msra.mxu0 %v272
        %1940 = vmatprep.subr.mxu0 0.0
        %1941 = vmatpush1.msra.mxu0 %v273
        %1942 = vmatprep.subr.mxu0 0.0
        %1943 = vmatpush1.msra.mxu0 %v274
        %1944 = vmatprep.subr.mxu0 0.0
        %1945 = vmatpush1.msra.mxu0 %v275
        %1946 = vmatprep.subr.mxu0 0.0
        %1947 = vmatpush1.msra.mxu0 %v276
        %1948 = vmatprep.subr.mxu0 0.0
        %1949 = vmatpush1.msra.mxu0 %v277
        %1950 = vmatprep.subr.mxu0 0.0
        %1951 = vmatpush1.msra.mxu0 0.0
        %1952 = vmatprep.subr.mxu0 0.0
        %1953 = vmatpush1.msra.mxu0 0.0
        %1954 = vmatprep.subr.mxu0 0.0
        %1955 = vmatpush1.msra.mxu0 0.0
        %1956 = vmatprep.subr.mxu0 0.0
        %1957 = vmatpush1.msra.mxu0 0.0
        %1958 = vmatprep.subr.mxu0 0.0
        %1959 = vmatpush1.msra.mxu0 0.0
        %1960 = vmatprep.subr.mxu0 0.0
        %1961 = vmatpush1.msra.mxu0 0.0
        %1962 = vmatprep.subr.mxu0 0.0
        %1963 = vmatpush1.msra.mxu0 0.0
        %1964 = vmatprep.subr.mxu0 0.0
        %1965 = vmatpush1.msra.mxu0 0.0
        %1966 = vmatprep.subr.mxu0 0.0
        %1967 = vmatpush1.msra.mxu0 0.0
        %1968 = vmatprep.subr.mxu0 0.0
        %1969 = vmatpush1.msra.mxu0 0.0
        %1970 = vmatprep.subr.mxu0 0.0
        %1971 = vmatpush1.msra.mxu0 0.0
        %1972 = vmatprep.subr.mxu0 0.0
        %1973 = vmatpush1.msra.mxu0 0.0
        %1974 = vmatprep.subr.mxu0 0.0
        %1975 = vmatpush1.msra.mxu0 0.0
        %1976 = vmatprep.subr.mxu0 0.0
        %1977 = vmatpush1.msra.mxu0 0.0
        %1978 = vmatprep.subr.mxu0 0.0
        %1979 = vmatpush1.msra.mxu0 0.0
        %1980 = vmatprep.subr.mxu0 0.0
        %1981 = vmatpush1.msra.mxu0 0.0
        %1982 = vmatprep.mubr.f32.mxu0 0.0
        %1983 = vmatmul.mubr.f32.gmra.mrb[0].mxu0 %v1902
        %v1984 = vpop.f32.mrb[0].mxu0
        %v1985 = vadd.f32 0.0, %v1984
        %v1986 = vpop.f32.mrb[0].mxu0
        %1987 = vmatprep.mubr.f32.mxu0 0.0
        %1988 = vmatmul.mubr.f32.gmra.mrb[0].mxu0 %v1903
        %v1989 = vpop.f32.mrb[0].mxu0
        %v1990 = vadd.f32 0.0, %v1989
        %v1991 = vpop.f32.mrb[0].mxu0
        %1992 = vmatprep.mubr.f32.mxu0 0.0
        %1993 = vmatmul.mubr.f32.gmra.mrb[0].mxu0 %v1904
        %v1994 = vpop.f32.mrb[0].mxu0
        %v1995 = vadd.f32 0.0, %v1994
        %v1996 = vpop.f32.mrb[0].mxu0
        %1997 = vmatprep.mubr.f32.mxu0 0.0
        %1998 = vmatmul.mubr.f32.gmra.mrb[0].mxu0 %v1905
        %v1999 = vpop.f32.mrb[0].mxu0
        %v2000 = vadd.f32 0.0, %v1999
        %v2001 = vpop.f32.mrb[0].mxu0
        %2002 = vmatprep.mubr.f32.mxu0 0.0
        %2003 = vmatmul.mubr.f32.gmra.mrb[0].mxu0 %v1906
        %v2004 = vpop.f32.mrb[0].mxu0
        %v2005 = vadd.f32 0.0, %v2004
        %v2006 = vpop.f32.mrb[0].mxu0
        %2007 = vmatprep.mubr.f32.mxu0 0.0
        %2008 = vmatmul.mubr.f32.gmra.mrb[0].mxu0 %v1907
        %v2009 = vpop.f32.mrb[0].mxu0
        %v2010 = vadd.f32 0.0, %v2009
        %v2011 = vpop.f32.mrb[0].mxu0
        %2012 = vmatprep.mubr.f32.mxu0 0.0
        %2013 = vmatmul.mubr.f32.gmra.mrb[0].mxu0 %v1908
        %v2014 = vpop.f32.mrb[0].mxu0
        %v2015 = vadd.f32 0.0, %v2014
        %v2016 = vpop.f32.mrb[0].mxu0
        %2017 = vmatprep.mubr.f32.mxu0 0.0
        %2018 = vmatmul.mubr.f32.gmra.mrb[0].mxu0 %v1909
        %v2019 = vpop.f32.mrb[0].mxu0
        %v2020 = vadd.f32 0.0, %v2019
        %v2021 = vpop.f32.mrb[0].mxu0
        %2022 = vmatprep.mubr.f32.mxu0 0.0
        %2023 = vmatmul.mubr.f32.gmra.mrb[0].mxu0 %v1910
        %v2024 = vpop.f32.mrb[0].mxu0
        %v2025 = vadd.f32 0.0, %v2024
        %v2026 = vpop.f32.mrb[0].mxu0
        %2027 = vmatprep.mubr.f32.mxu0 0.0
        %2028 = vmatmul.mubr.f32.gmra.mrb[0].mxu0 %v1911
        %v2029 = vpop.f32.mrb[0].mxu0
        %v2030 = vadd.f32 0.0, %v2029
        %v2031 = vpop.f32.mrb[0].mxu0
        %2032 = vmatprep.mubr.f32.mxu0 0.0
        %2033 = vmatmul.mubr.f32.gmra.mrb[0].mxu0 %v1912
        %v2034 = vpop.f32.mrb[0].mxu0
        %v2035 = vadd.f32 0.0, %v2034
        %v2036 = vpop.f32.mrb[0].mxu0
        %2037 = vmatprep.mubr.f32.mxu0 0.0
        %2038 = vmatmul.mubr.f32.gmra.mrb[0].mxu0 %v1913
        %v2039 = vpop.f32.mrb[0].mxu0
        %v2040 = vadd.f32 0.0, %v2039
        %v2041 = vpop.f32.mrb[0].mxu0
        %2042 = vmatprep.mubr.f32.mxu0 0.0
        %2043 = vmatmul.mubr.f32.gmra.mrb[0].mxu0 %v1914
        %v2044 = vpop.f32.mrb[0].mxu0
        %v2045 = vadd.f32 0.0, %v2044
        %v2046 = vpop.f32.mrb[0].mxu0
        %2047 = vmatprep.mubr.f32.mxu0 0.0
        %2048 = vmatmul.mubr.f32.gmra.mrb[0].mxu0 %v1915
        %v2049 = vpop.f32.mrb[0].mxu0
        %v2050 = vadd.f32 0.0, %v2049
        %v2051 = vpop.f32.mrb[0].mxu0
        %2052 = vmatprep.mubr.f32.mxu0 0.0
        %2053 = vmatmul.mubr.f32.gmra.mrb[0].mxu0 %v1916
        %v2054 = vpop.f32.mrb[0].mxu0
        %v2055 = vadd.f32 0.0, %v2054
        %v2056 = vpop.f32.mrb[0].mxu0
        %2057 = vmatprep.mubr.f32.mxu0 0.0
        %2058 = vmatmul.mubr.f32.gmra.mrb[0].mxu0 %v1917
        %v2059 = vpop.f32.mrb[0].mxu0
        %v2060 = vadd.f32 0.0, %v2059
        %v2061 = vpop.f32.mrb[0].mxu0
        %2062 = vdwg.mxu0
        %v2063 = vsub.f32 %v1480, %v1985
        %v2064 = vsub.f32 %v1480, %v1990
        %v2065 = vsub.f32 %v1484, %v1995
        %v2066 = vsub.f32 %v1484, %v2000
        %v2067 = vsub.f32 %v1488, %v2005
        %v2068 = vsub.f32 %v1488, %v2010
        %v2069 = vsub.f32 %v1492, %v2015
        %v2070 = vsub.f32 %v1492, %v2020
        %v2071 = vsub.f32 %v1496, %v2025
        %v2072 = vsub.f32 %v1496, %v2030
        %v2073 = vsub.f32 %v1500, %v2035
        %v2074 = vsub.f32 %v1500, %v2040
        %v2075 = vsub.f32 %v1504, %v2045
        %v2076 = vsub.f32 %v1504, %v2050
        %v2077 = vsub.f32 %v1508, %v2055
        %v2078 = vsub.f32 %v1508, %v2060
        %v2079 = vmul.f32 %v2063, %v2063
        %v2080 = vmul.f32 %v2064, %v2064
        %v2081 = vmul.f32 %v2065, %v2065
        %v2082 = vmul.f32 %v2066, %v2066
        %v2083 = vmul.f32 %v2067, %v2067
        %v2084 = vmul.f32 %v2068, %v2068
        %v2085 = vmul.f32 %v2069, %v2069
        %v2086 = vmul.f32 %v2070, %v2070
        %v2087 = vmul.f32 %v2071, %v2071
        %v2088 = vmul.f32 %v2072, %v2072
        %v2089 = vmul.f32 %v2073, %v2073
        %v2090 = vmul.f32 %v2074, %v2074
        %v2091 = vmul.f32 %v2075, %v2075
        %v2092 = vmul.f32 %v2076, %v2076
        %v2093 = vmul.f32 %v2077, %v2077
        %v2094 = vmul.f32 %v2078, %v2078
        %v2095 = vmul.f32 %v2079, -1000.0
        %v2096 = vmul.f32 %v2080, -1000.0
        %v2097 = vmul.f32 %v2081, -1000.0
        %v2098 = vmul.f32 %v2082, -1000.0
        %v2099 = vmul.f32 %v2083, -1000.0
        %v2100 = vmul.f32 %v2084, -1000.0
        %v2101 = vmul.f32 %v2085, -1000.0
        %v2102 = vmul.f32 %v2086, -1000.0
        %v2103 = vmul.f32 %v2087, -1000.0
        %v2104 = vmul.f32 %v2088, -1000.0
        %v2105 = vmul.f32 %v2089, -1000.0
        %v2106 = vmul.f32 %v2090, -1000.0
        %v2107 = vmul.f32 %v2091, -1000.0
        %v2108 = vmul.f32 %v2092, -1000.0
        %v2109 = vmul.f32 %v2093, -1000.0
        %v2110 = vmul.f32 %v2094, -1000.0
        %v2111 = vmul.f32 %v2095, 1.442695
        %v2112 = vpow.pop %v2111
        %v2113 = vmul.f32 %v2096, 1.442695
        %v2114 = vpow.pop %v2113
        %v2115 = vmul.f32 %v2097, 1.442695
        %v2116 = vpow.pop %v2115
        %v2117 = vmul.f32 %v2098, 1.442695
        %v2118 = vpow.pop %v2117
        %v2119 = vmul.f32 %v2099, 1.442695
        %v2120 = vpow.pop %v2119
        %v2121 = vmul.f32 %v2100, 1.442695
        %v2122 = vpow.pop %v2121
        %v2123 = vmul.f32 %v2101, 1.442695
        %v2124 = vpow.pop %v2123
        %v2125 = vmul.f32 %v2102, 1.442695
        %v2126 = vpow.pop %v2125
        %v2127 = vmul.f32 %v2103, 1.442695
        %v2128 = vpow.pop %v2127
        %v2129 = vmul.f32 %v2104, 1.442695
        %v2130 = vpow.pop %v2129
        %v2131 = vmul.f32 %v2105, 1.442695
        %v2132 = vpow.pop %v2131
        %v2133 = vmul.f32 %v2106, 1.442695
        %v2134 = vpow.pop %v2133
        %v2135 = vmul.f32 %v2107, 1.442695
        %v2136 = vpow.pop %v2135
        %v2137 = vmul.f32 %v2108, 1.442695
        %v2138 = vpow.pop %v2137
        %v2139 = vmul.f32 %v2109, 1.442695
        %v2140 = vpow.pop %v2139
        %v2141 = vmul.f32 %v2110, 1.442695
        %v2142 = vpow.pop %v2141
        %2143 = vmatprep.subr.mxu0 0.0
        %2144 = vmatpush1.msra.mxu0 %v262
        %2145 = vmatprep.subr.mxu0 0.0
        %2146 = vmatpush1.msra.mxu0 %v263
        %2147 = vmatprep.subr.mxu0 0.0
        %2148 = vmatpush1.msra.mxu0 %v264
        %2149 = vmatprep.subr.mxu0 0.0
        %2150 = vmatpush1.msra.mxu0 %v265
        %2151 = vmatprep.subr.mxu0 0.0
        %2152 = vmatpush1.msra.mxu0 %v266
        %2153 = vmatprep.subr.mxu0 0.0
        %2154 = vmatpush1.msra.mxu0 %v267
        %2155 = vmatprep.subr.mxu0 0.0
        %2156 = vmatpush1.msra.mxu0 %v268
        %2157 = vmatprep.subr.mxu0 0.0
        %2158 = vmatpush1.msra.mxu0 %v269
        %2159 = vmatprep.subr.mxu0 0.0
        %2160 = vmatpush1.msra.mxu0 %v270
        %2161 = vmatprep.subr.mxu0 0.0
        %2162 = vmatpush1.msra.mxu0 %v271
        %2163 = vmatprep.subr.mxu0 0.0
        %2164 = vmatpush1.msra.mxu0 %v272
        %2165 = vmatprep.subr.mxu0 0.0
        %2166 = vmatpush1.msra.mxu0 %v273
        %2167 = vmatprep.subr.mxu0 0.0
        %2168 = vmatpush1.msra.mxu0 %v274
        %2169 = vmatprep.subr.mxu0 0.0
        %2170 = vmatpush1.msra.mxu0 %v275
        %2171 = vmatprep.subr.mxu0 0.0
        %2172 = vmatpush1.msra.mxu0 %v276
        %2173 = vmatprep.subr.mxu0 0.0
        %2174 = vmatpush1.msra.mxu0 %v277
        %2175 = vmatprep.subr.mxu0 0.0
        %2176 = vmatpush1.msra.mxu0 0.0
        %2177 = vmatprep.subr.mxu0 0.0
        %2178 = vmatpush1.msra.mxu0 0.0
        %2179 = vmatprep.subr.mxu0 0.0
        %2180 = vmatpush1.msra.mxu0 0.0
        %2181 = vmatprep.subr.mxu0 0.0
        %2182 = vmatpush1.msra.mxu0 0.0
        %2183 = vmatprep.subr.mxu0 0.0
        %2184 = vmatpush1.msra.mxu0 0.0
        %2185 = vmatprep.subr.mxu0 0.0
        %2186 = vmatpush1.msra.mxu0 0.0
        %2187 = vmatprep.subr.mxu0 0.0
        %2188 = vmatpush1.msra.mxu0 0.0
        %2189 = vmatprep.subr.mxu0 0.0
        %2190 = vmatpush1.msra.mxu0 0.0
        %2191 = vmatprep.subr.mxu0 0.0
        %2192 = vmatpush1.msra.mxu0 0.0
        %2193 = vmatprep.subr.mxu0 0.0
        %2194 = vmatpush1.msra.mxu0 0.0
        %2195 = vmatprep.subr.mxu0 0.0
        %2196 = vmatpush1.msra.mxu0 0.0
        %2197 = vmatprep.subr.mxu0 0.0
        %2198 = vmatpush1.msra.mxu0 0.0
        %2199 = vmatprep.subr.mxu0 0.0
        %2200 = vmatpush1.msra.mxu0 0.0
        %2201 = vmatprep.subr.mxu0 0.0
        %2202 = vmatpush1.msra.mxu0 0.0
        %2203 = vmatprep.subr.mxu0 0.0
        %2204 = vmatpush1.msra.mxu0 0.0
        %2205 = vmatprep.subr.mxu0 0.0
        %2206 = vmatpush1.msra.mxu0 0.0
        %2207 = vmatprep.mubr.f32.mxu0 0.0
        %2208 = vmatmul.mubr.f32.gmra.mrb[0].mxu0 %v2112
        %v2209 = vpop.f32.mrb[0].mxu0
        %v2210 = vadd.f32 0.0, %v2209
        %v2211 = vpop.f32.mrb[0].mxu0
        %2212 = vmatprep.mubr.f32.mxu0 0.0
        %2213 = vmatmul.mubr.f32.gmra.mrb[0].mxu0 %v2114
        %v2214 = vpop.f32.mrb[0].mxu0
        %v2215 = vadd.f32 0.0, %v2214
        %v2216 = vpop.f32.mrb[0].mxu0
        %2217 = vmatprep.mubr.f32.mxu0 0.0
        %2218 = vmatmul.mubr.f32.gmra.mrb[0].mxu0 %v2116
        %v2219 = vpop.f32.mrb[0].mxu0
        %v2220 = vadd.f32 0.0, %v2219
        %v2221 = vpop.f32.mrb[0].mxu0
        %2222 = vmatprep.mubr.f32.mxu0 0.0
        %2223 = vmatmul.mubr.f32.gmra.mrb[0].mxu0 %v2118
        %v2224 = vpop.f32.mrb[0].mxu0
        %v2225 = vadd.f32 0.0, %v2224
        %v2226 = vpop.f32.mrb[0].mxu0
        %2227 = vmatprep.mubr.f32.mxu0 0.0
        %2228 = vmatmul.mubr.f32.gmra.mrb[0].mxu0 %v2120
        %v2229 = vpop.f32.mrb[0].mxu0
        %v2230 = vadd.f32 0.0, %v2229
        %v2231 = vpop.f32.mrb[0].mxu0
        %2232 = vmatprep.mubr.f32.mxu0 0.0
        %2233 = vmatmul.mubr.f32.gmra.mrb[0].mxu0 %v2122
        %v2234 = vpop.f32.mrb[0].mxu0
        %v2235 = vadd.f32 0.0, %v2234
        %v2236 = vpop.f32.mrb[0].mxu0
        %2237 = vmatprep.mubr.f32.mxu0 0.0
        %2238 = vmatmul.mubr.f32.gmra.mrb[0].mxu0 %v2124
        %v2239 = vpop.f32.mrb[0].mxu0
        %v2240 = vadd.f32 0.0, %v2239
        %v2241 = vpop.f32.mrb[0].mxu0
        %2242 = vmatprep.mubr.f32.mxu0 0.0
        %2243 = vmatmul.mubr.f32.gmra.mrb[0].mxu0 %v2126
        %v2244 = vpop.f32.mrb[0].mxu0
        %v2245 = vadd.f32 0.0, %v2244
        %v2246 = vpop.f32.mrb[0].mxu0
        %2247 = vmatprep.mubr.f32.mxu0 0.0
        %2248 = vmatmul.mubr.f32.gmra.mrb[0].mxu0 %v2128
        %v2249 = vpop.f32.mrb[0].mxu0
        %v2250 = vadd.f32 0.0, %v2249
        %v2251 = vpop.f32.mrb[0].mxu0
        %2252 = vmatprep.mubr.f32.mxu0 0.0
        %2253 = vmatmul.mubr.f32.gmra.mrb[0].mxu0 %v2130
        %v2254 = vpop.f32.mrb[0].mxu0
        %v2255 = vadd.f32 0.0, %v2254
        %v2256 = vpop.f32.mrb[0].mxu0
        %2257 = vmatprep.mubr.f32.mxu0 0.0
        %2258 = vmatmul.mubr.f32.gmra.mrb[0].mxu0 %v2132
        %v2259 = vpop.f32.mrb[0].mxu0
        %v2260 = vadd.f32 0.0, %v2259
        %v2261 = vpop.f32.mrb[0].mxu0
        %2262 = vmatprep.mubr.f32.mxu0 0.0
        %2263 = vmatmul.mubr.f32.gmra.mrb[0].mxu0 %v2134
        %v2264 = vpop.f32.mrb[0].mxu0
        %v2265 = vadd.f32 0.0, %v2264
        %v2266 = vpop.f32.mrb[0].mxu0
        %2267 = vmatprep.mubr.f32.mxu0 0.0
        %2268 = vmatmul.mubr.f32.gmra.mrb[0].mxu0 %v2136
        %v2269 = vpop.f32.mrb[0].mxu0
        %v2270 = vadd.f32 0.0, %v2269
        %v2271 = vpop.f32.mrb[0].mxu0
        %2272 = vmatprep.mubr.f32.mxu0 0.0
        %2273 = vmatmul.mubr.f32.gmra.mrb[0].mxu0 %v2138
        %v2274 = vpop.f32.mrb[0].mxu0
        %v2275 = vadd.f32 0.0, %v2274
        %v2276 = vpop.f32.mrb[0].mxu0
        %2277 = vmatprep.mubr.f32.mxu0 0.0
        %2278 = vmatmul.mubr.f32.gmra.mrb[0].mxu0 %v2140
        %v2279 = vpop.f32.mrb[0].mxu0
        %v2280 = vadd.f32 0.0, %v2279
        %v2281 = vpop.f32.mrb[0].mxu0
        %2282 = vmatprep.mubr.f32.mxu0 0.0
        %2283 = vmatmul.mubr.f32.gmra.mrb[0].mxu0 %v2142
        %v2284 = vpop.f32.mrb[0].mxu0
        %v2285 = vadd.f32 0.0, %v2284
        %v2286 = vpop.f32.mrb[0].mxu0
        %2287 = vdwg.mxu0
        %v2288 = vrcp.pop %v2210
        %v2289 = vmul.f32 %v2112, %v2288
        %v2290 = vrcp.pop %v2215
        %v2291 = vmul.f32 %v2114, %v2290
        %v2292 = vrcp.pop %v2220
        %v2293 = vmul.f32 %v2116, %v2292
        %v2294 = vrcp.pop %v2225
        %v2295 = vmul.f32 %v2118, %v2294
        %v2296 = vrcp.pop %v2230
        %v2297 = vmul.f32 %v2120, %v2296
        %v2298 = vrcp.pop %v2235
        %v2299 = vmul.f32 %v2122, %v2298
        %v2300 = vrcp.pop %v2240
        %v2301 = vmul.f32 %v2124, %v2300
        %v2302 = vrcp.pop %v2245
        %v2303 = vmul.f32 %v2126, %v2302
        %v2304 = vrcp.pop %v2250
        %v2305 = vmul.f32 %v2128, %v2304
        %v2306 = vrcp.pop %v2255
        %v2307 = vmul.f32 %v2130, %v2306
        %v2308 = vrcp.pop %v2260
        %v2309 = vmul.f32 %v2132, %v2308
        %v2310 = vrcp.pop %v2265
        %v2311 = vmul.f32 %v2134, %v2310
        %v2312 = vrcp.pop %v2270
        %v2313 = vmul.f32 %v2136, %v2312
        %v2314 = vrcp.pop %v2275
        %v2315 = vmul.f32 %v2138, %v2314
        %v2316 = vrcp.pop %v2280
        %v2317 = vmul.f32 %v2140, %v2316
        %v2318 = vrcp.pop %v2285
        %v2319 = vmul.f32 %v2142, %v2318
        %2320 = vmatprep.subr.mxu0 0.0
        %2321 = vmatpush1.xpose.msra.mxu0 %v411
        %2322 = vmatprep.subr.mxu0 0.0
        %2323 = vmatpush1.xpose.msra.mxu0 %v414
        %2324 = vmatprep.subr.mxu0 0.0
        %2325 = vmatpush1.xpose.msra.mxu0 %v417
        %2326 = vmatprep.subr.mxu0 0.0
        %2327 = vmatpush1.xpose.msra.mxu0 %v420
        %2328 = vmatprep.subr.mxu0 0.0
        %2329 = vmatpush1.xpose.msra.mxu0 %v423
        %2330 = vmatprep.subr.mxu0 0.0
        %2331 = vmatpush1.xpose.msra.mxu0 %v426
        %2332 = vmatprep.subr.mxu0 0.0
        %2333 = vmatpush1.xpose.msra.mxu0 %v429
        %2334 = vmatprep.subr.mxu0 0.0
        %2335 = vmatpush1.xpose.msra.mxu0 %v432
        %2336 = vmatprep.subr.mxu0 0.0
        %2337 = vmatpush1.xpose.msra.mxu0 %v435
        %2338 = vmatprep.subr.mxu0 0.0
        %2339 = vmatpush1.xpose.msra.mxu0 %v438
        %2340 = vmatprep.subr.mxu0 0.0
        %2341 = vmatpush1.xpose.msra.mxu0 %v441
        %2342 = vmatprep.subr.mxu0 0.0
        %2343 = vmatpush1.xpose.msra.mxu0 %v444
        %2344 = vmatprep.subr.mxu0 0.0
        %2345 = vmatpush1.xpose.msra.mxu0 %v447
        %2346 = vmatprep.subr.mxu0 0.0
        %2347 = vmatpush1.xpose.msra.mxu0 %v450
        %2348 = vmatprep.subr.mxu0 0.0
        %2349 = vmatpush1.xpose.msra.mxu0 %v453
        %2350 = vmatprep.subr.mxu0 0.0
        %2351 = vmatpush1.xpose.msra.mxu0 %v456
        %2352 = vmatprep.subr.mxu0 0.0
        %2353 = vmatpush1.xpose.msra.mxu0 0.0
        %2354 = vmatprep.subr.mxu0 0.0
        %2355 = vmatpush1.xpose.msra.mxu0 0.0
        %2356 = vmatprep.subr.mxu0 0.0
        %2357 = vmatpush1.xpose.msra.mxu0 0.0
        %2358 = vmatprep.subr.mxu0 0.0
        %2359 = vmatpush1.xpose.msra.mxu0 0.0
        %2360 = vmatprep.subr.mxu0 0.0
        %2361 = vmatpush1.xpose.msra.mxu0 0.0
        %2362 = vmatprep.subr.mxu0 0.0
        %2363 = vmatpush1.xpose.msra.mxu0 0.0
        %2364 = vmatprep.subr.mxu0 0.0
        %2365 = vmatpush1.xpose.msra.mxu0 0.0
        %2366 = vmatprep.subr.mxu0 0.0
        %2367 = vmatpush1.xpose.msra.mxu0 0.0
        %2368 = vmatprep.subr.mxu0 0.0
        %2369 = vmatpush1.xpose.msra.mxu0 0.0
        %2370 = vmatprep.subr.mxu0 0.0
        %2371 = vmatpush1.xpose.msra.mxu0 0.0
        %2372 = vmatprep.subr.mxu0 0.0
        %2373 = vmatpush1.xpose.msra.mxu0 0.0
        %2374 = vmatprep.subr.mxu0 0.0
        %2375 = vmatpush1.xpose.msra.mxu0 0.0
        %2376 = vmatprep.subr.mxu0 0.0
        %2377 = vmatpush1.xpose.msra.mxu0 0.0
        %2378 = vmatprep.subr.mxu0 0.0
        %2379 = vmatpush1.xpose.msra.mxu0 0.0
        %2380 = vmatprep.subr.mxu0 0.0
        %2381 = vmatpush1.xpose.msra.mxu0 0.0
        %2382 = vmatprep.subr.mxu0 0.0
        %2383 = vmatpush1.xpose.msra.mxu0 0.0
        %2384 = vmatprep.mubr.f32.mxu0 0.0
        %2385 = vmatmul.mubr.f32.gmra.mrb[0].mxu0 %v293
        %v2386 = vpop.f32.mrb[0].mxu0
        %v2387 = vadd.f32 0.0, %v2386
        %v2388 = vpop.f32.mrb[0].mxu0
        %2389 = vmatprep.mubr.f32.mxu0 0.0
        %2390 = vmatmul.mubr.f32.gmra.mrb[0].mxu0 %v296
        %v2391 = vpop.f32.mrb[0].mxu0
        %v2392 = vadd.f32 0.0, %v2391
        %v2393 = vpop.f32.mrb[0].mxu0
        %2394 = vmatprep.mubr.f32.mxu0 0.0
        %2395 = vmatmul.mubr.f32.gmra.mrb[0].mxu0 %v299
        %v2396 = vpop.f32.mrb[0].mxu0
        %v2397 = vadd.f32 0.0, %v2396
        %v2398 = vpop.f32.mrb[0].mxu0
        %2399 = vmatprep.mubr.f32.mxu0 0.0
        %2400 = vmatmul.mubr.f32.gmra.mrb[0].mxu0 %v302
        %v2401 = vpop.f32.mrb[0].mxu0
        %v2402 = vadd.f32 0.0, %v2401
        %v2403 = vpop.f32.mrb[0].mxu0
        %2404 = vmatprep.mubr.f32.mxu0 0.0
        %2405 = vmatmul.mubr.f32.gmra.mrb[0].mxu0 %v305
        %v2406 = vpop.f32.mrb[0].mxu0
        %v2407 = vadd.f32 0.0, %v2406
        %v2408 = vpop.f32.mrb[0].mxu0
        %2409 = vmatprep.mubr.f32.mxu0 0.0
        %2410 = vmatmul.mubr.f32.gmra.mrb[0].mxu0 %v308
        %v2411 = vpop.f32.mrb[0].mxu0
        %v2412 = vadd.f32 0.0, %v2411
        %v2413 = vpop.f32.mrb[0].mxu0
        %2414 = vmatprep.mubr.f32.mxu0 0.0
        %2415 = vmatmul.mubr.f32.gmra.mrb[0].mxu0 %v311
        %v2416 = vpop.f32.mrb[0].mxu0
        %v2417 = vadd.f32 0.0, %v2416
        %v2418 = vpop.f32.mrb[0].mxu0
        %2419 = vmatprep.mubr.f32.mxu0 0.0
        %2420 = vmatmul.mubr.f32.gmra.mrb[0].mxu0 %v314
        %v2421 = vpop.f32.mrb[0].mxu0
        %v2422 = vadd.f32 0.0, %v2421
        %v2423 = vpop.f32.mrb[0].mxu0
        %2424 = vmatprep.mubr.f32.mxu0 0.0
        %2425 = vmatmul.mubr.f32.gmra.mrb[0].mxu0 %v317
        %v2426 = vpop.f32.mrb[0].mxu0
        %v2427 = vadd.f32 0.0, %v2426
        %v2428 = vpop.f32.mrb[0].mxu0
        %2429 = vmatprep.mubr.f32.mxu0 0.0
        %2430 = vmatmul.mubr.f32.gmra.mrb[0].mxu0 %v320
        %v2431 = vpop.f32.mrb[0].mxu0
        %v2432 = vadd.f32 0.0, %v2431
        %v2433 = vpop.f32.mrb[0].mxu0
        %2434 = vmatprep.mubr.f32.mxu0 0.0
        %2435 = vmatmul.mubr.f32.gmra.mrb[0].mxu0 %v323
        %v2436 = vpop.f32.mrb[0].mxu0
        %v2437 = vadd.f32 0.0, %v2436
        %v2438 = vpop.f32.mrb[0].mxu0
        %2439 = vmatprep.mubr.f32.mxu0 0.0
        %2440 = vmatmul.mubr.f32.gmra.mrb[0].mxu0 %v326
        %v2441 = vpop.f32.mrb[0].mxu0
        %v2442 = vadd.f32 0.0, %v2441
        %v2443 = vpop.f32.mrb[0].mxu0
        %2444 = vmatprep.mubr.f32.mxu0 0.0
        %2445 = vmatmul.mubr.f32.gmra.mrb[0].mxu0 %v329
        %v2446 = vpop.f32.mrb[0].mxu0
        %v2447 = vadd.f32 0.0, %v2446
        %v2448 = vpop.f32.mrb[0].mxu0
        %2449 = vmatprep.mubr.f32.mxu0 0.0
        %2450 = vmatmul.mubr.f32.gmra.mrb[0].mxu0 %v332
        %v2451 = vpop.f32.mrb[0].mxu0
        %v2452 = vadd.f32 0.0, %v2451
        %v2453 = vpop.f32.mrb[0].mxu0
        %2454 = vmatprep.mubr.f32.mxu0 0.0
        %2455 = vmatmul.mubr.f32.gmra.mrb[0].mxu0 %v335
        %v2456 = vpop.f32.mrb[0].mxu0
        %v2457 = vadd.f32 0.0, %v2456
        %v2458 = vpop.f32.mrb[0].mxu0
        %2459 = vmatprep.mubr.f32.mxu0 0.0
        %2460 = vmatmul.mubr.f32.gmra.mrb[0].mxu0 %v338
        %v2461 = vpop.f32.mrb[0].mxu0
        %v2462 = vadd.f32 0.0, %v2461
        %v2463 = vpop.f32.mrb[0].mxu0
        %2464 = vdwg.mxu0
        %v2465 = vmul.f32 %v162, %v162
        %v2466 = vmul.f32 %v163, %v163
        %v2467 = vmul.f32 %v164, %v164
        %v2468 = vmul.f32 %v165, %v165
        %v2469 = vmul.f32 %v166, %v166
        %v2470 = vmul.f32 %v167, %v167
        %v2471 = vmul.f32 %v168, %v168
        %v2472 = vmul.f32 %v169, %v169
        %v2473 = vmul.f32 %v170, %v170
        %v2474 = vmul.f32 %v171, %v171
        %v2475 = vmul.f32 %v172, %v172
        %v2476 = vmul.f32 %v173, %v173
        %v2477 = vmul.f32 %v174, %v174
        %v2478 = vmul.f32 %v175, %v175
        %v2479 = vmul.f32 %v176, %v176
        %v2480 = vmul.f32 %v177, %v177
        %v2481 = vsel %vm288, %v2465, 0.0
        %2482 = vadd.xlane.f32.xlu0 %v2481
        %v2483 = vpop.xlane.xlu0 %2482
        %v2484 = vsel %vm288, %v2466, 0.0
        %2485 = vadd.xlane.f32.xlu0 %v2484
        %v2486 = vpop.xlane.xlu0 %2485
        %v2487 = vsel %vm288, %v2467, 0.0
        %2488 = vadd.xlane.f32.xlu0 %v2487
        %v2489 = vpop.xlane.xlu0 %2488
        %v2490 = vsel %vm288, %v2468, 0.0
        %2491 = vadd.xlane.f32.xlu0 %v2490
        %v2492 = vpop.xlane.xlu0 %2491
        %v2493 = vsel %vm288, %v2469, 0.0
        %2494 = vadd.xlane.f32.xlu0 %v2493
        %v2495 = vpop.xlane.xlu0 %2494
        %v2496 = vsel %vm288, %v2470, 0.0
        %2497 = vadd.xlane.f32.xlu0 %v2496
        %v2498 = vpop.xlane.xlu0 %2497
        %v2499 = vsel %vm288, %v2471, 0.0
        %2500 = vadd.xlane.f32.xlu0 %v2499
        %v2501 = vpop.xlane.xlu0 %2500
        %v2502 = vsel %vm288, %v2472, 0.0
        %2503 = vadd.xlane.f32.xlu0 %v2502
        %v2504 = vpop.xlane.xlu0 %2503
        %v2505 = vsel %vm288, %v2473, 0.0
        %2506 = vadd.xlane.f32.xlu0 %v2505
        %v2507 = vpop.xlane.xlu0 %2506
        %v2508 = vsel %vm288, %v2474, 0.0
        %2509 = vadd.xlane.f32.xlu0 %v2508
        %v2510 = vpop.xlane.xlu0 %2509
        %v2511 = vsel %vm288, %v2475, 0.0
        %2512 = vadd.xlane.f32.xlu0 %v2511
        %v2513 = vpop.xlane.xlu0 %2512
        %v2514 = vsel %vm288, %v2476, 0.0
        %2515 = vadd.xlane.f32.xlu0 %v2514
        %v2516 = vpop.xlane.xlu0 %2515
        %v2517 = vsel %vm288, %v2477, 0.0
        %2518 = vadd.xlane.f32.xlu0 %v2517
        %v2519 = vpop.xlane.xlu0 %2518
        %v2520 = vsel %vm288, %v2478, 0.0
        %2521 = vadd.xlane.f32.xlu0 %v2520
        %v2522 = vpop.xlane.xlu0 %2521
        %v2523 = vsel %vm288, %v2479, 0.0
        %2524 = vadd.xlane.f32.xlu0 %v2523
        %v2525 = vpop.xlane.xlu0 %2524
        %v2526 = vsel %vm288, %v2480, 0.0
        %2527 = vadd.xlane.f32.xlu0 %v2526
        %v2528 = vpop.xlane.xlu0 %2527
        %v2529 = vmul.f32 %v525, %v525
        %v2530 = vrot.slane %v2529, 4
        %v2531 = vadd.f32 %v2529, %v2530
        %v2532 = vrot.slane %v2531, 2
        %v2533 = vadd.f32 %v2531, %v2532
        %v2534 = vrot.slane %v2533, 1
        %v2535 = vadd.f32 %v2533, %v2534
        %v2536 = vadd.f32 %v2483, %v2535
        %v2537 = vadd.f32 %v2486, %v2535
        %v2538 = vadd.f32 %v2489, %v2535
        %v2539 = vadd.f32 %v2492, %v2535
        %v2540 = vadd.f32 %v2495, %v2535
        %v2541 = vadd.f32 %v2498, %v2535
        %v2542 = vadd.f32 %v2501, %v2535
        %v2543 = vadd.f32 %v2504, %v2535
        %v2544 = vadd.f32 %v2507, %v2535
        %v2545 = vadd.f32 %v2510, %v2535
        %v2546 = vadd.f32 %v2513, %v2535
        %v2547 = vadd.f32 %v2516, %v2535
        %v2548 = vadd.f32 %v2519, %v2535
        %v2549 = vadd.f32 %v2522, %v2535
        %v2550 = vadd.f32 %v2525, %v2535
        %v2551 = vadd.f32 %v2528, %v2535
        %v2552 = vmul.f32 %v2387, 2.0
        %v2553 = vmul.f32 %v2392, 2.0
        %v2554 = vmul.f32 %v2397, 2.0
        %v2555 = vmul.f32 %v2402, 2.0
        %v2556 = vmul.f32 %v2407, 2.0
        %v2557 = vmul.f32 %v2412, 2.0
        %v2558 = vmul.f32 %v2417, 2.0
        %v2559 = vmul.f32 %v2422, 2.0
        %v2560 = vmul.f32 %v2427, 2.0
        %v2561 = vmul.f32 %v2432, 2.0
        %v2562 = vmul.f32 %v2437, 2.0
        %v2563 = vmul.f32 %v2442, 2.0
        %v2564 = vmul.f32 %v2447, 2.0
        %v2565 = vmul.f32 %v2452, 2.0
        %v2566 = vmul.f32 %v2457, 2.0
        %v2567 = vmul.f32 %v2462, 2.0
        %v2568 = vsub.f32 %v2536, %v2552
        %v2569 = vsub.f32 %v2537, %v2553
        %v2570 = vsub.f32 %v2538, %v2554
        %v2571 = vsub.f32 %v2539, %v2555
        %v2572 = vsub.f32 %v2540, %v2556
        %v2573 = vsub.f32 %v2541, %v2557
        %v2574 = vsub.f32 %v2542, %v2558
        %v2575 = vsub.f32 %v2543, %v2559
        %v2576 = vsub.f32 %v2544, %v2560
        %v2577 = vsub.f32 %v2545, %v2561
        %v2578 = vsub.f32 %v2546, %v2562
        %v2579 = vsub.f32 %v2547, %v2563
        %v2580 = vsub.f32 %v2548, %v2564
        %v2581 = vsub.f32 %v2549, %v2565
        %v2582 = vsub.f32 %v2550, %v2566
        %v2583 = vsub.f32 %v2551, %v2567
        %v2584 = vmax.f32 %v2568, 0.0
        %v2585 = vmax.f32 %v2569, 0.0
        %v2586 = vmax.f32 %v2570, 0.0
        %v2587 = vmax.f32 %v2571, 0.0
        %v2588 = vmax.f32 %v2572, 0.0
        %v2589 = vmax.f32 %v2573, 0.0
        %v2590 = vmax.f32 %v2574, 0.0
        %v2591 = vmax.f32 %v2575, 0.0
        %v2592 = vmax.f32 %v2576, 0.0
        %v2593 = vmax.f32 %v2577, 0.0
        %v2594 = vmax.f32 %v2578, 0.0
        %v2595 = vmax.f32 %v2579, 0.0
        %v2596 = vmax.f32 %v2580, 0.0
        %v2597 = vmax.f32 %v2581, 0.0
        %v2598 = vmax.f32 %v2582, 0.0
        %v2599 = vmax.f32 %v2583, 0.0
        %v2600 = vrsqrt.pop %v2584
        %v2601 = vmul.f32 %v2584, %v2600
        %vm2602 = vcmp.eq.f32.partialorder %v2584, inf
        %v2603 = vsel %vm2602, %v2584, %v2601
        %vm2604 = vcmp.eq.f32.partialorder %v2584, 0.0
        %v2605 = vand.u32 %v2584, 2147483648
        %v2606 = vsel %vm2604, %v2605, %v2603
        %v2607 = vrsqrt.pop %v2585
        %v2608 = vmul.f32 %v2585, %v2607
        %vm2609 = vcmp.eq.f32.partialorder %v2585, inf
        %v2610 = vsel %vm2609, %v2585, %v2608
        %vm2611 = vcmp.eq.f32.partialorder %v2585, 0.0
        %v2612 = vand.u32 %v2585, 2147483648
        %v2613 = vsel %vm2611, %v2612, %v2610
        %v2614 = vrsqrt.pop %v2586
        %v2615 = vmul.f32 %v2586, %v2614
        %vm2616 = vcmp.eq.f32.partialorder %v2586, inf
        %v2617 = vsel %vm2616, %v2586, %v2615
        %vm2618 = vcmp.eq.f32.partialorder %v2586, 0.0
        %v2619 = vand.u32 %v2586, 2147483648
        %v2620 = vsel %vm2618, %v2619, %v2617
        %v2621 = vrsqrt.pop %v2587
        %v2622 = vmul.f32 %v2587, %v2621
        %vm2623 = vcmp.eq.f32.partialorder %v2587, inf
        %v2624 = vsel %vm2623, %v2587, %v2622
        %vm2625 = vcmp.eq.f32.partialorder %v2587, 0.0
        %v2626 = vand.u32 %v2587, 2147483648
        %v2627 = vsel %vm2625, %v2626, %v2624
        %v2628 = vrsqrt.pop %v2588
        %v2629 = vmul.f32 %v2588, %v2628
        %vm2630 = vcmp.eq.f32.partialorder %v2588, inf
        %v2631 = vsel %vm2630, %v2588, %v2629
        %vm2632 = vcmp.eq.f32.partialorder %v2588, 0.0
        %v2633 = vand.u32 %v2588, 2147483648
        %v2634 = vsel %vm2632, %v2633, %v2631
        %v2635 = vrsqrt.pop %v2589
        %v2636 = vmul.f32 %v2589, %v2635
        %vm2637 = vcmp.eq.f32.partialorder %v2589, inf
        %v2638 = vsel %vm2637, %v2589, %v2636
        %vm2639 = vcmp.eq.f32.partialorder %v2589, 0.0
        %v2640 = vand.u32 %v2589, 2147483648
        %v2641 = vsel %vm2639, %v2640, %v2638
        %v2642 = vrsqrt.pop %v2590
        %v2643 = vmul.f32 %v2590, %v2642
        %vm2644 = vcmp.eq.f32.partialorder %v2590, inf
        %v2645 = vsel %vm2644, %v2590, %v2643
        %vm2646 = vcmp.eq.f32.partialorder %v2590, 0.0
        %v2647 = vand.u32 %v2590, 2147483648
        %v2648 = vsel %vm2646, %v2647, %v2645
        %v2649 = vrsqrt.pop %v2591
        %v2650 = vmul.f32 %v2591, %v2649
        %vm2651 = vcmp.eq.f32.partialorder %v2591, inf
        %v2652 = vsel %vm2651, %v2591, %v2650
        %vm2653 = vcmp.eq.f32.partialorder %v2591, 0.0
        %v2654 = vand.u32 %v2591, 2147483648
        %v2655 = vsel %vm2653, %v2654, %v2652
        %v2656 = vrsqrt.pop %v2592
        %v2657 = vmul.f32 %v2592, %v2656
        %vm2658 = vcmp.eq.f32.partialorder %v2592, inf
        %v2659 = vsel %vm2658, %v2592, %v2657
        %vm2660 = vcmp.eq.f32.partialorder %v2592, 0.0
        %v2661 = vand.u32 %v2592, 2147483648
        %v2662 = vsel %vm2660, %v2661, %v2659
        %v2663 = vrsqrt.pop %v2593
        %v2664 = vmul.f32 %v2593, %v2663
        %vm2665 = vcmp.eq.f32.partialorder %v2593, inf
        %v2666 = vsel %vm2665, %v2593, %v2664
        %vm2667 = vcmp.eq.f32.partialorder %v2593, 0.0
        %v2668 = vand.u32 %v2593, 2147483648
        %v2669 = vsel %vm2667, %v2668, %v2666
        %v2670 = vrsqrt.pop %v2594
        %v2671 = vmul.f32 %v2594, %v2670
        %vm2672 = vcmp.eq.f32.partialorder %v2594, inf
        %v2673 = vsel %vm2672, %v2594, %v2671
        %vm2674 = vcmp.eq.f32.partialorder %v2594, 0.0
        %v2675 = vand.u32 %v2594, 2147483648
        %v2676 = vsel %vm2674, %v2675, %v2673
        %v2677 = vrsqrt.pop %v2595
        %v2678 = vmul.f32 %v2595, %v2677
        %vm2679 = vcmp.eq.f32.partialorder %v2595, inf
        %v2680 = vsel %vm2679, %v2595, %v2678
        %vm2681 = vcmp.eq.f32.partialorder %v2595, 0.0
        %v2682 = vand.u32 %v2595, 2147483648
        %v2683 = vsel %vm2681, %v2682, %v2680
        %v2684 = vrsqrt.pop %v2596
        %v2685 = vmul.f32 %v2596, %v2684
        %vm2686 = vcmp.eq.f32.partialorder %v2596, inf
        %v2687 = vsel %vm2686, %v2596, %v2685
        %vm2688 = vcmp.eq.f32.partialorder %v2596, 0.0
        %v2689 = vand.u32 %v2596, 2147483648
        %v2690 = vsel %vm2688, %v2689, %v2687
        %v2691 = vrsqrt.pop %v2597
        %v2692 = vmul.f32 %v2597, %v2691
        %vm2693 = vcmp.eq.f32.partialorder %v2597, inf
        %v2694 = vsel %vm2693, %v2597, %v2692
        %vm2695 = vcmp.eq.f32.partialorder %v2597, 0.0
        %v2696 = vand.u32 %v2597, 2147483648
        %v2697 = vsel %vm2695, %v2696, %v2694
        %v2698 = vrsqrt.pop %v2598
        %v2699 = vmul.f32 %v2598, %v2698
        %vm2700 = vcmp.eq.f32.partialorder %v2598, inf
        %v2701 = vsel %vm2700, %v2598, %v2699
        %vm2702 = vcmp.eq.f32.partialorder %v2598, 0.0
        %v2703 = vand.u32 %v2598, 2147483648
        %v2704 = vsel %vm2702, %v2703, %v2701
        %v2705 = vrsqrt.pop %v2599
        %v2706 = vmul.f32 %v2599, %v2705
        %vm2707 = vcmp.eq.f32.partialorder %v2599, inf
        %v2708 = vsel %vm2707, %v2599, %v2706
        %vm2709 = vcmp.eq.f32.partialorder %v2599, 0.0
        %v2710 = vand.u32 %v2599, 2147483648
        %v2711 = vsel %vm2709, %v2710, %v2708
        %v2712 = vmul.f32 %v2606, %v262
        %v2713 = vmul.f32 %v2613, %v263
        %v2714 = vmul.f32 %v2620, %v264
        %v2715 = vmul.f32 %v2627, %v265
        %v2716 = vmul.f32 %v2634, %v266
        %v2717 = vmul.f32 %v2641, %v267
        %v2718 = vmul.f32 %v2648, %v268
        %v2719 = vmul.f32 %v2655, %v269
        %v2720 = vmul.f32 %v2662, %v270
        %v2721 = vmul.f32 %v2669, %v271
        %v2722 = vmul.f32 %v2676, %v272
        %v2723 = vmul.f32 %v2683, %v273
        %v2724 = vmul.f32 %v2690, %v274
        %v2725 = vmul.f32 %v2697, %v275
        %v2726 = vmul.f32 %v2704, %v276
        %v2727 = vmul.f32 %v2711, %v277
        %2728 = vmatprep.subr.mxu0 0.0
        %2729 = vmatpush1.msra.mxu0 %v2712
        %2730 = vmatprep.subr.mxu0 0.0
        %2731 = vmatpush1.msra.mxu0 %v2713
        %2732 = vmatprep.subr.mxu0 0.0
        %2733 = vmatpush1.msra.mxu0 %v2714
        %2734 = vmatprep.subr.mxu0 0.0
        %2735 = vmatpush1.msra.mxu0 %v2715
        %2736 = vmatprep.subr.mxu0 0.0
        %2737 = vmatpush1.msra.mxu0 %v2716
        %2738 = vmatprep.subr.mxu0 0.0
        %2739 = vmatpush1.msra.mxu0 %v2717
        %2740 = vmatprep.subr.mxu0 0.0
        %2741 = vmatpush1.msra.mxu0 %v2718
        %2742 = vmatprep.subr.mxu0 0.0
        %2743 = vmatpush1.msra.mxu0 %v2719
        %2744 = vmatprep.subr.mxu0 0.0
        %2745 = vmatpush1.msra.mxu0 %v2720
        %2746 = vmatprep.subr.mxu0 0.0
        %2747 = vmatpush1.msra.mxu0 %v2721
        %2748 = vmatprep.subr.mxu0 0.0
        %2749 = vmatpush1.msra.mxu0 %v2722
        %2750 = vmatprep.subr.mxu0 0.0
        %2751 = vmatpush1.msra.mxu0 %v2723
        %2752 = vmatprep.subr.mxu0 0.0
        %2753 = vmatpush1.msra.mxu0 %v2724
        %2754 = vmatprep.subr.mxu0 0.0
        %2755 = vmatpush1.msra.mxu0 %v2725
        %2756 = vmatprep.subr.mxu0 0.0
        %2757 = vmatpush1.msra.mxu0 %v2726
        %2758 = vmatprep.subr.mxu0 0.0
        %2759 = vmatpush1.msra.mxu0 %v2727
        %2760 = vmatprep.subr.mxu0 0.0
        %2761 = vmatpush1.msra.mxu0 0.0
        %2762 = vmatprep.subr.mxu0 0.0
        %2763 = vmatpush1.msra.mxu0 0.0
        %2764 = vmatprep.subr.mxu0 0.0
        %2765 = vmatpush1.msra.mxu0 0.0
        %2766 = vmatprep.subr.mxu0 0.0
        %2767 = vmatpush1.msra.mxu0 0.0
        %2768 = vmatprep.subr.mxu0 0.0
        %2769 = vmatpush1.msra.mxu0 0.0
        %2770 = vmatprep.subr.mxu0 0.0
        %2771 = vmatpush1.msra.mxu0 0.0
        %2772 = vmatprep.subr.mxu0 0.0
        %2773 = vmatpush1.msra.mxu0 0.0
        %2774 = vmatprep.subr.mxu0 0.0
        %2775 = vmatpush1.msra.mxu0 0.0
        %2776 = vmatprep.subr.mxu0 0.0
        %2777 = vmatpush1.msra.mxu0 0.0
        %2778 = vmatprep.subr.mxu0 0.0
        %2779 = vmatpush1.msra.mxu0 0.0
        %2780 = vmatprep.subr.mxu0 0.0
        %2781 = vmatpush1.msra.mxu0 0.0
        %2782 = vmatprep.subr.mxu0 0.0
        %2783 = vmatpush1.msra.mxu0 0.0
        %2784 = vmatprep.subr.mxu0 0.0
        %2785 = vmatpush1.msra.mxu0 0.0
        %2786 = vmatprep.subr.mxu0 0.0
        %2787 = vmatpush1.msra.mxu0 0.0
        %2788 = vmatprep.subr.mxu0 0.0
        %2789 = vmatpush1.msra.mxu0 0.0
        %2790 = vmatprep.subr.mxu0 0.0
        %2791 = vmatpush1.msra.mxu0 0.0
        %2792 = vmatprep.mubr.f32.mxu0 0.0
        %2793 = vmatmul.mubr.f32.gmra.mrb[0].mxu0 %v1396
        %v2794 = vpop.f32.mrb[0].mxu0
        %v2795 = vadd.f32 0.0, %v2794
        %v2796 = vpop.f32.mrb[0].mxu0
        %2797 = vmatprep.mubr.f32.mxu0 0.0
        %2798 = vmatmul.mubr.f32.gmra.mrb[0].mxu0 %v1398
        %v2799 = vpop.f32.mrb[0].mxu0
        %v2800 = vadd.f32 0.0, %v2799
        %v2801 = vpop.f32.mrb[0].mxu0
        %2802 = vmatprep.mubr.f32.mxu0 0.0
        %2803 = vmatmul.mubr.f32.gmra.mrb[0].mxu0 %v1400
        %v2804 = vpop.f32.mrb[0].mxu0
        %v2805 = vadd.f32 0.0, %v2804
        %v2806 = vpop.f32.mrb[0].mxu0
        %2807 = vmatprep.mubr.f32.mxu0 0.0
        %2808 = vmatmul.mubr.f32.gmra.mrb[0].mxu0 %v1402
        %v2809 = vpop.f32.mrb[0].mxu0
        %v2810 = vadd.f32 0.0, %v2809
        %v2811 = vpop.f32.mrb[0].mxu0
        %2812 = vmatprep.mubr.f32.mxu0 0.0
        %2813 = vmatmul.mubr.f32.gmra.mrb[0].mxu0 %v1404
        %v2814 = vpop.f32.mrb[0].mxu0
        %v2815 = vadd.f32 0.0, %v2814
        %v2816 = vpop.f32.mrb[0].mxu0
        %2817 = vmatprep.mubr.f32.mxu0 0.0
        %2818 = vmatmul.mubr.f32.gmra.mrb[0].mxu0 %v1406
        %v2819 = vpop.f32.mrb[0].mxu0
        %v2820 = vadd.f32 0.0, %v2819
        %v2821 = vpop.f32.mrb[0].mxu0
        %2822 = vmatprep.mubr.f32.mxu0 0.0
        %2823 = vmatmul.mubr.f32.gmra.mrb[0].mxu0 %v1408
        %v2824 = vpop.f32.mrb[0].mxu0
        %v2825 = vadd.f32 0.0, %v2824
        %v2826 = vpop.f32.mrb[0].mxu0
        %2827 = vmatprep.mubr.f32.mxu0 0.0
        %2828 = vmatmul.mubr.f32.gmra.mrb[0].mxu0 %v1410
        %v2829 = vpop.f32.mrb[0].mxu0
        %v2830 = vadd.f32 0.0, %v2829
        %v2831 = vpop.f32.mrb[0].mxu0
        %2832 = vmatprep.mubr.f32.mxu0 0.0
        %2833 = vmatmul.mubr.f32.gmra.mrb[0].mxu0 %v1412
        %v2834 = vpop.f32.mrb[0].mxu0
        %v2835 = vadd.f32 0.0, %v2834
        %v2836 = vpop.f32.mrb[0].mxu0
        %2837 = vmatprep.mubr.f32.mxu0 0.0
        %2838 = vmatmul.mubr.f32.gmra.mrb[0].mxu0 %v1414
        %v2839 = vpop.f32.mrb[0].mxu0
        %v2840 = vadd.f32 0.0, %v2839
        %v2841 = vpop.f32.mrb[0].mxu0
        %2842 = vmatprep.mubr.f32.mxu0 0.0
        %2843 = vmatmul.mubr.f32.gmra.mrb[0].mxu0 %v1416
        %v2844 = vpop.f32.mrb[0].mxu0
        %v2845 = vadd.f32 0.0, %v2844
        %v2846 = vpop.f32.mrb[0].mxu0
        %2847 = vmatprep.mubr.f32.mxu0 0.0
        %2848 = vmatmul.mubr.f32.gmra.mrb[0].mxu0 %v1418
        %v2849 = vpop.f32.mrb[0].mxu0
        %v2850 = vadd.f32 0.0, %v2849
        %v2851 = vpop.f32.mrb[0].mxu0
        %2852 = vmatprep.mubr.f32.mxu0 0.0
        %2853 = vmatmul.mubr.f32.gmra.mrb[0].mxu0 %v1420
        %v2854 = vpop.f32.mrb[0].mxu0
        %v2855 = vadd.f32 0.0, %v2854
        %v2856 = vpop.f32.mrb[0].mxu0
        %2857 = vmatprep.mubr.f32.mxu0 0.0
        %2858 = vmatmul.mubr.f32.gmra.mrb[0].mxu0 %v1422
        %v2859 = vpop.f32.mrb[0].mxu0
        %v2860 = vadd.f32 0.0, %v2859
        %v2861 = vpop.f32.mrb[0].mxu0
        %2862 = vmatprep.mubr.f32.mxu0 0.0
        %2863 = vmatmul.mubr.f32.gmra.mrb[0].mxu0 %v1424
        %v2864 = vpop.f32.mrb[0].mxu0
        %v2865 = vadd.f32 0.0, %v2864
        %v2866 = vpop.f32.mrb[0].mxu0
        %2867 = vmatprep.mubr.f32.mxu0 0.0
        %2868 = vmatmul.mubr.f32.gmra.mrb[0].mxu0 %v1426
        %v2869 = vpop.f32.mrb[0].mxu0
        %v2870 = vadd.f32 0.0, %v2869
        %v2871 = vpop.f32.mrb[0].mxu0
        %2872 = vdwg.mxu0
        %v2873 = vmul.f32 %v2795, %v2289
        %v2874 = vmul.f32 %v2800, %v2291
        %v2875 = vmul.f32 %v2805, %v2293
        %v2876 = vmul.f32 %v2810, %v2295
        %v2877 = vmul.f32 %v2815, %v2297
        %v2878 = vmul.f32 %v2820, %v2299
        %v2879 = vmul.f32 %v2825, %v2301
        %v2880 = vmul.f32 %v2830, %v2303
        %v2881 = vmul.f32 %v2835, %v2305
        %v2882 = vmul.f32 %v2840, %v2307
        %v2883 = vmul.f32 %v2845, %v2309
        %v2884 = vmul.f32 %v2850, %v2311
        %v2885 = vmul.f32 %v2855, %v2313
        %v2886 = vmul.f32 %v2860, %v2315
        %v2887 = vmul.f32 %v2865, %v2317
        %v2888 = vmul.f32 %v2870, %v2319
        %v2889 = vadd.f32 %v2873, %v2874
        %v2890 = vrot.slane %v2889, 4
        %v2891 = vadd.f32 %v2889, %v2890
        %v2892 = vrot.slane %v2891, 2
        %v2893 = vadd.f32 %v2891, %v2892
        %v2894 = vrot.slane %v2893, 1
        %v2895 = vadd.f32 %v2893, %v2894
        %v2896 = vadd.f32 %v2875, %v2876
        %v2897 = vrot.slane %v2896, 4
        %v2898 = vadd.f32 %v2896, %v2897
        %v2899 = vrot.slane %v2898, 2
        %v2900 = vadd.f32 %v2898, %v2899
        %v2901 = vrot.slane %v2900, 1
        %v2902 = vadd.f32 %v2900, %v2901
        %v2903 = vadd.f32 %v2877, %v2878
        %v2904 = vrot.slane %v2903, 4
        %v2905 = vadd.f32 %v2903, %v2904
        %v2906 = vrot.slane %v2905, 2
        %v2907 = vadd.f32 %v2905, %v2906
        %v2908 = vrot.slane %v2907, 1
        %v2909 = vadd.f32 %v2907, %v2908
        %v2910 = vadd.f32 %v2879, %v2880
        %v2911 = vrot.slane %v2910, 4
        %v2912 = vadd.f32 %v2910, %v2911
        %v2913 = vrot.slane %v2912, 2
        %v2914 = vadd.f32 %v2912, %v2913
        %v2915 = vrot.slane %v2914, 1
        %v2916 = vadd.f32 %v2914, %v2915
        %v2917 = vadd.f32 %v2881, %v2882
        %v2918 = vrot.slane %v2917, 4
        %v2919 = vadd.f32 %v2917, %v2918
        %v2920 = vrot.slane %v2919, 2
        %v2921 = vadd.f32 %v2919, %v2920
        %v2922 = vrot.slane %v2921, 1
        %v2923 = vadd.f32 %v2921, %v2922
        %v2924 = vadd.f32 %v2883, %v2884
        %v2925 = vrot.slane %v2924, 4
        %v2926 = vadd.f32 %v2924, %v2925
        %v2927 = vrot.slane %v2926, 2
        %v2928 = vadd.f32 %v2926, %v2927
        %v2929 = vrot.slane %v2928, 1
        %v2930 = vadd.f32 %v2928, %v2929
        %v2931 = vadd.f32 %v2885, %v2886
        %v2932 = vrot.slane %v2931, 4
        %v2933 = vadd.f32 %v2931, %v2932
        %v2934 = vrot.slane %v2933, 2
        %v2935 = vadd.f32 %v2933, %v2934
        %v2936 = vrot.slane %v2935, 1
        %v2937 = vadd.f32 %v2935, %v2936
        %v2938 = vadd.f32 %v2887, %v2888
        %v2939 = vrot.slane %v2938, 4
        %v2940 = vadd.f32 %v2938, %v2939
        %v2941 = vrot.slane %v2940, 2
        %v2942 = vadd.f32 %v2940, %v2941
        %v2943 = vrot.slane %v2942, 1
        %v2944 = vadd.f32 %v2942, %v2943
        %vm2953 = vcmask 1041409
        %v2954 = vsel %vm2953, %v2902, %v2895
        %vm2955 = vcmask 1042434
        %v2956 = vsel %vm2955, %v2909, %v2954
        %vm2957 = vcmask 1043459
        %v2958 = vsel %vm2957, %v2916, %v2956
        %vm2959 = vcmask 1044484
        %v2960 = vsel %vm2959, %v2923, %v2958
        %vm2961 = vcmask 1045509
        %v2962 = vsel %vm2961, %v2930, %v2960
        %vm2963 = vcmask 1046534
        %v2964 = vsel %vm2963, %v2937, %v2962
        %vm2965 = vcmask 1047559
        %v2966 = vsel %vm2965, %v2944, %v2964
        %2968 = vmatprep.subr.mxu0 0.0
        %2969 = vmatpush1.msra.mxu0 %v262
        %2970 = vmatprep.subr.mxu0 0.0
        %2971 = vmatpush1.msra.mxu0 %v263
        %2972 = vmatprep.subr.mxu0 0.0
        %2973 = vmatpush1.msra.mxu0 %v264
        %2974 = vmatprep.subr.mxu0 0.0
        %2975 = vmatpush1.msra.mxu0 %v265
        %2976 = vmatprep.subr.mxu0 0.0
        %2977 = vmatpush1.msra.mxu0 %v266
        %2978 = vmatprep.subr.mxu0 0.0
        %2979 = vmatpush1.msra.mxu0 %v267
        %2980 = vmatprep.subr.mxu0 0.0
        %2981 = vmatpush1.msra.mxu0 %v268
        %2982 = vmatprep.subr.mxu0 0.0
        %2983 = vmatpush1.msra.mxu0 %v269
        %2984 = vmatprep.subr.mxu0 0.0
        %2985 = vmatpush1.msra.mxu0 %v270
        %2986 = vmatprep.subr.mxu0 0.0
        %2987 = vmatpush1.msra.mxu0 %v271
        %2988 = vmatprep.subr.mxu0 0.0
        %2989 = vmatpush1.msra.mxu0 %v272
        %2990 = vmatprep.subr.mxu0 0.0
        %2991 = vmatpush1.msra.mxu0 %v273
        %2992 = vmatprep.subr.mxu0 0.0
        %2993 = vmatpush1.msra.mxu0 %v274
        %2994 = vmatprep.subr.mxu0 0.0
        %2995 = vmatpush1.msra.mxu0 %v275
        %2996 = vmatprep.subr.mxu0 0.0
        %2997 = vmatpush1.msra.mxu0 %v276
        %2998 = vmatprep.subr.mxu0 0.0
        %2999 = vmatpush1.msra.mxu0 %v277
        %3000 = vmatprep.subr.mxu0 0.0
        %3001 = vmatpush1.msra.mxu0 0.0
        %3002 = vmatprep.subr.mxu0 0.0
        %3003 = vmatpush1.msra.mxu0 0.0
        %3004 = vmatprep.subr.mxu0 0.0
        %3005 = vmatpush1.msra.mxu0 0.0
        %3006 = vmatprep.subr.mxu0 0.0
        %3007 = vmatpush1.msra.mxu0 0.0
        %3008 = vmatprep.subr.mxu0 0.0
        %3009 = vmatpush1.msra.mxu0 0.0
        %3010 = vmatprep.subr.mxu0 0.0
        %3011 = vmatpush1.msra.mxu0 0.0
        %3012 = vmatprep.subr.mxu0 0.0
        %3013 = vmatpush1.msra.mxu0 0.0
        %3014 = vmatprep.subr.mxu0 0.0
        %3015 = vmatpush1.msra.mxu0 0.0
        %3016 = vmatprep.subr.mxu0 0.0
        %3017 = vmatpush1.msra.mxu0 0.0
        %3018 = vmatprep.subr.mxu0 0.0
        %3019 = vmatpush1.msra.mxu0 0.0
        %3020 = vmatprep.subr.mxu0 0.0
        %3021 = vmatpush1.msra.mxu0 0.0
        %3022 = vmatprep.subr.mxu0 0.0
        %3023 = vmatpush1.msra.mxu0 0.0
        %3024 = vmatprep.subr.mxu0 0.0
        %3025 = vmatpush1.msra.mxu0 0.0
        %3026 = vmatprep.subr.mxu0 0.0
        %3027 = vmatpush1.msra.mxu0 0.0
        %3028 = vmatprep.subr.mxu0 0.0
        %3029 = vmatpush1.msra.mxu0 0.0
        %3030 = vmatprep.subr.mxu0 0.0
        %3031 = vmatpush1.msra.mxu0 0.0
        %3032 = vmatprep.mubr.f32.mxu0 0.0
        %3033 = vmatmul.mubr.f32.gmra.mrb[0].mxu0 %v2966
        %v3034 = vpop.f32.mrb[0].mxu0
        %v3035 = vadd.f32 0.0, %v3034
        %v3036 = vpop.f32.mrb[0].mxu0
        %3037 = vdwg.mxu0
        %v3038 = vrot.slane %v3035, 4
        %v3039 = vmin.f32 %v3035, %v3038
        %v3040 = vrot.slane %v3039, 2
        %v3041 = vmin.f32 %v3039, %v3040
        %v3042 = vrot.slane %v3041, 1
        %v3043 = vmin.f32 %v3041, %v3042
        %v3044 = vsub.f32 %v3035, %v3043
        %v3045 = vmul.f32 %v3044, -10.0
        %v3046 = vmul.f32 %v3045, 1.442695
        %v3047 = vpow.pop %v3046
        %v3048 = vrot.slane %v3047, 4
        %v3049 = vadd.f32 %v3047, %v3048
        %v3050 = vrot.slane %v3049, 2
        %v3051 = vadd.f32 %v3049, %v3050
        %v3052 = vrot.slane %v3051, 1
        %v3053 = vadd.f32 %v3051, %v3052
        %v3054 = vrcp.pop %v3053
        %v3055 = vmul.f32 %v3047, %v3054
        %v3057 = vcombine.high %v3055, %v3055
        %v3059 = vunpack.c.l.s4 1966171168
        %v3060 = vunpack.c.0.s8 %v3059
        %v3061 = vlaneseq
        %v3062 = vshrl.u32 %v3061, 7
        %v3063 = vsub.s32 %v3060, %v3062
        %v3064 = vrot.slane %v3055, %v3063
        %v3066 = vunpack.c.l.s4 1966171168
        %v3067 = vunpack.c.0.s8 %v3066
        %v3068 = vlaneseq
        %v3069 = vshrl.u32 %v3068, 7
        %v3070 = vsub.s32 %v3067, %v3069
        %v3071 = vrot.slane %v3057, %v3070
        %v3072 = vcombine.high %v3064, %v3064
        %v3073 = vcombine.high %v3071, %v3071
        %v3075 = vunpack.c.l.s4 1966171168
        %v3076 = vunpack.c.0.s8 %v3075
        %v3077 = vlaneseq
        %v3078 = vshrl.u32 %v3077, 7
        %v3079 = vsub.s32 %v3076, %v3078
        %v3080 = vrot.slane %v3064, %v3079
        %v3082 = vunpack.c.l.s4 1966171168
        %v3083 = vunpack.c.0.s8 %v3082
        %v3084 = vlaneseq
        %v3085 = vshrl.u32 %v3084, 7
        %v3086 = vsub.s32 %v3083, %v3085
        %v3087 = vrot.slane %v3071, %v3086
        %v3089 = vunpack.c.l.s4 1966171168
        %v3090 = vunpack.c.0.s8 %v3089
        %v3091 = vlaneseq
        %v3092 = vshrl.u32 %v3091, 7
        %v3093 = vsub.s32 %v3090, %v3092
        %v3094 = vrot.slane %v3072, %v3093
        %v3096 = vunpack.c.l.s4 1966171168
        %v3097 = vunpack.c.0.s8 %v3096
        %v3098 = vlaneseq
        %v3099 = vshrl.u32 %v3098, 7
        %v3100 = vsub.s32 %v3097, %v3099
        %v3101 = vrot.slane %v3073, %v3100
        %v3102 = vcombine.high %v3080, %v3080
        %v3103 = vcombine.high %v3087, %v3087
        %v3104 = vcombine.high %v3094, %v3094
        %v3105 = vcombine.high %v3101, %v3101
        %v3106 = vlaneseq
        %v3107 = vshrl.u32 %v3106, 7
        %v3108 = vsub.s32 0, %v3107
        %v3109 = vrot.slane %v3080, %v3108
        %v3110 = vlaneseq
        %v3111 = vshrl.u32 %v3110, 7
        %v3112 = vsub.s32 0, %v3111
        %v3113 = vrot.slane %v3094, %v3112
        %v3114 = vlaneseq
        %v3115 = vshrl.u32 %v3114, 7
        %v3116 = vsub.s32 0, %v3115
        %v3117 = vrot.slane %v3102, %v3116
        %v3118 = vlaneseq
        %v3119 = vshrl.u32 %v3118, 7
        %v3120 = vsub.s32 0, %v3119
        %v3121 = vrot.slane %v3104, %v3120
        %v3122 = vlaneseq
        %v3123 = vshrl.u32 %v3122, 7
        %v3124 = vsub.s32 0, %v3123
        %v3125 = vrot.slane %v3087, %v3124
        %v3126 = vlaneseq
        %v3127 = vshrl.u32 %v3126, 7
        %v3128 = vsub.s32 0, %v3127
        %v3129 = vrot.slane %v3101, %v3128
        %v3130 = vlaneseq
        %v3131 = vshrl.u32 %v3130, 7
        %v3132 = vsub.s32 0, %v3131
        %v3133 = vrot.slane %v3103, %v3132
        %v3134 = vlaneseq
        %v3135 = vshrl.u32 %v3134, 7
        %v3136 = vsub.s32 0, %v3135
        %v3137 = vrot.slane %v3105, %v3136
        %v3146 = vmul.f32 %v1396, %v3109
        %v3147 = vmul.f32 %v1398, %v3109
        %v3148 = vmul.f32 %v1400, %v3113
        %v3149 = vmul.f32 %v1402, %v3113
        %v3150 = vmul.f32 %v1404, %v3117
        %v3151 = vmul.f32 %v1406, %v3117
        %v3152 = vmul.f32 %v1408, %v3121
        %v3153 = vmul.f32 %v1410, %v3121
        %v3154 = vmul.f32 %v1412, %v3125
        %v3155 = vmul.f32 %v1414, %v3125
        %v3156 = vmul.f32 %v1416, %v3129
        %v3157 = vmul.f32 %v1418, %v3129
        %v3158 = vmul.f32 %v1420, %v3133
        %v3159 = vmul.f32 %v1422, %v3133
        %v3160 = vmul.f32 %v1424, %v3137
        %v3161 = vmul.f32 %v1426, %v3137
        %3162 = vxpose.xlu0.b32.start [1/16] %v3146, 128
        %3163 = vxpose.xlu0.b32.cont [2/16] %v3147, 128
        %3164 = vxpose.xlu0.b32.cont [3/16] %v3148, 128
        %3165 = vxpose.xlu0.b32.cont [4/16] %v3149, 128
        %3166 = vxpose.xlu0.b32.cont [5/16] %v3150, 128
        %3167 = vxpose.xlu0.b32.cont [6/16] %v3151, 128
        %3168 = vxpose.xlu0.b32.cont [7/16] %v3152, 128
        %3169 = vxpose.xlu0.b32.cont [8/16] %v3153, 128
        %3170 = vxpose.xlu0.b32.cont [9/16] %v3154, 128
        %3171 = vxpose.xlu0.b32.cont [10/16] %v3155, 128
        %3172 = vxpose.xlu0.b32.cont [11/16] %v3156, 128
        %3173 = vxpose.xlu0.b32.cont [12/16] %v3157, 128
        %3174 = vxpose.xlu0.b32.cont [13/16] %v3158, 128
        %3175 = vxpose.xlu0.b32.cont [14/16] %v3159, 128
        %3176 = vxpose.xlu0.b32.cont [15/16] %v3160, 128
        %3177 = vxpose.xlu0.b32.end [16/16] %v3161, 128
        %v3178 = vpop.trf.xlu0
        %v3179 = vpop.trf.xlu0
        %v3180 = vpop.trf.xlu0
        %v3181 = vpop.trf.xlu0
        %v3182 = vpop.trf.xlu0
        %v3183 = vpop.trf.xlu0
        %v3184 = vpop.trf.xlu0
        %v3185 = vpop.trf.xlu0
        %v3186 = vpop.trf.xlu0
        %v3187 = vpop.trf.xlu0
        %v3188 = vpop.trf.xlu0
        %v3189 = vpop.trf.xlu0
        %v3190 = vpop.trf.xlu0
        %v3191 = vpop.trf.xlu0
        %v3192 = vpop.trf.xlu0
        %v3193 = vpop.trf.xlu0
        %3194 = vmatprep.subr.mxu0 0.0
        %3195 = vmatpush1.msra.mxu0 %v2289
        %3196 = vmatprep.subr.mxu0 0.0
        %3197 = vmatpush1.msra.mxu0 %v2291
        %3198 = vmatprep.subr.mxu0 0.0
        %3199 = vmatpush1.msra.mxu0 %v2293
        %3200 = vmatprep.subr.mxu0 0.0
        %3201 = vmatpush1.msra.mxu0 %v2295
        %3202 = vmatprep.subr.mxu0 0.0
        %3203 = vmatpush1.msra.mxu0 %v2297
        %3204 = vmatprep.subr.mxu0 0.0
        %3205 = vmatpush1.msra.mxu0 %v2299
        %3206 = vmatprep.subr.mxu0 0.0
        %3207 = vmatpush1.msra.mxu0 %v2301
        %3208 = vmatprep.subr.mxu0 0.0
        %3209 = vmatpush1.msra.mxu0 %v2303
        %3210 = vmatprep.subr.mxu0 0.0
        %3211 = vmatpush1.msra.mxu0 %v2305
        %3212 = vmatprep.subr.mxu0 0.0
        %3213 = vmatpush1.msra.mxu0 %v2307
        %3214 = vmatprep.subr.mxu0 0.0
        %3215 = vmatpush1.msra.mxu0 %v2309
        %3216 = vmatprep.subr.mxu0 0.0
        %3217 = vmatpush1.msra.mxu0 %v2311
        %3218 = vmatprep.subr.mxu0 0.0
        %3219 = vmatpush1.msra.mxu0 %v2313
        %3220 = vmatprep.subr.mxu0 0.0
        %3221 = vmatpush1.msra.mxu0 %v2315
        %3222 = vmatprep.subr.mxu0 0.0
        %3223 = vmatpush1.msra.mxu0 %v2317
        %3224 = vmatprep.subr.mxu0 0.0
        %3225 = vmatpush1.msra.mxu0 %v2319
        %3226 = vmatprep.subr.mxu0 0.0
        %3227 = vmatpush1.msra.mxu0 0.0
        %3228 = vmatprep.subr.mxu0 0.0
        %3229 = vmatpush1.msra.mxu0 0.0
        %3230 = vmatprep.subr.mxu0 0.0
        %3231 = vmatpush1.msra.mxu0 0.0
        %3232 = vmatprep.subr.mxu0 0.0
        %3233 = vmatpush1.msra.mxu0 0.0
        %3234 = vmatprep.subr.mxu0 0.0
        %3235 = vmatpush1.msra.mxu0 0.0
        %3236 = vmatprep.subr.mxu0 0.0
        %3237 = vmatpush1.msra.mxu0 0.0
        %3238 = vmatprep.subr.mxu0 0.0
        %3239 = vmatpush1.msra.mxu0 0.0
        %3240 = vmatprep.subr.mxu0 0.0
        %3241 = vmatpush1.msra.mxu0 0.0
        %3242 = vmatprep.subr.mxu0 0.0
        %3243 = vmatpush1.msra.mxu0 0.0
        %3244 = vmatprep.subr.mxu0 0.0
        %3245 = vmatpush1.msra.mxu0 0.0
        %3246 = vmatprep.subr.mxu0 0.0
        %3247 = vmatpush1.msra.mxu0 0.0
        %3248 = vmatprep.subr.mxu0 0.0
        %3249 = vmatpush1.msra.mxu0 0.0
        %3250 = vmatprep.subr.mxu0 0.0
        %3251 = vmatpush1.msra.mxu0 0.0
        %3252 = vmatprep.subr.mxu0 0.0
        %3253 = vmatpush1.msra.mxu0 0.0
        %3254 = vmatprep.subr.mxu0 0.0
        %3255 = vmatpush1.msra.mxu0 0.0
        %3256 = vmatprep.subr.mxu0 0.0
        %3257 = vmatpush1.msra.mxu0 0.0
        %3258 = vmatprep.mubr.f32.mxu0 0.0
        %3259 = vmatmul.mubr.f32.gmra.mrb[0].mxu0 %v3178
        %v3260 = vpop.f32.mrb[0].mxu0
        %v3261 = vadd.f32 0.0, %v3260
        %v3262 = vpop.f32.mrb[0].mxu0
        %3263 = vmatprep.mubr.f32.mxu0 0.0
        %3264 = vmatmul.mubr.f32.gmra.mrb[0].mxu0 %v3179
        %v3265 = vpop.f32.mrb[0].mxu0
        %v3266 = vadd.f32 0.0, %v3265
        %v3267 = vpop.f32.mrb[0].mxu0
        %3268 = vmatprep.mubr.f32.mxu0 0.0
        %3269 = vmatmul.mubr.f32.gmra.mrb[0].mxu0 %v3180
        %v3270 = vpop.f32.mrb[0].mxu0
        %v3271 = vadd.f32 0.0, %v3270
        %v3272 = vpop.f32.mrb[0].mxu0
        %3273 = vmatprep.mubr.f32.mxu0 0.0
        %3274 = vmatmul.mubr.f32.gmra.mrb[0].mxu0 %v3181
        %v3275 = vpop.f32.mrb[0].mxu0
        %v3276 = vadd.f32 0.0, %v3275
        %v3277 = vpop.f32.mrb[0].mxu0
        %3278 = vmatprep.mubr.f32.mxu0 0.0
        %3279 = vmatmul.mubr.f32.gmra.mrb[0].mxu0 %v3182
        %v3280 = vpop.f32.mrb[0].mxu0
        %v3281 = vadd.f32 0.0, %v3280
        %v3282 = vpop.f32.mrb[0].mxu0
        %3283 = vmatprep.mubr.f32.mxu0 0.0
        %3284 = vmatmul.mubr.f32.gmra.mrb[0].mxu0 %v3183
        %v3285 = vpop.f32.mrb[0].mxu0
        %v3286 = vadd.f32 0.0, %v3285
        %v3287 = vpop.f32.mrb[0].mxu0
        %3288 = vmatprep.mubr.f32.mxu0 0.0
        %3289 = vmatmul.mubr.f32.gmra.mrb[0].mxu0 %v3184
        %v3290 = vpop.f32.mrb[0].mxu0
        %v3291 = vadd.f32 0.0, %v3290
        %v3292 = vpop.f32.mrb[0].mxu0
        %3293 = vmatprep.mubr.f32.mxu0 0.0
        %3294 = vmatmul.mubr.f32.gmra.mrb[0].mxu0 %v3185
        %v3295 = vpop.f32.mrb[0].mxu0
        %v3296 = vadd.f32 0.0, %v3295
        %v3297 = vpop.f32.mrb[0].mxu0
        %3298 = vmatprep.mubr.f32.mxu0 0.0
        %3299 = vmatmul.mubr.f32.gmra.mrb[0].mxu0 %v3186
        %v3300 = vpop.f32.mrb[0].mxu0
        %v3301 = vadd.f32 0.0, %v3300
        %v3302 = vpop.f32.mrb[0].mxu0
        %3303 = vmatprep.mubr.f32.mxu0 0.0
        %3304 = vmatmul.mubr.f32.gmra.mrb[0].mxu0 %v3187
        %v3305 = vpop.f32.mrb[0].mxu0
        %v3306 = vadd.f32 0.0, %v3305
        %v3307 = vpop.f32.mrb[0].mxu0
        %3308 = vmatprep.mubr.f32.mxu0 0.0
        %3309 = vmatmul.mubr.f32.gmra.mrb[0].mxu0 %v3188
        %v3310 = vpop.f32.mrb[0].mxu0
        %v3311 = vadd.f32 0.0, %v3310
        %v3312 = vpop.f32.mrb[0].mxu0
        %3313 = vmatprep.mubr.f32.mxu0 0.0
        %3314 = vmatmul.mubr.f32.gmra.mrb[0].mxu0 %v3189
        %v3315 = vpop.f32.mrb[0].mxu0
        %v3316 = vadd.f32 0.0, %v3315
        %v3317 = vpop.f32.mrb[0].mxu0
        %3318 = vmatprep.mubr.f32.mxu0 0.0
        %3319 = vmatmul.mubr.f32.gmra.mrb[0].mxu0 %v3190
        %v3320 = vpop.f32.mrb[0].mxu0
        %v3321 = vadd.f32 0.0, %v3320
        %v3322 = vpop.f32.mrb[0].mxu0
        %3323 = vmatprep.mubr.f32.mxu0 0.0
        %3324 = vmatmul.mubr.f32.gmra.mrb[0].mxu0 %v3191
        %v3325 = vpop.f32.mrb[0].mxu0
        %v3326 = vadd.f32 0.0, %v3325
        %v3327 = vpop.f32.mrb[0].mxu0
        %3328 = vmatprep.mubr.f32.mxu0 0.0
        %3329 = vmatmul.mubr.f32.gmra.mrb[0].mxu0 %v3192
        %v3330 = vpop.f32.mrb[0].mxu0
        %v3331 = vadd.f32 0.0, %v3330
        %v3332 = vpop.f32.mrb[0].mxu0
        %3333 = vmatprep.mubr.f32.mxu0 0.0
        %3334 = vmatmul.mubr.f32.gmra.mrb[0].mxu0 %v3193
        %v3335 = vpop.f32.mrb[0].mxu0
        %v3336 = vadd.f32 0.0, %v3335
        %v3337 = vpop.f32.mrb[0].mxu0
        %3338 = vdwg.mxu0
        %v3339 = vmul.f32 %v3261, %v262
        %v3340 = vmul.f32 %v3266, %v263
        %v3341 = vmul.f32 %v3271, %v264
        %v3342 = vmul.f32 %v3276, %v265
        %v3343 = vmul.f32 %v3281, %v266
        %v3344 = vmul.f32 %v3286, %v267
        %v3345 = vmul.f32 %v3291, %v268
        %v3346 = vmul.f32 %v3296, %v269
        %v3347 = vmul.f32 %v3301, %v270
        %v3348 = vmul.f32 %v3306, %v271
        %v3349 = vmul.f32 %v3311, %v272
        %v3350 = vmul.f32 %v3316, %v273
        %v3351 = vmul.f32 %v3321, %v274
        %v3352 = vmul.f32 %v3326, %v275
        %v3353 = vmul.f32 %v3331, %v276
        %v3354 = vmul.f32 %v3336, %v277
        %v3355 = vadd.f32 %v3339, %v3341
        %v3356 = vadd.f32 %v3355, %v3343
        %v3357 = vadd.f32 %v3356, %v3345
        %v3358 = vadd.f32 %v3357, %v3347
        %v3359 = vadd.f32 %v3358, %v3349
        %v3360 = vadd.f32 %v3359, %v3351
        %v3361 = vadd.f32 %v3360, %v3353
        %v3362 = vadd.f32 %v3340, %v3342
        %v3363 = vadd.f32 %v3362, %v3344
        %v3364 = vadd.f32 %v3363, %v3346
        %v3365 = vadd.f32 %v3364, %v3348
        %v3366 = vadd.f32 %v3365, %v3350
        %v3367 = vadd.f32 %v3366, %v3352
        %v3368 = vadd.f32 %v3367, %v3354
        %3369 = vst [vmem:[%s151] sm:$0xff] %v3361
        %3370 = vst [vmem:[%s151 + $0x8] sm:$0xff] %v3368
        %s3371 = sand.u32 %s76, 1
        %s3372 = scalar_lea.sflag [#allocation3], %s3371
        %s3373 = sand.u32 %s76, 1
        %s3374 = smul.addr %s3373, 16
        %s3375 = scalar_lea.vmem [#allocation2], %s3374
        // Predicated region
        $region29: #{tpu_custom_call.1} parent=27 // pred_check
          %p3376 = pneg %p86
        $region30: #{tpu_custom_call.1} parent=27 // pred_check_branch
          %3378 = sbr.rel (%p3376) target = $region32
        $region31: #{tpu_custom_call.1} parent=27 // pred_region
          %s3380 = ssub.s32 256, 256
          %3381 = vsyncadd %s3372, %s3380
          %s3382 = smul.addr %s16, 2
          %s3383 = smul.addr %s3382, 128
          %s3384 = scalar_lea.hbm %s2, %s3383
          %s3385 = sshll.u32 %s3375, 4
          %s3386 = int_to_ptr.vmem [resolvable:$true] %s3385
          %3391 = dma.vmem_to_hbm [thread:$0]  %s3386, 256, %s3384, %s3372, 128, 128, 8
        $region32: #{tpu_custom_call.1} parent=27 // pred_fallthru
          _
      $region28: #{tpu_custom_call.1} parent=5 // pred_fallthru
        _
      %p3392 = scmp.le.s32.totalorder 2, %s11
      // Predicated region
      $region33: #{tpu_custom_call.1} parent=5 // pred_check
        %p3393 = pneg %p3392
      $region34: #{tpu_custom_call.1} parent=5 // pred_check_branch
        %3395 = sbr.rel (%p3393) target = $region36
      $region35: #{tpu_custom_call.1} parent=5 // pred_region
        %s3396 = ssub.s32 %s11, 2
        // Predicated region
        $region37: #{tpu_custom_call.1} parent=35 // pred_check
          %p3397 = pneg %p92
        $region38: #{tpu_custom_call.1} parent=35 // pred_check_branch
          %3399 = sbr.rel (%p3397) target = $region40
        $region39: #{tpu_custom_call.1} parent=35 // pred_region
          %s3400 = sand.u32 %s77, 1
          %s3401 = scalar_lea.sflag [#allocation3], %s3400
          %s3402 = sand.u32 %s77, 1
          %s3403 = smul.addr %s3402, 16
          %s3404 = scalar_lea.vmem [#allocation2], %s3403
          %3405 = dma.done %s3401, 256
        $region40: #{tpu_custom_call.1} parent=35 // pred_fallthru
          _
      $region36: #{tpu_custom_call.1} parent=5 // pred_fallthru
        _
    $region6: #{tpu_custom_call.1} parent=1 // loop_footer
      %s15 = sadd.s32 1, %s11
    $region7: #{tpu_custom_call.1} parent=1 // loop_footer_branch
      %10 = sbr.rel target = $region3
    $region8: #{tpu_custom_call.1} parent=1 // loop_exit
      _
    %3406 = vsyncpa [#allocation3], 1
    %s3407 = scalar_lea.sflag [#allocation3], 1
    %3408 = vsyncpa %s3407, 1

</llo_original>
